<compile_context>
chip_gen: v7x
topology: tpu7x:2x2x1
jax: 0.10.0
libtpu: 0.0.40
codegen_flags: <defaults>
</compile_context>

<pallas_src>
import functools

import jax
import jax.numpy as jnp
from jax.experimental import pallas as pl
from jax.experimental.pallas import tpu as pltpu

NUM_BETAS = 10
NUM_JOINTS = 16        # MANO kinematic joints: 1 global orient + 15 hand joints
NUM_OUT_JOINTS = 21    # MANO output joint set (wrist + joints + fingertips)
NUM_VERTS = 778        # MANO vertex count
VERTS_PAD = 896        # 7 * 128  -> lane-dense vertex axis
POSE_FEAT = 9 * (NUM_JOINTS - 1)  # 135
BLEND_DIM = NUM_BETAS + POSE_FEAT  # 145
MANO_PARENTS = [0, 0, 1, 2, 0, 4, 5, 0, 7, 8, 0, 10, 11, 0, 13, 14]


# ----------------------------------------------------------------------------
# Pallas kernel 1: fused shape+pose blend shapes (one bf16 MXU matmul)
# ----------------------------------------------------------------------------
def _blend_kernel(coef_ref, dirs_ref, tmpl_ref, out_ref):
    # coef (tb, 145) bf16, dirs (145, 3*Vpad) bf16, tmpl (1, 3*Vpad) f32.
    out_ref[...] = tmpl_ref[...] + jnp.dot(
        coef_ref[...], dirs_ref[...], preferred_element_type=jnp.float32)


def blend_shapes_pallas(coef, dirs_cm, tmpl_cm):
    B = coef.shape[0]
    D = dirs_cm.shape[0]
    N3 = dirs_cm.shape[1]
    tb = B if B <= 128 else 128          # batch-tile so large B stays in VMEM
    grid = (pl.cdiv(B, tb),)
    return pl.pallas_call(
        _blend_kernel,
        grid=grid,
        in_specs=[pl.BlockSpec((tb, D), lambda i: (i, 0)),
                  pl.BlockSpec((D, N3), lambda i: (0, 0)),
                  pl.BlockSpec((1, N3), lambda i: (0, 0))],
        out_specs=pl.BlockSpec((tb, N3), lambda i: (i, 0)),
        out_shape=jax.ShapeDtypeStruct((B, N3), jnp.float32),
        compiler_params=pltpu.CompilerParams(
            dimension_semantics=("parallel",)),
    )(coef, dirs_cm, tmpl_cm)


# ----------------------------------------------------------------------------
# Pallas kernel 2: channel-major LBS skinning + joint regression +
#                  camera translation + projection + kp2d normalization
# ----------------------------------------------------------------------------
def _lbs_project_kernel(img_res, camk_ref, a_ref, vp_ref, w_ref, jreg_ref,
                        outv_ref, outj_ref):
    b = pl.program_id(0)

    A_t = a_ref[0]            # (12, J)   A_t[3c+k, j] = A[j, k, c]
    vp = vp_ref[0]            # (3, Vpad) channel-major posed rest vertices
    W_t = w_ref[...]          # (J, Vpad) skinning weights, transposed
    Jreg_t = jreg_ref[...]    # (Vpad, OJ) output joint regressor, transposed

    # camera translation + intrinsics from the packed SMEM row (12 scalars)
    ctx = camk_ref[b, 0]
    cty = camk_ref[b, 1]
    ctz = camk_ref[b, 2]
    k00 = camk_ref[b, 3]
    k01 = camk_ref[b, 4]
    k02 = camk_ref[b, 5]
    k10 = camk_ref[b, 6]
    k11 = camk_ref[b, 7]
    k12 = camk_ref[b, 8]
    k20 = camk_ref[b, 9]
    k21 = camk_ref[b, 10]
    k22 = camk_ref[b, 11]

    # T[3c+k, v] = sum_j A[j, k, c] * W[v, j]  (lane axis = V, lane dense)
    T = jnp.dot(A_t, W_t, preferred_element_type=jnp.float32)   # (12, Vpad)

    vx = vp[0:1]
    vy = vp[1:2]
    vz = vp[2:3]
    verts = T[0:3] * vx + T[3:6] * vy + T[6:9] * vz + T[9:12]   # (3, Vpad)

    # output joints, channel-major: joints[k, j] = sum_v verts[k, v]*Jreg[j, v]
    joints = jnp.dot(verts, Jreg_t, preferred_element_type=jnp.float32)  # (3,OJ)

    # camera-frame vertices (packed with verts into a single (6, Vpad) slab)
    vcx = verts[0:1] + ctx
    vcy = verts[1:2] + cty
    vcz = verts[2:3] + ctz
    outv_ref[0] = jnp.concatenate([verts, vcx, vcy, vcz], axis=0)  # (6, Vpad)

    # camera-frame joints + perspective projection + kp2d normalization
    jx = joints[0:1] + ctx
    jy = joints[1:2] + cty
    jz = joints[2:3] + ctz
    hx = k00 * jx + k01 * jy + k02 * jz
    hy = k10 * jx + k11 * jy + k12 * jz
    hz = k20 * jx + k21 * jy + k22 * jz
    # TODO(synk): original project2d has no z-clamp; keep exact semantics.
    inv_z = 1.0 / hz
    u = 2.0 * (hx * inv_z) / img_res - 1.0
    v = 2.0 * (hy * inv_z) / img_res - 1.0
    outj_ref[0] = jnp.concatenate([joints, jx, jy, jz, u, v], axis=0)  # (8, OJ)


def lbs_project_pallas(camk, a_t, vp_cm, w_t, jreg_out_t, img_res):
    B = a_t.shape[0]
    Vp = vp_cm.shape[2]
    J = w_t.shape[0]
    OJ = jreg_out_t.shape[1]
    kernel = functools.partial(_lbs_project_kernel, float(img_res))

    out_shapes = (jax.ShapeDtypeStruct((B, 6, Vp), jnp.float32),   # verts|vcam
                  jax.ShapeDtypeStruct((B, 8, OJ), jnp.float32))   # j|jcam|j2d
    return pl.pallas_call(
        kernel,
        grid=(B,),
        in_specs=[pl.BlockSpec(memory_space=pltpu.MemorySpace.SMEM),  # camk
                  pl.BlockSpec((1, 12, J), lambda b: (b, 0, 0)),      # A^T
                  pl.BlockSpec((1, 3, Vp), lambda b: (b, 0, 0)),      # v_posed
                  pl.BlockSpec((J, Vp), lambda b: (0, 0)),            # W^T
                  pl.BlockSpec((Vp, OJ), lambda b: (0, 0))],          # Jreg^T
        out_specs=(pl.BlockSpec((1, 6, Vp), lambda b: (b, 0, 0)),
                   pl.BlockSpec((1, 8, OJ), lambda b: (b, 0, 0))),
        out_shape=out_shapes,
        compiler_params=pltpu.CompilerParams(
            dimension_semantics=("parallel",)),   # v7x: shard batch across TCs
    )(camk, a_t, vp_cm, w_t, jreg_out_t)


# ----------------------------------------------------------------------------
# JAX glue: rotation conversions, kinematic chain, param init / preprocessing
# ----------------------------------------------------------------------------
def axis_angle_to_matrix(aa):
    angle = jnp.sqrt(jnp.sum(aa * aa, axis=-1, keepdims=True) + 1e-12)
    axis = aa / angle
    x, y, z = axis[..., 0], axis[..., 1], axis[..., 2]
    a = angle[..., 0]
    s, c = jnp.sin(a), jnp.cos(a)
    C = 1.0 - c
    R = jnp.stack([
        c + x * x * C, x * y * C - z * s, x * z * C + y * s,
        y * x * C + z * s, c + y * y * C, y * z * C - x * s,
        z * x * C - y * s, z * y * C + x * s, c + z * z * C], axis=-1)
    return R.reshape(aa.shape[:-1] + (3, 3)).astype(jnp.float32)


def matrix_to_axis_angle(R):
    # TODO(synk): pytorch3d goes matrix->quaternion->axis-angle and handles the
    # angle ~= pi singularity; this log-map matches away from that edge case.
    trace = R[..., 0, 0] + R[..., 1, 1] + R[..., 2, 2]
    cos = jnp.clip((trace - 1.0) * 0.5, -1.0, 1.0)
    angle = jnp.arccos(cos)
    w = jnp.stack([R[..., 2, 1] - R[..., 1, 2],
                   R[..., 0, 2] - R[..., 2, 0],
                   R[..., 1, 0] - R[..., 0, 1]], axis=-1)
    sin = jnp.sin(angle)
    scale = jnp.where(sin > 1e-6, angle / (2.0 * sin + 1e-12), 0.5)
    return (w * scale[..., None]).astype(jnp.float32)


def batch_rigid_transform(rot_mats, joints, parents):
    B, Jn = joints.shape[:2]
    parent_idx = jnp.array(parents[1:], dtype=jnp.int32)
    rel_joints = jnp.concatenate(
        [joints[:, :1], joints[:, 1:] - joints[:, parent_idx]], axis=1)
    tmat = jnp.concatenate([rot_mats, rel_joints[..., None]], axis=-1)  # (B,J,3,4)
    bottom = jnp.tile(
        jnp.array([0.0, 0.0, 0.0, 1.0], jnp.float32).reshape(1, 1, 1, 4),
        (B, Jn, 1, 1))
    tmat = jnp.concatenate([tmat, bottom], axis=2)                      # (B,J,4,4)

    chain = [tmat[:, 0]]
    for i in range(1, Jn):
        chain.append(jnp.matmul(chain[parents[i]], tmat[:, i]))
    transforms = jnp.stack(chain, axis=1)                               # (B,J,4,4)
    posed_joints = transforms[:, :, :3, 3]

    joints_hom = jnp.concatenate(
        [joints, jnp.zeros((B, Jn, 1), jnp.float32)], axis=-1)          # (B,J,4)
    init_bone = jnp.einsum('bjik,bjk->bji', transforms, joints_hom)     # (B,J,4)
    rel_transforms = transforms - jnp.concatenate(
        [jnp.zeros((B, Jn, 4, 3), jnp.float32), init_bone[..., None]], axis=-1)
    return posed_joints, rel_transforms


def init_mano_params(key):
    # TODO(synk): real build_mano() loads MANO_{RIGHT,LEFT}.pkl; synthetic,
    # deterministically-initialized parameters of the same shapes instead.
    ks = jax.random.split(key, 6)
    v_template = jax.random.normal(ks[0], (NUM_VERTS, 3), jnp.float32) * 0.05
    shapedirs = jax.random.normal(ks[1], (NUM_BETAS, NUM_VERTS * 3),
                                  jnp.float32) * 0.01
    posedirs = jax.random.normal(ks[2], (POSE_FEAT, NUM_VERTS * 3),
                                 jnp.float32) * 0.001
    j_regressor = jax.nn.softmax(
        jax.random.normal(ks[3], (NUM_JOINTS, NUM_VERTS), jnp.float32), axis=-1)
    lbs_weights = jax.nn.softmax(
        2.0 * jax.random.normal(ks[4], (NUM_VERTS, NUM_JOINTS), jnp.float32),
        axis=-1)
    j_regressor_out = jax.nn.softmax(
        jax.random.normal(ks[5], (NUM_OUT_JOINTS, NUM_VERTS), jnp.float32),
        axis=-1)
    return dict(v_template=v_template, shapedirs=shapedirs, posedirs=posedirs,
                j_regressor=j_regressor, lbs_weights=lbs_weights,
                j_regressor_out=j_regressor_out)


def prepare_mano_params(params):
    """One-time repack into kernel-friendly (channel-major, lane-padded) form."""
    V, Vp = NUM_VERTS, VERTS_PAD
    sd3 = params['shapedirs'].reshape(NUM_BETAS, V, 3)
    pd3 = params['posedirs'].reshape(POSE_FEAT, V, 3)
    tmpl = params['v_template']                                    # (V, 3)

    def to_cm_flat(x):  # (..., V, 3) -> (..., 3*Vp) channel-major, zero-padded
        x_cm = jnp.swapaxes(x, -1, -2)                             # (..., 3, V)
        pad = [(0, 0)] * (x_cm.ndim - 1) + [(0, Vp - V)]
        x_cm = jnp.pad(x_cm, pad)
        return x_cm.reshape(x_cm.shape[:-2] + (3 * Vp,))

    dirs_cm = jnp.concatenate([to_cm_flat(sd3), to_cm_flat(pd3)],
                              axis=0).astype(jnp.bfloat16)          # (145, 3Vp)
    tmpl_cm = to_cm_flat(tmpl)[None, :].astype(jnp.float32)         # (1, 3Vp)

    w_t = jnp.pad(params['lbs_weights'].T, ((0, 0), (0, Vp - V)))   # (J, Vp)
    jreg_out_t = jnp.pad(params['j_regressor_out'].T,
                         ((0, Vp - V), (0, 0)))                     # (Vp, OJ)

    # fold the rest-joint regression: J_rest = Jreg @ (tmpl + betas @ shapedirs)
    j_tmpl = params['j_regressor'] @ tmpl                           # (J, 3)
    j_dirs = jnp.einsum('jv,svk->sjk', params['j_regressor'], sd3)  # (S, J, 3)
    return dict(dirs_cm=dirs_cm, tmpl_cm=tmpl_cm, w_t=w_t,
                jreg_out_t=jreg_out_t, j_tmpl=j_tmpl, j_dirs=j_dirs)


# ----------------------------------------------------------------------------
# MANOHead.forward
# ----------------------------------------------------------------------------
@functools.partial(jax.jit,
                   static_argnames=("is_rhand", "focal_length", "img_res"))
def mano_head_forward(prep, rotmat, shape, cam, K, *, is_rhand=True,
                      focal_length=1000.0, img_res=224):
    del focal_length  # forward uses the per-sample focal lengths from K
    B = rotmat.shape[0]
    rotmat_original = rotmat

    pose_aa = matrix_to_axis_angle(rotmat.reshape(-1, 3, 3)).reshape(B, 48)

    # --- MANO layer (synthetic LBS pipeline, same structure as smplx.MANO) ---
    rot_mats = axis_angle_to_matrix(pose_aa.reshape(B, NUM_JOINTS, 3))
    ident = jnp.eye(3, dtype=jnp.float32)
    pose_feat = (rot_mats[:, 1:] - ident).reshape(B, POSE_FEAT)

    # fused blend-shape matmul (bf16 weights, f32 accumulation), channel-major
    coef = jnp.concatenate([shape.astype(jnp.float32), pose_feat], axis=-1)
    vposed_flat = blend_shapes_pallas(coef.astype(jnp.bfloat16),
                                      prep['dirs_cm'], prep['tmpl_cm'])
    vp_cm = vposed_flat.reshape(B, 3, VERTS_PAD)

    # rest joints from tiny precomputed matrices (v_shaped never materialized)
    J_rest = prep['j_tmpl'][None] + jnp.einsum('bs,sjk->bjk',
                                               shape.astype(jnp.float32),
                                               prep['j_dirs'])

    # TODO(synk): the 15-step kinematic chain stays in (jit-fused) XLA; folding
    # it into the Pallas LBS kernel would also remove the A HBM round trip.
    _, A_rel = batch_rigid_transform(rot_mats, J_rest, MANO_PARENTS)
    # A_t[b, 3c+k, j] = A_rel[b, j, k, c]  (channel-major for the LBS kernel)
    A_t = A_rel[:, :, :3, :].transpose(0, 3, 2, 1).reshape(B, 12, NUM_JOINTS)

    # --- camera: weak perspective -> perspective ---
    avg_focal_length = (K[:, 0, 0] + K[:, 1, 1]) * 0.5
    s = jnp.maximum(cam[:, 0], 0.1)  # min_s = 0.1
    cam_t = jnp.stack(
        [cam[:, 1], cam[:, 2],
         2.0 * avg_focal_length / (img_res * s + 1e-9)], axis=-1)

    # pack cam_t + K into a single (B, 12) SMEM operand
    camk = jnp.concatenate([cam_t, K.reshape(B, 9)],
                           axis=-1).astype(jnp.float32)

    out_v, out_j = lbs_project_pallas(camk, A_t, vp_cm, prep['w_t'],
                                      prep['jreg_out_t'], img_res)

    # unpack / un-pad / back to (B, N, 3) convention of the PyTorch module
    vertices = jnp.swapaxes(out_v[:, 0:3, :NUM_VERTS], 1, 2)   # (B, V, 3)
    v3d_cam = jnp.swapaxes(out_v[:, 3:6, :NUM_VERTS], 1, 2)    # (B, V, 3)
    joints3d = jnp.swapaxes(out_j[:, 0:3, :], 1, 2)            # (B, OJ, 3)
    j3d_cam = jnp.swapaxes(out_j[:, 3:6, :], 1, 2)             # (B, OJ, 3)
    j2d_norm = jnp.swapaxes(out_j[:, 6:8, :], 1, 2)            # (B, OJ, 2)

    postfix = '.r' if is_rhand else '.l'
    out = {
        'cam_t.wp': cam,
        'cam_t': cam_t,
        'joints3d': joints3d,
        'vertices': vertices,
        'j3d.cam': j3d_cam,
        'v3d.cam': v3d_cam,
        'j2d.norm': j2d_norm,
        'beta': shape,
        'pose': rotmat_original,
        'pose_aa': pose_aa,
    }
    return {k + postfix: v for k, v in out.items()}


if __name__ == "__main__":
    key = jax.random.PRNGKey(0)
    kp, ki = jax.random.split(key)
    params = init_mano_params(kp)
    prep = prepare_mano_params(params)

    B = 2
    img_res = 224
    k1, k2, k3 = jax.random.split(ki, 3)

    aa_in = jax.random.uniform(k1, (B, NUM_JOINTS, 3), jnp.float32,
                               minval=-0.8, maxval=0.8)
    rotmat = axis_angle_to_matrix(aa_in)                       # (B, 16, 3, 3)
    shape = 0.5 * jax.random.normal(k2, (B, NUM_BETAS), jnp.float32)
    cam = jnp.stack([
        0.9 + 0.1 * jax.random.uniform(k3, (B,), jnp.float32),  # scale
        jnp.full((B,), 0.02, jnp.float32),                      # tx
        jnp.full((B,), -0.03, jnp.float32)], axis=-1)           # ty
    K = jnp.zeros((B, 3, 3), jnp.float32)
    K = (K.at[:, 0, 0].set(1000.0)
          .at[:, 1, 1].set(1005.0)
          .at[:, 0, 2].set(img_res / 2.0)
          .at[:, 1, 2].set(img_res / 2.0)
          .at[:, 2, 2].set(1.0))

    out = mano_head_forward(prep, rotmat, shape, cam, K, is_rhand=True,
                            focal_length=1000.0, img_res=img_res)
    jax.block_until_ready(out)
    print("KERNEL_OK")
</pallas_src>

<mosaic_0001>
module attributes {stable_mosaic.version = 11 : i64} {
  func.func @_blend_kernel(%arg0: i32, %arg1: memref<2x145xbf16, #tpu.memory_space<vmem>>, %arg2: memref<145x2688xbf16, #tpu.memory_space<vmem>>, %arg3: memref<1x2688xf32, #tpu.memory_space<vmem>>, %arg4: memref<2x2688xf32, #tpu.memory_space<vmem>>) attributes {dimension_semantics = [#tpu.dimension_semantics<parallel>], iteration_bounds = array<i64: 1>, scalar_prefetch = 0 : i64, scratch_operands = 0 : i64, tpu.core_type = #tpu.core_type<tc>, window_params = [{transform_indices = @transform_0, window_bounds = array<i64: 2, 145>}, {pipeline_mode = #tpu.pipeline_mode<synchronous>, transform_indices = @transform_1, window_bounds = array<i64: 145, 2688>}, {pipeline_mode = #tpu.pipeline_mode<synchronous>, transform_indices = @transform_2, window_bounds = array<i64: 1, 2688>}, {transform_indices = @transform_3, window_bounds = array<i64: 2, 2688>}]} {
    %c0 = arith.constant 0 : index
    %c0_0 = arith.constant 0 : index
    %0 = vector.load %arg3[%c0, %c0_0] : memref<1x2688xf32, #tpu.memory_space<vmem>>, vector<1x2688xf32>
    %c0_1 = arith.constant 0 : index
    %c0_2 = arith.constant 0 : index
    %1 = vector.load %arg1[%c0_1, %c0_2] : memref<2x145xbf16, #tpu.memory_space<vmem>>, vector<2x145xbf16>
    %c0_3 = arith.constant 0 : index
    %c0_4 = arith.constant 0 : index
    %2 = vector.load %arg2[%c0_3, %c0_4] : memref<145x2688xbf16, #tpu.memory_space<vmem>>, vector<145x2688xbf16>
    %cst = arith.constant dense<0.000000e+00> : vector<2x2688xf32>
    %3 = tpu.matmul %1, %2, %cst {dimension_numbers = #tpu.dot_dimension_numbers<[1], [0], [0], [1], [0, 0, 1, 1], [], []>} : vector<2x145xbf16>, vector<145x2688xbf16>, vector<2x2688xf32> -> vector<2x2688xf32>
    %4 = vector.broadcast %0 : vector<1x2688xf32> to vector<2x2688xf32>
    %5 = arith.addf %4, %3 : vector<2x2688xf32>
    %c0_5 = arith.constant 0 : index
    %c0_6 = arith.constant 0 : index
    %6 = vector.load %arg4[%c0_5, %c0_6] : memref<2x2688xf32, #tpu.memory_space<vmem>>, vector<2x2688xf32>
    tpu.vector_store %arg4[%c0_5, %c0_6], %5 {strides = array<i32>} : memref<2x2688xf32, #tpu.memory_space<vmem>>, vector<2x2688xf32>,
    return
  }
  func.func @transform_0(%arg0: i32) -> (i32, i32) {
    %c0_i32 = arith.constant 0 : i32
    %c0_i32_0 = arith.constant 0 : i32
    return %arg0, %c0_i32 : i32, i32
  }
  func.func @transform_1(%arg0: i32) -> (i32, i32) {
    %c0_i32 = arith.constant 0 : i32
    %c0_i32_0 = arith.constant 0 : i32
    %c0_i32_1 = arith.constant 0 : i32
    return %c0_i32, %c0_i32_0 : i32, i32
  }
  func.func @transform_2(%arg0: i32) -> (i32, i32) {
    %c0_i32 = arith.constant 0 : i32
    %c0_i32_0 = arith.constant 0 : i32
    %c0_i32_1 = arith.constant 0 : i32
    return %c0_i32, %c0_i32_0 : i32, i32
  }
  func.func @transform_3(%arg0: i32) -> (i32, i32) {
    %c0_i32 = arith.constant 0 : i32
    %c0_i32_0 = arith.constant 0 : i32
    return %arg0, %c0_i32 : i32, i32
  }
}

module attributes {stable_mosaic.version = 11 : i64} {
  func.func @_lbs_project_kernel(%arg0: i32, %arg1: memref<2x12xf32, #tpu.memory_space<smem>>, %arg2: memref<1x12x16xf32, #tpu.memory_space<vmem>>, %arg3: memref<1x3x896xf32, #tpu.memory_space<vmem>>, %arg4: memref<16x896xf32, #tpu.memory_space<vmem>>, %arg5: memref<896x21xf32, #tpu.memory_space<vmem>>, %arg6: memref<1x6x896xf32, #tpu.memory_space<vmem>>, %arg7: memref<1x8x21xf32, #tpu.memory_space<vmem>>) attributes {dimension_semantics = [#tpu.dimension_semantics<parallel>], iteration_bounds = array<i64: 2>, scalar_prefetch = 0 : i64, scratch_operands = 0 : i64, tpu.core_type = #tpu.core_type<tc>, window_params = [{transform_indices = @transform_0, window_bounds = array<i64: 2, 12>}, {transform_indices = @transform_1, window_bounds = array<i64: 1, 12, 16>}, {transform_indices = @transform_2, window_bounds = array<i64: 1, 3, 896>}, {pipeline_mode = #tpu.pipeline_mode<synchronous>, transform_indices = @transform_3, window_bounds = array<i64: 16, 896>}, {pipeline_mode = #tpu.pipeline_mode<synchronous>, transform_indices = @transform_4, window_bounds = array<i64: 896, 21>}, {transform_indices = @transform_5, window_bounds = array<i64: 1, 6, 896>}, {transform_indices = @transform_6, window_bounds = array<i64: 1, 8, 21>}]} {
    %c0 = arith.constant 0 : index
    %c0_0 = arith.constant 0 : index
    %c0_1 = arith.constant 0 : index
    %0 = vector.load %arg2[%c0, %c0_0, %c0_1] : memref<1x12x16xf32, #tpu.memory_space<vmem>>, vector<1x12x16xf32>
    %1 = vector.shape_cast %0 : vector<1x12x16xf32> to vector<12x16xf32>
    %c0_2 = arith.constant 0 : index
    %c0_3 = arith.constant 0 : index
    %c0_4 = arith.constant 0 : index
    %2 = vector.load %arg3[%c0_2, %c0_3, %c0_4] : memref<1x3x896xf32, #tpu.memory_space<vmem>>, vector<1x3x896xf32>
    %3 = vector.shape_cast %2 : vector<1x3x896xf32> to vector<3x896xf32>
    %c0_5 = arith.constant 0 : index
    %c0_6 = arith.constant 0 : index
    %4 = vector.load %arg4[%c0_5, %c0_6] : memref<16x896xf32, #tpu.memory_space<vmem>>, vector<16x896xf32>
    %c0_7 = arith.constant 0 : index
    %c0_8 = arith.constant 0 : index
    %5 = vector.load %arg5[%c0_7, %c0_8] : memref<896x21xf32, #tpu.memory_space<vmem>>, vector<896x21xf32>
    %6 = arith.index_cast %arg0 : i32 to index
    %c0_9 = arith.constant 0 : index
    %7 = memref.load %arg1[%6, %c0_9] : memref<2x12xf32, #tpu.memory_space<smem>>
    %8 = arith.index_cast %arg0 : i32 to index
    %c1 = arith.constant 1 : index
    %9 = memref.load %arg1[%8, %c1] : memref<2x12xf32, #tpu.memory_space<smem>>
    %10 = arith.index_cast %arg0 : i32 to index
    %c2 = arith.constant 2 : index
    %11 = memref.load %arg1[%10, %c2] : memref<2x12xf32, #tpu.memory_space<smem>>
    %12 = arith.index_cast %arg0 : i32 to index
    %c3 = arith.constant 3 : index
    %13 = memref.load %arg1[%12, %c3] : memref<2x12xf32, #tpu.memory_space<smem>>
    %14 = arith.index_cast %arg0 : i32 to index
    %c4 = arith.constant 4 : index
    %15 = memref.load %arg1[%14, %c4] : memref<2x12xf32, #tpu.memory_space<smem>>
    %16 = arith.index_cast %arg0 : i32 to index
    %c5 = arith.constant 5 : index
    %17 = memref.load %arg1[%16, %c5] : memref<2x12xf32, #tpu.memory_space<smem>>
    %18 = arith.index_cast %arg0 : i32 to index
    %c6 = arith.constant 6 : index
    %19 = memref.load %arg1[%18, %c6] : memref<2x12xf32, #tpu.memory_space<smem>>
    %20 = arith.index_cast %arg0 : i32 to index
    %c7 = arith.constant 7 : index
    %21 = memref.load %arg1[%20, %c7] : memref<2x12xf32, #tpu.memory_space<smem>>
    %22 = arith.index_cast %arg0 : i32 to index
    %c8 = arith.constant 8 : index
    %23 = memref.load %arg1[%22, %c8] : memref<2x12xf32, #tpu.memory_space<smem>>
    %24 = arith.index_cast %arg0 : i32 to index
    %c9 = arith.constant 9 : index
    %25 = memref.load %arg1[%24, %c9] : memref<2x12xf32, #tpu.memory_space<smem>>
    %26 = arith.index_cast %arg0 : i32 to index
    %c10 = arith.constant 10 : index
    %27 = memref.load %arg1[%26, %c10] : memref<2x12xf32, #tpu.memory_space<smem>>
    %28 = arith.index_cast %arg0 : i32 to index
    %c11 = arith.constant 11 : index
    %29 = memref.load %arg1[%28, %c11] : memref<2x12xf32, #tpu.memory_space<smem>>
    %cst = arith.constant dense<0.000000e+00> : vector<12x896xf32>
    %30 = tpu.matmul %1, %4, %cst {dimension_numbers = #tpu.dot_dimension_numbers<[1], [0], [0], [1], [0, 0, 1, 1], [], []>} : vector<12x16xf32>, vector<16x896xf32>, vector<12x896xf32> -> vector<12x896xf32>
    %31 = vector.extract_strided_slice %3 {offsets = [0, 0], sizes = [1, 896], strides = [1, 1]} : vector<3x896xf32> to vector<1x896xf32>
    %32 = vector.extract_strided_slice %3 {offsets = [1, 0], sizes = [1, 896], strides = [1, 1]} : vector<3x896xf32> to vector<1x896xf32>
    %33 = vector.extract_strided_slice %3 {offsets = [2, 0], sizes = [1, 896], strides = [1, 1]} : vector<3x896xf32> to vector<1x896xf32>
    %34 = vector.extract_strided_slice %30 {offsets = [0, 0], sizes = [3, 896], strides = [1, 1]} : vector<12x896xf32> to vector<3x896xf32>
    %35 = vector.broadcast %31 : vector<1x896xf32> to vector<3x896xf32>
    %36 = arith.mulf %34, %35 : vector<3x896xf32>
    %37 = vector.extract_strided_slice %30 {offsets = [3, 0], sizes = [3, 896], strides = [1, 1]} : vector<12x896xf32> to vector<3x896xf32>
    %38 = vector.broadcast %32 : vector<1x896xf32> to vector<3x896xf32>
    %39 = arith.mulf %37, %38 : vector<3x896xf32>
    %40 = arith.addf %36, %39 : vector<3x896xf32>
    %41 = vector.extract_strided_slice %30 {offsets = [6, 0], sizes = [3, 896], strides = [1, 1]} : vector<12x896xf32> to vector<3x896xf32>
    %42 = vector.broadcast %33 : vector<1x896xf32> to vector<3x896xf32>
    %43 = arith.mulf %41, %42 : vector<3x896xf32>
    %44 = arith.addf %40, %43 : vector<3x896xf32>
    %45 = vector.extract_strided_slice %30 {offsets = [9, 0], sizes = [3, 896], strides = [1, 1]} : vector<12x896xf32> to vector<3x896xf32>
    %46 = arith.addf %44, %45 : vector<3x896xf32>
    %cst_10 = arith.constant dense<0.000000e+00> : vector<3x21xf32>
    %47 = tpu.matmul %46, %5, %cst_10 {dimension_numbers = #tpu.dot_dimension_numbers<[1], [0], [0], [1], [0, 0, 1, 1], [], []>} : vector<3x896xf32>, vector<896x21xf32>, vector<3x21xf32> -> vector<3x21xf32>
    %48 = vector.extract_strided_slice %46 {offsets = [0, 0], sizes = [1, 896], strides = [1, 1]} : vector<3x896xf32> to vector<1x896xf32>
    %49 = vector.broadcast %7 : f32 to vector<1x896xf32>
    %50 = arith.addf %48, %49 : vector<1x896xf32>
    %51 = vector.extract_strided_slice %46 {offsets = [1, 0], sizes = [1, 896], strides = [1, 1]} : vector<3x896xf32> to vector<1x896xf32>
    %52 = vector.broadcast %9 : f32 to vector<1x896xf32>
    %53 = arith.addf %51, %52 : vector<1x896xf32>
    %54 = vector.extract_strided_slice %46 {offsets = [2, 0], sizes = [1, 896], strides = [1, 1]} : vector<3x896xf32> to vector<1x896xf32>
    %55 = vector.broadcast %11 : f32 to vector<1x896xf32>
    %56 = arith.addf %54, %55 : vector<1x896xf32>
    %57 = tpu.concatenate %46, %50, %53, %56 in 0 : vector<3x896xf32>, vector<1x896xf32>, vector<1x896xf32>, vector<1x896xf32> -> vector<6x896xf32>
    %c0_11 = arith.constant 0 : index
    %c0_12 = arith.constant 0 : index
    %c0_13 = arith.constant 0 : index
    %58 = vector.load %arg6[%c0_11, %c0_12, %c0_13] : memref<1x6x896xf32, #tpu.memory_space<vmem>>, vector<1x6x896xf32>
    %59 = vector.shape_cast %58 : vector<1x6x896xf32> to vector<6x896xf32>
    %60 = vector.shape_cast %57 : vector<6x896xf32> to vector<1x6x896xf32>
    tpu.vector_store %arg6[%c0_11, %c0_12, %c0_13], %60 {strides = array<i32>} : memref<1x6x896xf32, #tpu.memory_space<vmem>>, vector<1x6x896xf32>,
    %61 = vector.extract_strided_slice %47 {offsets = [0, 0], sizes = [1, 21], strides = [1, 1]} : vector<3x21xf32> to vector<1x21xf32>
    %62 = vector.broadcast %7 : f32 to vector<1x21xf32>
    %63 = arith.addf %61, %62 : vector<1x21xf32>
    %64 = vector.extract_strided_slice %47 {offsets = [1, 0], sizes = [1, 21], strides = [1, 1]} : vector<3x21xf32> to vector<1x21xf32>
    %65 = vector.broadcast %9 : f32 to vector<1x21xf32>
    %66 = arith.addf %64, %65 : vector<1x21xf32>
    %67 = vector.extract_strided_slice %47 {offsets = [2, 0], sizes = [1, 21], strides = [1, 1]} : vector<3x21xf32> to vector<1x21xf32>
    %68 = vector.broadcast %11 : f32 to vector<1x21xf32>
    %69 = arith.addf %67, %68 : vector<1x21xf32>
    %70 = vector.broadcast %13 : f32 to vector<1x21xf32>
    %71 = arith.mulf %70, %63 : vector<1x21xf32>
    %72 = vector.broadcast %15 : f32 to vector<1x21xf32>
    %73 = arith.mulf %72, %66 : vector<1x21xf32>
    %74 = arith.addf %71, %73 : vector<1x21xf32>
    %75 = vector.broadcast %17 : f32 to vector<1x21xf32>
    %76 = arith.mulf %75, %69 : vector<1x21xf32>
    %77 = arith.addf %74, %76 : vector<1x21xf32>
    %78 = vector.broadcast %19 : f32 to vector<1x21xf32>
    %79 = arith.mulf %78, %63 : vector<1x21xf32>
    %80 = vector.broadcast %21 : f32 to vector<1x21xf32>
    %81 = arith.mulf %80, %66 : vector<1x21xf32>
    %82 = arith.addf %79, %81 : vector<1x21xf32>
    %83 = vector.broadcast %23 : f32 to vector<1x21xf32>
    %84 = arith.mulf %83, %69 : vector<1x21xf32>
    %85 = arith.addf %82, %84 : vector<1x21xf32>
    %86 = vector.broadcast %25 : f32 to vector<1x21xf32>
    %87 = arith.mulf %86, %63 : vector<1x21xf32>
    %88 = vector.broadcast %27 : f32 to vector<1x21xf32>
    %89 = arith.mulf %88, %66 : vector<1x21xf32>
    %90 = arith.addf %87, %89 : vector<1x21xf32>
    %91 = vector.broadcast %29 : f32 to vector<1x21xf32>
    %92 = arith.mulf %91, %69 : vector<1x21xf32>
    %93 = arith.addf %90, %92 : vector<1x21xf32>
    %cst_14 = arith.constant 1.000000e+00 : f32
    %94 = vector.broadcast %cst_14 : f32 to vector<1x21xf32>
    %95 = arith.divf %94, %93 : vector<1x21xf32>
    %96 = arith.mulf %77, %95 : vector<1x21xf32>
    %cst_15 = arith.constant 2.000000e+00 : f32
    %97 = vector.broadcast %cst_15 : f32 to vector<1x21xf32>
    %98 = arith.mulf %97, %96 : vector<1x21xf32>
    %cst_16 = arith.constant 2.240000e+02 : f32
    %99 = vector.broadcast %cst_16 : f32 to vector<1x21xf32>
    %100 = arith.divf %98, %99 : vector<1x21xf32>
    %cst_17 = arith.constant 1.000000e+00 : f32
    %101 = vector.broadcast %cst_17 : f32 to vector<1x21xf32>
    %102 = arith.subf %100, %101 : vector<1x21xf32>
    %103 = arith.mulf %85, %95 : vector<1x21xf32>
    %cst_18 = arith.constant 2.000000e+00 : f32
    %104 = vector.broadcast %cst_18 : f32 to vector<1x21xf32>
    %105 = arith.mulf %104, %103 : vector<1x21xf32>
    %cst_19 = arith.constant 2.240000e+02 : f32
    %106 = vector.broadcast %cst_19 : f32 to vector<1x21xf32>
    %107 = arith.divf %105, %106 : vector<1x21xf32>
    %cst_20 = arith.constant 1.000000e+00 : f32
    %108 = vector.broadcast %cst_20 : f32 to vector<1x21xf32>
    %109 = arith.subf %107, %108 : vector<1x21xf32>
    %110 = tpu.concatenate %47, %63, %66, %69, %102, %109 in 0 : vector<3x21xf32>, vector<1x21xf32>, vector<1x21xf32>, vector<1x21xf32>, vector<1x21xf32>, vector<1x21xf32> -> vector<8x21xf32>
    %c0_21 = arith.constant 0 : index
    %c0_22 = arith.constant 0 : index
    %c0_23 = arith.constant 0 : index
    %111 = vector.load %arg7[%c0_21, %c0_22, %c0_23] : memref<1x8x21xf32, #tpu.memory_space<vmem>>, vector<1x8x21xf32>
    %112 = vector.shape_cast %111 : vector<1x8x21xf32> to vector<8x21xf32>
    %113 = vector.shape_cast %110 : vector<8x21xf32> to vector<1x8x21xf32>
    tpu.vector_store %arg7[%c0_21, %c0_22, %c0_23], %113 {strides = array<i32>} : memref<1x8x21xf32, #tpu.memory_space<vmem>>, vector<1x8x21xf32>,
    return
  }
  func.func @transform_0(%arg0: i32) -> (i32, i32) {
    %c0_i32 = arith.constant 0 : i32
    %c0_i32_0 = arith.constant 0 : i32
    %c0_i32_1 = arith.constant 0 : i32
    return %c0_i32, %c0_i32_0 : i32, i32
  }
  func.func @transform_1(%arg0: i32) -> (i32, i32, i32) {
    %c0_i32 = arith.constant 0 : i32
    %c0_i32_0 = arith.constant 0 : i32
    %c0_i32_1 = arith.constant 0 : i32
    return %arg0, %c0_i32, %c0_i32_0 : i32, i32, i32
  }
  func.func @transform_2(%arg0: i32) -> (i32, i32, i32) {
    %c0_i32 = arith.constant 0 : i32
    %c0_i32_0 = arith.constant 0 : i32
    %c0_i32_1 = arith.constant 0 : i32
    return %arg0, %c0_i32, %c0_i32_0 : i32, i32, i32
  }
  func.func @transform_3(%arg0: i32) -> (i32, i32) {
    %c0_i32 = arith.constant 0 : i32
    %c0_i32_0 = arith.constant 0 : i32
    %c0_i32_1 = arith.constant 0 : i32
    return %c0_i32, %c0_i32_0 : i32, i32
  }
  func.func @transform_4(%arg0: i32) -> (i32, i32) {
    %c0_i32 = arith.constant 0 : i32
    %c0_i32_0 = arith.constant 0 : i32
    %c0_i32_1 = arith.constant 0 : i32
    return %c0_i32, %c0_i32_0 : i32, i32
  }
  func.func @transform_5(%arg0: i32) -> (i32, i32, i32) {
    %c0_i32 = arith.constant 0 : i32
    %c0_i32_0 = arith.constant 0 : i32
    %c0_i32_1 = arith.constant 0 : i32
    return %arg0, %c0_i32, %c0_i32_0 : i32, i32, i32
  }
  func.func @transform_6(%arg0: i32) -> (i32, i32, i32) {
    %c0_i32 = arith.constant 0 : i32
    %c0_i32_0 = arith.constant 0 : i32
    %c0_i32_1 = arith.constant 0 : i32
    return %arg0, %c0_i32, %c0_i32_0 : i32, i32, i32
  }
}

</mosaic_0001>

<llo_original>
// kernel: mul.29
$region0: #{mul.29}
  #allocation2 [shape = 's32[1]{0}', space=sflag, size = 0x4, scoped, tag = 'scoped memory for mul.29']
  %s0 = inlined_call_operand.vmem [shape: f32[2,48], index: 0, kind: input, shape index: {}]
  %s1 = inlined_call_operand.vmem [shape: f32[2,48], index: 1, kind: input, shape index: {}]
  %s2 = inlined_call_operand.hbm [shape: f32[2,48], index: 2, kind: output, shape index: {}]
  $region1: #{mul.29} parent=0
    #allocation0 [shape = 'u8[1024]{0}', space=vmem, size = 0x400, scoped, tag = 'operand span for operand 2']
    #allocation1 [shape = 's32[1]{0}', space=sflag, size = 0x4, scoped, tag = 'scoped memory for mul.29']
    %3 = vsyncpa [#allocation1], 0
    %v4 = vld [vmem:[%s0] sm:$0x3]
    %v5 = vld [vmem:[%s1] sm:$0x3]
    %6 = xla_tuple %v4, %v5
    %7 = xla_tuple %6
    %v8 = vmul.f32 %v4, %v5
    %9 = xla_tuple %v8
    %10 = vst [vmem:[#allocation0] sm:$0x3] %v8
    %s12 = ssub.s32 32, 32
    %13 = vsyncadd [#allocation1], %s12
    %s15 = sshll.u32 [#allocation0], 4
    %s16 = int_to_ptr.vmem [resolvable:$true] %s15
    %18 = dma.vmem_to_hbm [thread:$0]  %s16, 32, %s2, [#allocation1]
    %19 = dma.done [#allocation1], 32
    %20 = vsyncpa [#allocation1], 1

// kernel: mano_head_forward.3
$region0: #{mano_head_forward.3}
  #allocation0 [shape = 'u32[]', space=smem, size = 0x4, offset = 0x4, fixed_abs, tag = 'smem constant byte address 0x4 - core index']
  #allocation1 [shape = 'u32[144,128]{1,0:T(1,128)}', space=vmem, size = 0x12000, scoped, tag = 'internal scratch']
  %s0 = inlined_call_operand.vmem [shape: f32[2,12], index: 0, kind: input, shape index: {}]
  %s1 = inlined_call_operand.vmem [shape: f32[2,12,16], index: 1, kind: input, shape index: {}]
  %s2 = inlined_call_operand.vmem [shape: f32[2,3,896], index: 2, kind: input, shape index: {}]
  %s3 = inlined_call_operand.vmem [shape: f32[16,896], index: 3, kind: input, shape index: {}]
  %s4 = inlined_call_operand.vmem [shape: f32[896,21], index: 4, kind: input, shape index: {}]
  %s5 = inlined_call_operand.vmem [shape: f32[2,6,896], index: 5, kind: output, shape index: {0}]
  %s6 = inlined_call_operand.vmem [shape: f32[2,8,21], index: 6, kind: output, shape index: {1}]
  %7 = xla_tuple %s5, %s6
  %s8 = sld [smem:[#allocation0]]
  $region65: #{mano_head_forward.3} parent=0
    _
  %s10 = ssub.s32 1, %s8
  %s11 = scalar_select 0, %s10, %s8
  $region1: #{mano_head_forward.3} parent=0
    #allocation2 [shape = 'u8[1024]{0}', space=smem, size = 0x400, scoped, tag = 'input window, operand 0, single buffered']
    #allocation3 [shape = 's32[2]{0}', space=sflag, size = 0x8, scoped, tag = 'scoped memory for mano_head_forward.3']
    %12 = vsyncpa [#allocation3], 0
    loop: start=0, step=1, limit=4
    $region2: #{mano_head_forward.3} parent=1 // loop_pre_header
      _
    $region3: #{mano_head_forward.3} parent=1 // loop_header
      %s14 = sphi 0, %s18
      %p15 = scmp.ge.s32.totalorder %s14, 4
      %s22 = sphi 0, %s22
      %s24 = sphi 0, %s22
      %s25 = sphi 0, %s24
      %s39 = sphi 0, %s25
      %s45 = sphi 0, %s47
      %s48 = sphi 0, %s45
      %s49 = sphi 0, %s48
      %s65 = sphi 0, %s49
      %s71 = sphi 0, %s73
      %s74 = sphi 0, %s71
      %s75 = sphi 0, %s74
      %s91 = sphi 0, %s75
      %s95 = sphi 0, %s95
      %s97 = sphi 0, %s95
      %s98 = sphi 0, %s97
      %s112 = sphi 0, %s98
      %s116 = sphi 0, %s116
      %s118 = sphi 0, %s116
      %s119 = sphi 0, %s118
      %s133 = sphi 0, %s119
      %s139 = sphi 0, %s141
      %s142 = sphi 0, %s139
      %s143 = sphi 0, %s142
      %s159 = sphi 0, %s143
      %s165 = sphi 0, %s167
      %s168 = sphi 0, %s165
      %s169 = sphi 0, %s168
      %s185 = sphi 0, %s169
    $region4: #{mano_head_forward.3} parent=1 // loop_header_branch
      %17 = sbr.rel (%p15) target = $region8
    $region5: #{mano_head_forward.3} parent=1 // loop_body
      %s19 = ssub.s32 %s14, 1
      %s20 = ssub.s32 %s14, 2
      %s21 = sadd.s32 %s14, 1
      %s23 = sadd.s32 %s22, 1
      %p26 = scmp.eq.s32.totalorder %s14, 1
      %p27 = scmp.ne.s32.totalorder %s22, %s24
      %p28 = scmp.eq.s32.totalorder %s14, 0
      %p29 = por %p27, %p28
      %p30 = scmp.ne.s32.totalorder %s22, %s24
      %p31 = scmp.eq.s32.totalorder %s19, 1
      %p32 = por %p30, %p31
      %p33 = scmp.ne.s32.totalorder %s24, %s25
      %p34 = scmp.eq.s32.totalorder %s19, 0
      %p35 = por %p33, %p34
      %p36 = scmp.ne.s32.totalorder %s24, %s25
      %p37 = scmp.eq.s32.totalorder %s20, 1
      %p38 = por %p36, %p37
      %p40 = scmp.ne.s32.totalorder %s25, %s39
      %p41 = scmp.eq.s32.totalorder %s20, 0
      %p42 = por %p40, %p41
      %s43 = ssub.s32 %s14, %s21
      %p44 = scmp.eq.s32.totalorder %s43, 0
      %s46 = sadd.s32 %s45, 1
      %s47 = scalar_select %p44, %s45, %s46
      %p50 = pneg %p44
      %p51 = scmp.eq.s32.totalorder %s14, 1
      %p52 = por %p50, %p51
      %p53 = scmp.ne.s32.totalorder %s45, %s48
      %p54 = scmp.eq.s32.totalorder %s14, 0
      %p55 = por %p53, %p54
      %p56 = scmp.ne.s32.totalorder %s45, %s48
      %p57 = scmp.eq.s32.totalorder %s19, 1
      %p58 = por %p56, %p57
      %p59 = scmp.ne.s32.totalorder %s48, %s49
      %p60 = scmp.eq.s32.totalorder %s19, 0
      %p61 = por %p59, %p60
      %p62 = scmp.ne.s32.totalorder %s48, %s49
      %p63 = scmp.eq.s32.totalorder %s20, 1
      %p64 = por %p62, %p63
      %p66 = scmp.ne.s32.totalorder %s49, %s65
      %p67 = scmp.eq.s32.totalorder %s20, 0
      %p68 = por %p66, %p67
      %s69 = ssub.s32 %s14, %s21
      %p70 = scmp.eq.s32.totalorder %s69, 0
      %s72 = sadd.s32 %s71, 1
      %s73 = scalar_select %p70, %s71, %s72
      %p76 = pneg %p70
      %p77 = scmp.eq.s32.totalorder %s14, 1
      %p78 = por %p76, %p77
      %p79 = scmp.ne.s32.totalorder %s71, %s74
      %p80 = scmp.eq.s32.totalorder %s14, 0
      %p81 = por %p79, %p80
      %p82 = scmp.ne.s32.totalorder %s71, %s74
      %p83 = scmp.eq.s32.totalorder %s19, 1
      %p84 = por %p82, %p83
      %p85 = scmp.ne.s32.totalorder %s74, %s75
      %p86 = scmp.eq.s32.totalorder %s19, 0
      %p87 = por %p85, %p86
      %p88 = scmp.ne.s32.totalorder %s74, %s75
      %p89 = scmp.eq.s32.totalorder %s20, 1
      %p90 = por %p88, %p89
      %p92 = scmp.ne.s32.totalorder %s75, %s91
      %p93 = scmp.eq.s32.totalorder %s20, 0
      %p94 = por %p92, %p93
      %s96 = sadd.s32 %s95, 1
      %p99 = scmp.eq.s32.totalorder %s14, 1
      %p100 = scmp.ne.s32.totalorder %s95, %s97
      %p101 = scmp.eq.s32.totalorder %s14, 0
      %p102 = por %p100, %p101
      %p103 = scmp.ne.s32.totalorder %s95, %s97
      %p104 = scmp.eq.s32.totalorder %s19, 1
      %p105 = por %p103, %p104
      %p106 = scmp.ne.s32.totalorder %s97, %s98
      %p107 = scmp.eq.s32.totalorder %s19, 0
      %p108 = por %p106, %p107
      %p109 = scmp.ne.s32.totalorder %s97, %s98
      %p110 = scmp.eq.s32.totalorder %s20, 1
      %p111 = por %p109, %p110
      %p113 = scmp.ne.s32.totalorder %s98, %s112
      %p114 = scmp.eq.s32.totalorder %s20, 0
      %p115 = por %p113, %p114
      %s117 = sadd.s32 %s116, 1
      %p120 = scmp.eq.s32.totalorder %s14, 1
      %p121 = scmp.ne.s32.totalorder %s116, %s118
      %p122 = scmp.eq.s32.totalorder %s14, 0
      %p123 = por %p121, %p122
      %p124 = scmp.ne.s32.totalorder %s116, %s118
      %p125 = scmp.eq.s32.totalorder %s19, 1
      %p126 = por %p124, %p125
      %p127 = scmp.ne.s32.totalorder %s118, %s119
      %p128 = scmp.eq.s32.totalorder %s19, 0
      %p129 = por %p127, %p128
      %p130 = scmp.ne.s32.totalorder %s118, %s119
      %p131 = scmp.eq.s32.totalorder %s20, 1
      %p132 = por %p130, %p131
      %p134 = scmp.ne.s32.totalorder %s119, %s133
      %p135 = scmp.eq.s32.totalorder %s20, 0
      %p136 = por %p134, %p135
      %s137 = ssub.s32 %s14, %s21
      %p138 = scmp.eq.s32.totalorder %s137, 0
      %s140 = sadd.s32 %s139, 1
      %s141 = scalar_select %p138, %s139, %s140
      %p144 = pneg %p138
      %p145 = scmp.eq.s32.totalorder %s14, 1
      %p146 = por %p144, %p145
      %p147 = scmp.ne.s32.totalorder %s139, %s142
      %p148 = scmp.eq.s32.totalorder %s14, 0
      %p149 = por %p147, %p148
      %p150 = scmp.ne.s32.totalorder %s139, %s142
      %p151 = scmp.eq.s32.totalorder %s19, 1
      %p152 = por %p150, %p151
      %p153 = scmp.ne.s32.totalorder %s142, %s143
      %p154 = scmp.eq.s32.totalorder %s19, 0
      %p155 = por %p153, %p154
      %p156 = scmp.ne.s32.totalorder %s142, %s143
      %p157 = scmp.eq.s32.totalorder %s20, 1
      %p158 = por %p156, %p157
      %p160 = scmp.ne.s32.totalorder %s143, %s159
      %p161 = scmp.eq.s32.totalorder %s20, 0
      %p162 = por %p160, %p161
      %s163 = ssub.s32 %s14, %s21
      %p164 = scmp.eq.s32.totalorder %s163, 0
      %s166 = sadd.s32 %s165, 1
      %s167 = scalar_select %p164, %s165, %s166
      %p170 = pneg %p164
      %p171 = scmp.eq.s32.totalorder %s14, 1
      %p172 = por %p170, %p171
      %p173 = scmp.ne.s32.totalorder %s165, %s168
      %p174 = scmp.eq.s32.totalorder %s14, 0
      %p175 = por %p173, %p174
      %p176 = scmp.ne.s32.totalorder %s165, %s168
      %p177 = scmp.eq.s32.totalorder %s19, 1
      %p178 = por %p176, %p177
      %p179 = scmp.ne.s32.totalorder %s168, %s169
      %p180 = scmp.eq.s32.totalorder %s19, 0
      %p181 = por %p179, %p180
      %p182 = scmp.ne.s32.totalorder %s168, %s169
      %p183 = scmp.eq.s32.totalorder %s20, 1
      %p184 = por %p182, %p183
      %p186 = scmp.ne.s32.totalorder %s169, %s185
      %p187 = scmp.eq.s32.totalorder %s20, 0
      %p188 = por %p186, %p187
      %p189 = scmp.le.s32.totalorder 1, %s14
      %p190 = scmp.lt.s32.totalorder %s14, 3
      %p191 = pnand %p189, %p190
      %p192 = pneg %p191
      // Predicated region
      $region9: #{mano_head_forward.3} parent=5 // pred_check
        _
      $region10: #{mano_head_forward.3} parent=5 // pred_check_branch
        %194 = sbr.rel (%p191) target = $region12
      $region11: #{mano_head_forward.3} parent=5 // pred_region
        %s195 = ssub.s32 %s14, 1
        // Predicated region
        $region13: #{mano_head_forward.3} parent=11 // pred_check
          %p196 = pneg %p35
        $region14: #{mano_head_forward.3} parent=11 // pred_check_branch
          %198 = sbr.rel (%p196) target = $region16
        $region15: #{mano_head_forward.3} parent=11 // pred_region
          %s200 = ssub.s32 32, 32
          %201 = vsyncadd [#allocation3], %s200
          %s203 = sshll.u32 %s0, 4
          %s204 = int_to_ptr.vmem [resolvable:$true] %s203
          %206 = dma.vmem_to_smem %s204, 32, [#allocation2], [#allocation3]
        $region16: #{mano_head_forward.3} parent=11 // pred_fallthru
          _
        // Predicated region
        $region17: #{mano_head_forward.3} parent=11 // pred_check
          %p207 = pneg %p108
        $region18: #{mano_head_forward.3} parent=11 // pred_check_branch
          %209 = sbr.rel (%p207) target = $region20
        $region19: #{mano_head_forward.3} parent=11 // pred_region
          _
        $region20: #{mano_head_forward.3} parent=11 // pred_fallthru
          _
        // Predicated region
        $region21: #{mano_head_forward.3} parent=11 // pred_check
          %p210 = pneg %p129
        $region22: #{mano_head_forward.3} parent=11 // pred_check_branch
          %212 = sbr.rel (%p210) target = $region24
        $region23: #{mano_head_forward.3} parent=11 // pred_region
          _
        $region24: #{mano_head_forward.3} parent=11 // pred_fallthru
          _
      $region12: #{mano_head_forward.3} parent=5 // pred_fallthru
        _
      %p213 = scmp.lt.s32.totalorder %s14, 2
      // Predicated region
      $region25: #{mano_head_forward.3} parent=5 // pred_check
        %p214 = pneg %p213
      $region26: #{mano_head_forward.3} parent=5 // pred_check_branch
        %216 = sbr.rel (%p214) target = $region28
      $region27: #{mano_head_forward.3} parent=5 // pred_region
        // Predicated region
        $region29: #{mano_head_forward.3} parent=27 // pred_check
          %p217 = pneg %p55
        $region30: #{mano_head_forward.3} parent=27 // pred_check_branch
          %219 = sbr.rel (%p217) target = $region32
        $region31: #{mano_head_forward.3} parent=27 // pred_region
          %p220 = scmp.lt.s32.totalorder %s14, 1
          %s221 = scalar_select %p220, %s14, 1
          %s222 = smul.addr %s221, 2
          %s223 = smul.addr %s222, 8
          %s224 = scalar_lea.vmem %s1, %s223
        $region32: #{mano_head_forward.3} parent=27 // pred_fallthru
          _
        // Predicated region
        $region33: #{mano_head_forward.3} parent=27 // pred_check
          %p225 = pneg %p81
        $region34: #{mano_head_forward.3} parent=27 // pred_check_branch
          %227 = sbr.rel (%p225) target = $region36
        $region35: #{mano_head_forward.3} parent=27 // pred_region
          %p228 = scmp.lt.s32.totalorder %s14, 1
          %s229 = scalar_select %p228, %s14, 1
          %s230 = smul.addr %s229, 7
          %s231 = smul.addr %s230, 4
          %s232 = scalar_lea.vmem %s2, %s231
        $region36: #{mano_head_forward.3} parent=27 // pred_fallthru
          _
      $region28: #{mano_head_forward.3} parent=5 // pred_fallthru
        _
      %p233 = scmp.le.s32.totalorder 1, %s14
      %p234 = scmp.lt.s32.totalorder %s14, 3
      %p235 = pnand %p233, %p234
      %p236 = pneg %p235
      // Predicated region
      $region37: #{mano_head_forward.3} parent=5 // pred_check
        _
      $region38: #{mano_head_forward.3} parent=5 // pred_check_branch
        %238 = sbr.rel (%p235) target = $region40
      $region39: #{mano_head_forward.3} parent=5 // pred_region
        %s239 = ssub.s32 %s14, 1
        // Predicated region
        $region41: #{mano_head_forward.3} parent=39 // pred_check
          %p240 = pneg %p35
        $region42: #{mano_head_forward.3} parent=39 // pred_check_branch
          %242 = sbr.rel (%p240) target = $region44
        $region43: #{mano_head_forward.3} parent=39 // pred_region
          %243 = dma.done [#allocation3], 32
        $region44: #{mano_head_forward.3} parent=39 // pred_fallthru
          _
        %244 = sfence
        %p245 = pneg %p35
        %p246 = pneg %p32
        %p247 = scmp.lt.s32.totalorder %s19, 1
        %s248 = scalar_select %p247, %s19, 1
        %s249 = smul.addr %s248, 2
        %s250 = smul.addr %s249, 8
        %s251 = scalar_lea.vmem %s1, %s250
        %p252 = pneg %p61
        %p253 = pneg %p58
        %p254 = scmp.lt.s32.totalorder %s19, 1
        %s255 = scalar_select %p254, %s19, 1
        %s256 = smul.addr %s255, 7
        %s257 = smul.addr %s256, 4
        %s258 = scalar_lea.vmem %s2, %s257
        %p259 = pneg %p87
        %p260 = pneg %p84
        %p261 = pneg %p108
        %p262 = pneg %p105
        %p263 = pneg %p129
        %p264 = pneg %p126
        %p265 = pneg %p155
        %p266 = pneg %p152
        %p267 = scmp.lt.s32.totalorder %s19, 1
        %s268 = scalar_select %p267, %s19, 1
        %s269 = smul.addr %s268, 7
        %s270 = smul.addr %s269, 8
        %s271 = scalar_lea.vmem %s5, %s270
        %p272 = pneg %p181
        %p273 = pneg %p178
        %p274 = scmp.lt.s32.totalorder %s19, 1
        %s275 = scalar_select %p274, %s19, 1
        %s276 = smul.addr %s275, 8
        %s277 = scalar_lea.vmem %s6, %s276
        %p278 = scmp.lt.s32.totalorder %s19, 1
        %s279 = scalar_select %p278, %s19, 1
        %s280 = smul.addr %s279, 2
        %s281 = smul.addr %s280, 8
        %s282 = scalar_lea.vmem %s1, %s281
        %p283 = scmp.lt.s32.totalorder %s19, 1
        %s284 = scalar_select %p283, %s19, 1
        %s285 = smul.addr %s284, 7
        %s286 = smul.addr %s285, 4
        %s287 = scalar_lea.vmem %s2, %s286
        %p288 = scmp.lt.s32.totalorder %s19, 1
        %s289 = scalar_select %p288, %s19, 1
        %s290 = smul.addr %s289, 7
        %s291 = smul.addr %s290, 8
        %s292 = scalar_lea.vmem %s5, %s291
        %p293 = scmp.lt.s32.totalorder %s19, 1
        %s294 = scalar_select %p293, %s19, 1
        %s295 = smul.addr %s294, 8
        %s296 = scalar_lea.vmem %s6, %s295
        %v297 = vld [vmem:[%s282] sm:$0xff]
        %v298 = vld [vmem:[%s282 + $0x8] sm:$0xf]
        %v299 = vld [vmem:[%s287] sm:$0x77]
        %v300 = vld [vmem:[%s287 + $0x8] sm:$0x77]
        %v301 = vld [vmem:[%s287 + $0x10] sm:$0x77]
        %v302 = vld [vmem:[%s287 + $0x18] sm:$0x7]
        %v303 = vld [vmem:[%s3] sm:$0xff]
        %v304 = vld [vmem:[%s3 + $0x8] sm:$0xff]
        %v305 = vld [vmem:[%s3 + $0x10] sm:$0xff]
        %v306 = vld [vmem:[%s3 + $0x18] sm:$0xff]
        %v307 = vld [vmem:[%s3 + $0x20] sm:$0xff]
        %v308 = vld [vmem:[%s3 + $0x28] sm:$0xff]
        %v309 = vld [vmem:[%s3 + $0x30] sm:$0xff]
        %v310 = vld [vmem:[%s3 + $0x38] sm:$0xff]
        %v311 = vld [vmem:[%s3 + $0x40] sm:$0xff]
        %v312 = vld [vmem:[%s3 + $0x48] sm:$0xff]
        %v313 = vld [vmem:[%s3 + $0x50] sm:$0xff]
        %v314 = vld [vmem:[%s3 + $0x58] sm:$0xff]
        %v315 = vld [vmem:[%s3 + $0x60] sm:$0xff]
        %v316 = vld [vmem:[%s3 + $0x68] sm:$0xff]
        %v317 = vld [vmem:[%s4] sm:$0xff]
        %v318 = vld [vmem:[%s4 + $0x8] sm:$0xff]
        %v319 = vld [vmem:[%s4 + $0x10] sm:$0xff]
        %v320 = vld [vmem:[%s4 + $0x18] sm:$0xff]
        %v321 = vld [vmem:[%s4 + $0x20] sm:$0xff]
        %v322 = vld [vmem:[%s4 + $0x28] sm:$0xff]
        %v323 = vld [vmem:[%s4 + $0x30] sm:$0xff]
        %v324 = vld [vmem:[%s4 + $0x38] sm:$0xff]
        %v325 = vld [vmem:[%s4 + $0x40] sm:$0xff]
        %v326 = vld [vmem:[%s4 + $0x48] sm:$0xff]
        %v327 = vld [vmem:[%s4 + $0x50] sm:$0xff]
        %v328 = vld [vmem:[%s4 + $0x58] sm:$0xff]
        %v329 = vld [vmem:[%s4 + $0x60] sm:$0xff]
        %v330 = vld [vmem:[%s4 + $0x68] sm:$0xff]
        %v331 = vld [vmem:[%s4 + $0x70] sm:$0xff]
        %v332 = vld [vmem:[%s4 + $0x78] sm:$0xff]
        %v333 = vld [vmem:[%s4 + $0x80] sm:$0xff]
        %v334 = vld [vmem:[%s4 + $0x88] sm:$0xff]
        %v335 = vld [vmem:[%s4 + $0x90] sm:$0xff]
        %v336 = vld [vmem:[%s4 + $0x98] sm:$0xff]
        %v337 = vld [vmem:[%s4 + $0xa0] sm:$0xff]
        %v338 = vld [vmem:[%s4 + $0xa8] sm:$0xff]
        %v339 = vld [vmem:[%s4 + $0xb0] sm:$0xff]
        %v340 = vld [vmem:[%s4 + $0xb8] sm:$0xff]
        %v341 = vld [vmem:[%s4 + $0xc0] sm:$0xff]
        %v342 = vld [vmem:[%s4 + $0xc8] sm:$0xff]
        %v343 = vld [vmem:[%s4 + $0xd0] sm:$0xff]
        %v344 = vld [vmem:[%s4 + $0xd8] sm:$0xff]
        %v345 = vld [vmem:[%s4 + $0xe0] sm:$0xff]
        %v346 = vld [vmem:[%s4 + $0xe8] sm:$0xff]
        %v347 = vld [vmem:[%s4 + $0xf0] sm:$0xff]
        %v348 = vld [vmem:[%s4 + $0xf8] sm:$0xff]
        %v349 = vld [vmem:[%s4 + $0x100] sm:$0xff]
        %v350 = vld [vmem:[%s4 + $0x108] sm:$0xff]
        %v351 = vld [vmem:[%s4 + $0x110] sm:$0xff]
        %v352 = vld [vmem:[%s4 + $0x118] sm:$0xff]
        %v353 = vld [vmem:[%s4 + $0x120] sm:$0xff]
        %v354 = vld [vmem:[%s4 + $0x128] sm:$0xff]
        %v355 = vld [vmem:[%s4 + $0x130] sm:$0xff]
        %v356 = vld [vmem:[%s4 + $0x138] sm:$0xff]
        %v357 = vld [vmem:[%s4 + $0x140] sm:$0xff]
        %v358 = vld [vmem:[%s4 + $0x148] sm:$0xff]
        %v359 = vld [vmem:[%s4 + $0x150] sm:$0xff]
        %v360 = vld [vmem:[%s4 + $0x158] sm:$0xff]
        %v361 = vld [vmem:[%s4 + $0x160] sm:$0xff]
        %v362 = vld [vmem:[%s4 + $0x168] sm:$0xff]
        %v363 = vld [vmem:[%s4 + $0x170] sm:$0xff]
        %v364 = vld [vmem:[%s4 + $0x178] sm:$0xff]
        %v365 = vld [vmem:[%s4 + $0x180] sm:$0xff]
        %v366 = vld [vmem:[%s4 + $0x188] sm:$0xff]
        %v367 = vld [vmem:[%s4 + $0x190] sm:$0xff]
        %v368 = vld [vmem:[%s4 + $0x198] sm:$0xff]
        %v369 = vld [vmem:[%s4 + $0x1a0] sm:$0xff]
        %v370 = vld [vmem:[%s4 + $0x1a8] sm:$0xff]
        %v371 = vld [vmem:[%s4 + $0x1b0] sm:$0xff]
        %v372 = vld [vmem:[%s4 + $0x1b8] sm:$0xff]
        %v373 = vld [vmem:[%s4 + $0x1c0] sm:$0xff]
        %v374 = vld [vmem:[%s4 + $0x1c8] sm:$0xff]
        %v375 = vld [vmem:[%s4 + $0x1d0] sm:$0xff]
        %v376 = vld [vmem:[%s4 + $0x1d8] sm:$0xff]
        %v377 = vld [vmem:[%s4 + $0x1e0] sm:$0xff]
        %v378 = vld [vmem:[%s4 + $0x1e8] sm:$0xff]
        %v379 = vld [vmem:[%s4 + $0x1f0] sm:$0xff]
        %v380 = vld [vmem:[%s4 + $0x1f8] sm:$0xff]
        %v381 = vld [vmem:[%s4 + $0x200] sm:$0xff]
        %v382 = vld [vmem:[%s4 + $0x208] sm:$0xff]
        %v383 = vld [vmem:[%s4 + $0x210] sm:$0xff]
        %v384 = vld [vmem:[%s4 + $0x218] sm:$0xff]
        %v385 = vld [vmem:[%s4 + $0x220] sm:$0xff]
        %v386 = vld [vmem:[%s4 + $0x228] sm:$0xff]
        %v387 = vld [vmem:[%s4 + $0x230] sm:$0xff]
        %v388 = vld [vmem:[%s4 + $0x238] sm:$0xff]
        %v389 = vld [vmem:[%s4 + $0x240] sm:$0xff]
        %v390 = vld [vmem:[%s4 + $0x248] sm:$0xff]
        %v391 = vld [vmem:[%s4 + $0x250] sm:$0xff]
        %v392 = vld [vmem:[%s4 + $0x258] sm:$0xff]
        %v393 = vld [vmem:[%s4 + $0x260] sm:$0xff]
        %v394 = vld [vmem:[%s4 + $0x268] sm:$0xff]
        %v395 = vld [vmem:[%s4 + $0x270] sm:$0xff]
        %v396 = vld [vmem:[%s4 + $0x278] sm:$0xff]
        %v397 = vld [vmem:[%s4 + $0x280] sm:$0xff]
        %v398 = vld [vmem:[%s4 + $0x288] sm:$0xff]
        %v399 = vld [vmem:[%s4 + $0x290] sm:$0xff]
        %v400 = vld [vmem:[%s4 + $0x298] sm:$0xff]
        %v401 = vld [vmem:[%s4 + $0x2a0] sm:$0xff]
        %v402 = vld [vmem:[%s4 + $0x2a8] sm:$0xff]
        %v403 = vld [vmem:[%s4 + $0x2b0] sm:$0xff]
        %v404 = vld [vmem:[%s4 + $0x2b8] sm:$0xff]
        %v405 = vld [vmem:[%s4 + $0x2c0] sm:$0xff]
        %v406 = vld [vmem:[%s4 + $0x2c8] sm:$0xff]
        %v407 = vld [vmem:[%s4 + $0x2d0] sm:$0xff]
        %v408 = vld [vmem:[%s4 + $0x2d8] sm:$0xff]
        %v409 = vld [vmem:[%s4 + $0x2e0] sm:$0xff]
        %v410 = vld [vmem:[%s4 + $0x2e8] sm:$0xff]
        %v411 = vld [vmem:[%s4 + $0x2f0] sm:$0xff]
        %v412 = vld [vmem:[%s4 + $0x2f8] sm:$0xff]
        %v413 = vld [vmem:[%s4 + $0x300] sm:$0xff]
        %v414 = vld [vmem:[%s4 + $0x308] sm:$0xff]
        %v415 = vld [vmem:[%s4 + $0x310] sm:$0xff]
        %v416 = vld [vmem:[%s4 + $0x318] sm:$0xff]
        %v417 = vld [vmem:[%s4 + $0x320] sm:$0xff]
        %v418 = vld [vmem:[%s4 + $0x328] sm:$0xff]
        %v419 = vld [vmem:[%s4 + $0x330] sm:$0xff]
        %v420 = vld [vmem:[%s4 + $0x338] sm:$0xff]
        %v421 = vld [vmem:[%s4 + $0x340] sm:$0xff]
        %v422 = vld [vmem:[%s4 + $0x348] sm:$0xff]
        %v423 = vld [vmem:[%s4 + $0x350] sm:$0xff]
        %v424 = vld [vmem:[%s4 + $0x358] sm:$0xff]
        %v425 = vld [vmem:[%s4 + $0x360] sm:$0xff]
        %v426 = vld [vmem:[%s4 + $0x368] sm:$0xff]
        %v427 = vld [vmem:[%s4 + $0x370] sm:$0xff]
        %v428 = vld [vmem:[%s4 + $0x378] sm:$0xff]
        %s429 = smul.u32 %s19, 128
        %s430 = sld [smem:[#allocation2 + %s429]]
        %s431 = sadd.s32 %s429, 1
        %s432 = sld [smem:[#allocation2 + %s431]]
        %s433 = sadd.s32 %s429, 2
        %s434 = sld [smem:[#allocation2 + %s433]]
        %s435 = sadd.s32 %s429, 3
        %s436 = sld [smem:[#allocation2 + %s435]]
        %s437 = sadd.s32 %s429, 4
        %s438 = sld [smem:[#allocation2 + %s437]]
        %s439 = sadd.s32 %s429, 5
        %s440 = sld [smem:[#allocation2 + %s439]]
        %s441 = sadd.s32 %s429, 6
        %s442 = sld [smem:[#allocation2 + %s441]]
        %s443 = sadd.s32 %s429, 7
        %s444 = sld [smem:[#allocation2 + %s443]]
        %s445 = sadd.s32 %s429, 8
        %s446 = sld [smem:[#allocation2 + %s445]]
        %s447 = sadd.s32 %s429, 9
        %s448 = sld [smem:[#allocation2 + %s447]]
        %s449 = sadd.s32 %s429, 10
        %s450 = sld [smem:[#allocation2 + %s449]]
        %s451 = sadd.s32 %s429, 11
        %s452 = sld [smem:[#allocation2 + %s451]]
        %vm453 = vcmask 130048
        %v455 = vsel %vm453, %v297, 0
        %v458 = vsel %vm453, %v298, 0
        %460 = vmatprep.subr.mxu0 %v304
        %461 = vmatpush1.msra.mxu0 %v303
        %462 = vmatprep.subr.mxu0 %v311
        %463 = vmatpush1.msra.mxu0 %v310
        %464 = vmatprep.subr.mxu0 0.0
        %465 = vmatpush1.msra.mxu0 0.0
        %466 = vmatprep.subr.mxu0 0.0
        %467 = vmatpush1.msra.mxu0 0.0
        %468 = vmatprep.subr.mxu0 0.0
        %469 = vmatpush1.msra.mxu0 0.0
        %470 = vmatprep.subr.mxu0 0.0
        %471 = vmatpush1.msra.mxu0 0.0
        %472 = vmatprep.subr.mxu0 0.0
        %473 = vmatpush1.msra.mxu0 0.0
        %474 = vmatprep.subr.mxu0 0.0
        %475 = vmatpush1.msra.mxu0 0.0
        %476 = vmatprep.subr.mxu0 0.0
        %477 = vmatpush1.msra.mxu0 0.0
        %478 = vmatprep.subr.mxu0 0.0
        %479 = vmatpush1.msra.mxu0 0.0
        %480 = vmatprep.subr.mxu0 0.0
        %481 = vmatpush1.msra.mxu0 0.0
        %482 = vmatprep.subr.mxu0 0.0
        %483 = vmatpush1.msra.mxu0 0.0
        %484 = vmatprep.subr.mxu0 0.0
        %485 = vmatpush1.msra.mxu0 0.0
        %486 = vmatprep.subr.mxu0 0.0
        %487 = vmatpush1.msra.mxu0 0.0
        %488 = vmatprep.subr.mxu0 0.0
        %489 = vmatpush1.msra.mxu0 0.0
        %490 = vmatprep.subr.mxu0 0.0
        %491 = vmatpush1.msra.mxu0 0.0
        %492 = vmatprep.subr.mxu0 0.0
        %493 = vmatpush1.msra.mxu0 0.0
        %494 = vmatprep.subr.mxu0 0.0
        %495 = vmatpush1.msra.mxu0 0.0
        %496 = vmatprep.subr.mxu0 0.0
        %497 = vmatpush1.msra.mxu0 0.0
        %498 = vmatprep.subr.mxu0 0.0
        %499 = vmatpush1.msra.mxu0 0.0
        %500 = vmatprep.subr.mxu0 0.0
        %501 = vmatpush1.msra.mxu0 0.0
        %502 = vmatprep.subr.mxu0 0.0
        %503 = vmatpush1.msra.mxu0 0.0
        %504 = vmatprep.subr.mxu0 0.0
        %505 = vmatpush1.msra.mxu0 0.0
        %506 = vmatprep.subr.mxu0 0.0
        %507 = vmatpush1.msra.mxu0 0.0
        %508 = vmatprep.subr.mxu0 0.0
        %509 = vmatpush1.msra.mxu0 0.0
        %510 = vmatprep.subr.mxu0 0.0
        %511 = vmatpush1.msra.mxu0 0.0
        %512 = vmatprep.subr.mxu0 0.0
        %513 = vmatpush1.msra.mxu0 0.0
        %514 = vmatprep.subr.mxu0 0.0
        %515 = vmatpush1.msra.mxu0 0.0
        %516 = vmatprep.subr.mxu0 0.0
        %517 = vmatpush1.msra.mxu0 0.0
        %518 = vmatprep.subr.mxu0 0.0
        %519 = vmatpush1.msra.mxu0 0.0
        %520 = vmatprep.subr.mxu0 0.0
        %521 = vmatpush1.msra.mxu0 0.0
        %522 = vmatprep.subr.mxu0 0.0
        %523 = vmatpush1.msra.mxu0 0.0
        %524 = vmatprep.mubr.f32.mxu0 0.0
        %525 = vmatmul.mubr.f32.gmra.mrb[0].mxu0 %v455
        %v526 = vpop.f32.mrb[0].mxu0
        %v527 = vadd.f32 0.0, %v526
        %v528 = vpop.f32.mrb[0].mxu0
        %v529 = vadd.f32 0.0, %v528
        %530 = vmatprep.mubr.f32.mxu0 0.0
        %531 = vmatmul.mubr.f32.gmra.mrb[0].mxu0 %v458
        %v532 = vpop.f32.mrb[0].mxu0
        %v533 = vadd.f32 0.0, %v532
        %v534 = vpop.f32.mrb[0].mxu0
        %v535 = vadd.f32 0.0, %v534
        %536 = vdwg.mxu0
        %537 = vmatprep.subr.mxu0 %v306
        %538 = vmatpush1.msra.mxu0 %v305
        %539 = vmatprep.subr.mxu0 %v313
        %540 = vmatpush1.msra.mxu0 %v312
        %541 = vmatprep.subr.mxu0 0.0
        %542 = vmatpush1.msra.mxu0 0.0
        %543 = vmatprep.subr.mxu0 0.0
        %544 = vmatpush1.msra.mxu0 0.0
        %545 = vmatprep.subr.mxu0 0.0
        %546 = vmatpush1.msra.mxu0 0.0
        %547 = vmatprep.subr.mxu0 0.0
        %548 = vmatpush1.msra.mxu0 0.0
        %549 = vmatprep.subr.mxu0 0.0
        %550 = vmatpush1.msra.mxu0 0.0
        %551 = vmatprep.subr.mxu0 0.0
        %552 = vmatpush1.msra.mxu0 0.0
        %553 = vmatprep.subr.mxu0 0.0
        %554 = vmatpush1.msra.mxu0 0.0
        %555 = vmatprep.subr.mxu0 0.0
        %556 = vmatpush1.msra.mxu0 0.0
        %557 = vmatprep.subr.mxu0 0.0
        %558 = vmatpush1.msra.mxu0 0.0
        %559 = vmatprep.subr.mxu0 0.0
        %560 = vmatpush1.msra.mxu0 0.0
        %561 = vmatprep.subr.mxu0 0.0
        %562 = vmatpush1.msra.mxu0 0.0
        %563 = vmatprep.subr.mxu0 0.0
        %564 = vmatpush1.msra.mxu0 0.0
        %565 = vmatprep.subr.mxu0 0.0
        %566 = vmatpush1.msra.mxu0 0.0
        %567 = vmatprep.subr.mxu0 0.0
        %568 = vmatpush1.msra.mxu0 0.0
        %569 = vmatprep.subr.mxu0 0.0
        %570 = vmatpush1.msra.mxu0 0.0
        %571 = vmatprep.subr.mxu0 0.0
        %572 = vmatpush1.msra.mxu0 0.0
        %573 = vmatprep.subr.mxu0 0.0
        %574 = vmatpush1.msra.mxu0 0.0
        %575 = vmatprep.subr.mxu0 0.0
        %576 = vmatpush1.msra.mxu0 0.0
        %577 = vmatprep.subr.mxu0 0.0
        %578 = vmatpush1.msra.mxu0 0.0
        %579 = vmatprep.subr.mxu0 0.0
        %580 = vmatpush1.msra.mxu0 0.0
        %581 = vmatprep.subr.mxu0 0.0
        %582 = vmatpush1.msra.mxu0 0.0
        %583 = vmatprep.subr.mxu0 0.0
        %584 = vmatpush1.msra.mxu0 0.0
        %585 = vmatprep.subr.mxu0 0.0
        %586 = vmatpush1.msra.mxu0 0.0
        %587 = vmatprep.subr.mxu0 0.0
        %588 = vmatpush1.msra.mxu0 0.0
        %589 = vmatprep.subr.mxu0 0.0
        %590 = vmatpush1.msra.mxu0 0.0
        %591 = vmatprep.subr.mxu0 0.0
        %592 = vmatpush1.msra.mxu0 0.0
        %593 = vmatprep.subr.mxu0 0.0
        %594 = vmatpush1.msra.mxu0 0.0
        %595 = vmatprep.subr.mxu0 0.0
        %596 = vmatpush1.msra.mxu0 0.0
        %597 = vmatprep.subr.mxu0 0.0
        %598 = vmatpush1.msra.mxu0 0.0
        %599 = vmatprep.subr.mxu0 0.0
        %600 = vmatpush1.msra.mxu0 0.0
        %601 = vmatprep.mubr.f32.mxu0 0.0
        %602 = vmatmul.mubr.f32.gmra.mrb[0].mxu0 %v455
        %v603 = vpop.f32.mrb[0].mxu0
        %v604 = vadd.f32 0.0, %v603
        %v605 = vpop.f32.mrb[0].mxu0
        %v606 = vadd.f32 0.0, %v605
        %607 = vmatprep.mubr.f32.mxu0 0.0
        %608 = vmatmul.mubr.f32.gmra.mrb[0].mxu0 %v458
        %v609 = vpop.f32.mrb[0].mxu0
        %v610 = vadd.f32 0.0, %v609
        %v611 = vpop.f32.mrb[0].mxu0
        %v612 = vadd.f32 0.0, %v611
        %613 = vdwg.mxu0
        %614 = vmatprep.subr.mxu0 %v308
        %615 = vmatpush1.msra.mxu0 %v307
        %616 = vmatprep.subr.mxu0 %v315
        %617 = vmatpush1.msra.mxu0 %v314
        %618 = vmatprep.subr.mxu0 0.0
        %619 = vmatpush1.msra.mxu0 0.0
        %620 = vmatprep.subr.mxu0 0.0
        %621 = vmatpush1.msra.mxu0 0.0
        %622 = vmatprep.subr.mxu0 0.0
        %623 = vmatpush1.msra.mxu0 0.0
        %624 = vmatprep.subr.mxu0 0.0
        %625 = vmatpush1.msra.mxu0 0.0
        %626 = vmatprep.subr.mxu0 0.0
        %627 = vmatpush1.msra.mxu0 0.0
        %628 = vmatprep.subr.mxu0 0.0
        %629 = vmatpush1.msra.mxu0 0.0
        %630 = vmatprep.subr.mxu0 0.0
        %631 = vmatpush1.msra.mxu0 0.0
        %632 = vmatprep.subr.mxu0 0.0
        %633 = vmatpush1.msra.mxu0 0.0
        %634 = vmatprep.subr.mxu0 0.0
        %635 = vmatpush1.msra.mxu0 0.0
        %636 = vmatprep.subr.mxu0 0.0
        %637 = vmatpush1.msra.mxu0 0.0
        %638 = vmatprep.subr.mxu0 0.0
        %639 = vmatpush1.msra.mxu0 0.0
        %640 = vmatprep.subr.mxu0 0.0
        %641 = vmatpush1.msra.mxu0 0.0
        %642 = vmatprep.subr.mxu0 0.0
        %643 = vmatpush1.msra.mxu0 0.0
        %644 = vmatprep.subr.mxu0 0.0
        %645 = vmatpush1.msra.mxu0 0.0
        %646 = vmatprep.subr.mxu0 0.0
        %647 = vmatpush1.msra.mxu0 0.0
        %648 = vmatprep.subr.mxu0 0.0
        %649 = vmatpush1.msra.mxu0 0.0
        %650 = vmatprep.subr.mxu0 0.0
        %651 = vmatpush1.msra.mxu0 0.0
        %652 = vmatprep.subr.mxu0 0.0
        %653 = vmatpush1.msra.mxu0 0.0
        %654 = vmatprep.subr.mxu0 0.0
        %655 = vmatpush1.msra.mxu0 0.0
        %656 = vmatprep.subr.mxu0 0.0
        %657 = vmatpush1.msra.mxu0 0.0
        %658 = vmatprep.subr.mxu0 0.0
        %659 = vmatpush1.msra.mxu0 0.0
        %660 = vmatprep.subr.mxu0 0.0
        %661 = vmatpush1.msra.mxu0 0.0
        %662 = vmatprep.subr.mxu0 0.0
        %663 = vmatpush1.msra.mxu0 0.0
        %664 = vmatprep.subr.mxu0 0.0
        %665 = vmatpush1.msra.mxu0 0.0
        %666 = vmatprep.subr.mxu0 0.0
        %667 = vmatpush1.msra.mxu0 0.0
        %668 = vmatprep.subr.mxu0 0.0
        %669 = vmatpush1.msra.mxu0 0.0
        %670 = vmatprep.subr.mxu0 0.0
        %671 = vmatpush1.msra.mxu0 0.0
        %672 = vmatprep.subr.mxu0 0.0
        %673 = vmatpush1.msra.mxu0 0.0
        %674 = vmatprep.subr.mxu0 0.0
        %675 = vmatpush1.msra.mxu0 0.0
        %676 = vmatprep.subr.mxu0 0.0
        %677 = vmatpush1.msra.mxu0 0.0
        %678 = vmatprep.mubr.f32.mxu0 0.0
        %679 = vmatmul.mubr.f32.gmra.mrb[0].mxu0 %v455
        %v680 = vpop.f32.mrb[0].mxu0
        %v681 = vadd.f32 0.0, %v680
        %v682 = vpop.f32.mrb[0].mxu0
        %v683 = vadd.f32 0.0, %v682
        %684 = vmatprep.mubr.f32.mxu0 0.0
        %685 = vmatmul.mubr.f32.gmra.mrb[0].mxu0 %v458
        %v686 = vpop.f32.mrb[0].mxu0
        %v687 = vadd.f32 0.0, %v686
        %v688 = vpop.f32.mrb[0].mxu0
        %v689 = vadd.f32 0.0, %v688
        %690 = vdwg.mxu0
        %691 = vmatprep.subr.mxu0 0.0
        %692 = vmatpush1.msra.mxu0 %v309
        %693 = vmatprep.subr.mxu0 0.0
        %694 = vmatpush1.msra.mxu0 %v316
        %695 = vmatprep.subr.mxu0 0.0
        %696 = vmatpush1.msra.mxu0 0.0
        %697 = vmatprep.subr.mxu0 0.0
        %698 = vmatpush1.msra.mxu0 0.0
        %699 = vmatprep.subr.mxu0 0.0
        %700 = vmatpush1.msra.mxu0 0.0
        %701 = vmatprep.subr.mxu0 0.0
        %702 = vmatpush1.msra.mxu0 0.0
        %703 = vmatprep.subr.mxu0 0.0
        %704 = vmatpush1.msra.mxu0 0.0
        %705 = vmatprep.subr.mxu0 0.0
        %706 = vmatpush1.msra.mxu0 0.0
        %707 = vmatprep.subr.mxu0 0.0
        %708 = vmatpush1.msra.mxu0 0.0
        %709 = vmatprep.subr.mxu0 0.0
        %710 = vmatpush1.msra.mxu0 0.0
        %711 = vmatprep.subr.mxu0 0.0
        %712 = vmatpush1.msra.mxu0 0.0
        %713 = vmatprep.subr.mxu0 0.0
        %714 = vmatpush1.msra.mxu0 0.0
        %715 = vmatprep.subr.mxu0 0.0
        %716 = vmatpush1.msra.mxu0 0.0
        %717 = vmatprep.subr.mxu0 0.0
        %718 = vmatpush1.msra.mxu0 0.0
        %719 = vmatprep.subr.mxu0 0.0
        %720 = vmatpush1.msra.mxu0 0.0
        %721 = vmatprep.subr.mxu0 0.0
        %722 = vmatpush1.msra.mxu0 0.0
        %723 = vmatprep.subr.mxu0 0.0
        %724 = vmatpush1.msra.mxu0 0.0
        %725 = vmatprep.subr.mxu0 0.0
        %726 = vmatpush1.msra.mxu0 0.0
        %727 = vmatprep.subr.mxu0 0.0
        %728 = vmatpush1.msra.mxu0 0.0
        %729 = vmatprep.subr.mxu0 0.0
        %730 = vmatpush1.msra.mxu0 0.0
        %731 = vmatprep.subr.mxu0 0.0
        %732 = vmatpush1.msra.mxu0 0.0
        %733 = vmatprep.subr.mxu0 0.0
        %734 = vmatpush1.msra.mxu0 0.0
        %735 = vmatprep.subr.mxu0 0.0
        %736 = vmatpush1.msra.mxu0 0.0
        %737 = vmatprep.subr.mxu0 0.0
        %738 = vmatpush1.msra.mxu0 0.0
        %739 = vmatprep.subr.mxu0 0.0
        %740 = vmatpush1.msra.mxu0 0.0
        %741 = vmatprep.subr.mxu0 0.0
        %742 = vmatpush1.msra.mxu0 0.0
        %743 = vmatprep.subr.mxu0 0.0
        %744 = vmatpush1.msra.mxu0 0.0
        %745 = vmatprep.subr.mxu0 0.0
        %746 = vmatpush1.msra.mxu0 0.0
        %747 = vmatprep.subr.mxu0 0.0
        %748 = vmatpush1.msra.mxu0 0.0
        %749 = vmatprep.subr.mxu0 0.0
        %750 = vmatpush1.msra.mxu0 0.0
        %751 = vmatprep.subr.mxu0 0.0
        %752 = vmatpush1.msra.mxu0 0.0
        %753 = vmatprep.subr.mxu0 0.0
        %754 = vmatpush1.msra.mxu0 0.0
        %755 = vmatprep.mubr.f32.mxu0 0.0
        %756 = vmatmul.mubr.f32.gmra.mrb[0].mxu0 %v455
        %v757 = vpop.f32.mrb[0].mxu0
        %v758 = vadd.f32 0.0, %v757
        %v759 = vpop.f32.mrb[0].mxu0
        %760 = vmatprep.mubr.f32.mxu0 0.0
        %761 = vmatmul.mubr.f32.gmra.mrb[0].mxu0 %v458
        %v762 = vpop.f32.mrb[0].mxu0
        %v763 = vadd.f32 0.0, %v762
        %v764 = vpop.f32.mrb[0].mxu0
        %765 = vdwg.mxu0
        %v770 = vlaneseq
        %v771 = vshrl.u32 %v770, 7
        %v772 = vsub.s32 0, %v771
        %v773 = vrot.slane %v299, %v772
        %v774 = vlaneseq
        %v775 = vshrl.u32 %v774, 7
        %v776 = vsub.s32 4, %v775
        %v777 = vrot.slane %v299, %v776
        %v778 = vlaneseq
        %v779 = vshrl.u32 %v778, 7
        %v780 = vsub.s32 0, %v779
        %v781 = vrot.slane %v300, %v780
        %v782 = vlaneseq
        %v783 = vshrl.u32 %v782, 7
        %v784 = vsub.s32 4, %v783
        %v785 = vrot.slane %v300, %v784
        %v786 = vlaneseq
        %v787 = vshrl.u32 %v786, 7
        %v788 = vsub.s32 0, %v787
        %v789 = vrot.slane %v301, %v788
        %v790 = vlaneseq
        %v791 = vshrl.u32 %v790, 7
        %v792 = vsub.s32 4, %v791
        %v793 = vrot.slane %v301, %v792
        %v794 = vlaneseq
        %v795 = vshrl.u32 %v794, 7
        %v796 = vsub.s32 0, %v795
        %v797 = vrot.slane %v302, %v796
        %v805 = vlaneseq
        %v806 = vshrl.u32 %v805, 7
        %v807 = vsub.s32 0, %v806
        %v808 = vrot.slane %v773, %v807
        %v809 = vlaneseq
        %v810 = vshrl.u32 %v809, 7
        %v811 = vsub.s32 0, %v810
        %v812 = vrot.slane %v777, %v811
        %v813 = vlaneseq
        %v814 = vshrl.u32 %v813, 7
        %v815 = vsub.s32 0, %v814
        %v816 = vrot.slane %v781, %v815
        %v817 = vlaneseq
        %v818 = vshrl.u32 %v817, 7
        %v819 = vsub.s32 0, %v818
        %v820 = vrot.slane %v785, %v819
        %v821 = vlaneseq
        %v822 = vshrl.u32 %v821, 7
        %v823 = vsub.s32 0, %v822
        %v824 = vrot.slane %v789, %v823
        %v825 = vlaneseq
        %v826 = vshrl.u32 %v825, 7
        %v827 = vsub.s32 0, %v826
        %v828 = vrot.slane %v793, %v827
        %v829 = vlaneseq
        %v830 = vshrl.u32 %v829, 7
        %v831 = vsub.s32 0, %v830
        %v832 = vrot.slane %v797, %v831
        %v833 = vmul.f32 %v527, %v808
        %v834 = vmul.f32 %v529, %v812
        %v835 = vmul.f32 %v604, %v816
        %v836 = vmul.f32 %v606, %v820
        %v837 = vmul.f32 %v681, %v824
        %v838 = vmul.f32 %v683, %v828
        %v839 = vmul.f32 %v758, %v832
        %v840 = vlaneseq
        %v841 = vshrl.u32 %v840, 7
        %v842 = vsub.s32 1, %v841
        %v843 = vrot.slane %v299, %v842
        %v844 = vlaneseq
        %v845 = vshrl.u32 %v844, 7
        %v846 = vsub.s32 5, %v845
        %v847 = vrot.slane %v299, %v846
        %v848 = vlaneseq
        %v849 = vshrl.u32 %v848, 7
        %v850 = vsub.s32 1, %v849
        %v851 = vrot.slane %v300, %v850
        %v852 = vlaneseq
        %v853 = vshrl.u32 %v852, 7
        %v854 = vsub.s32 5, %v853
        %v855 = vrot.slane %v300, %v854
        %v856 = vlaneseq
        %v857 = vshrl.u32 %v856, 7
        %v858 = vsub.s32 1, %v857
        %v859 = vrot.slane %v301, %v858
        %v860 = vlaneseq
        %v861 = vshrl.u32 %v860, 7
        %v862 = vsub.s32 5, %v861
        %v863 = vrot.slane %v301, %v862
        %v864 = vlaneseq
        %v865 = vshrl.u32 %v864, 7
        %v866 = vsub.s32 1, %v865
        %v867 = vrot.slane %v302, %v866
        %v875 = vlaneseq
        %v876 = vshrl.u32 %v875, 7
        %v877 = vsub.s32 1, %v876
        %v878 = vrot.slane %v843, %v877
        %v879 = vlaneseq
        %v880 = vshrl.u32 %v879, 7
        %v881 = vsub.s32 1, %v880
        %v882 = vrot.slane %v847, %v881
        %v883 = vlaneseq
        %v884 = vshrl.u32 %v883, 7
        %v885 = vsub.s32 1, %v884
        %v886 = vrot.slane %v851, %v885
        %v887 = vlaneseq
        %v888 = vshrl.u32 %v887, 7
        %v889 = vsub.s32 1, %v888
        %v890 = vrot.slane %v855, %v889
        %v891 = vlaneseq
        %v892 = vshrl.u32 %v891, 7
        %v893 = vsub.s32 1, %v892
        %v894 = vrot.slane %v859, %v893
        %v895 = vlaneseq
        %v896 = vshrl.u32 %v895, 7
        %v897 = vsub.s32 1, %v896
        %v898 = vrot.slane %v863, %v897
        %v899 = vlaneseq
        %v900 = vshrl.u32 %v899, 7
        %v901 = vsub.s32 1, %v900
        %v902 = vrot.slane %v867, %v901
        %v903 = vmul.f32 %v527, %v878
        %v904 = vmul.f32 %v529, %v882
        %v905 = vmul.f32 %v604, %v886
        %v906 = vmul.f32 %v606, %v890
        %v907 = vmul.f32 %v681, %v894
        %v908 = vmul.f32 %v683, %v898
        %v909 = vmul.f32 %v758, %v902
        %v917 = vrot.slane %v903, 3
        %v918 = vrot.slane %v904, 3
        %v919 = vrot.slane %v905, 3
        %v920 = vrot.slane %v906, 3
        %v921 = vrot.slane %v907, 3
        %v922 = vrot.slane %v908, 3
        %v923 = vrot.slane %v909, 3
        %v931 = vadd.f32 %v833, %v917
        %v932 = vadd.f32 %v834, %v918
        %v933 = vadd.f32 %v835, %v919
        %v934 = vadd.f32 %v836, %v920
        %v935 = vadd.f32 %v837, %v921
        %v936 = vadd.f32 %v838, %v922
        %v937 = vadd.f32 %v839, %v923
        %v938 = vlaneseq
        %v939 = vshrl.u32 %v938, 7
        %v940 = vsub.s32 2, %v939
        %v941 = vrot.slane %v299, %v940
        %v942 = vlaneseq
        %v943 = vshrl.u32 %v942, 7
        %v944 = vsub.s32 6, %v943
        %v945 = vrot.slane %v299, %v944
        %v946 = vlaneseq
        %v947 = vshrl.u32 %v946, 7
        %v948 = vsub.s32 2, %v947
        %v949 = vrot.slane %v300, %v948
        %v950 = vlaneseq
        %v951 = vshrl.u32 %v950, 7
        %v952 = vsub.s32 6, %v951
        %v953 = vrot.slane %v300, %v952
        %v954 = vlaneseq
        %v955 = vshrl.u32 %v954, 7
        %v956 = vsub.s32 2, %v955
        %v957 = vrot.slane %v301, %v956
        %v958 = vlaneseq
        %v959 = vshrl.u32 %v958, 7
        %v960 = vsub.s32 6, %v959
        %v961 = vrot.slane %v301, %v960
        %v962 = vlaneseq
        %v963 = vshrl.u32 %v962, 7
        %v964 = vsub.s32 2, %v963
        %v965 = vrot.slane %v302, %v964
        %v973 = vlaneseq
        %v974 = vshrl.u32 %v973, 7
        %v975 = vsub.s32 2, %v974
        %v976 = vrot.slane %v941, %v975
        %v977 = vlaneseq
        %v978 = vshrl.u32 %v977, 7
        %v979 = vsub.s32 2, %v978
        %v980 = vrot.slane %v945, %v979
        %v981 = vlaneseq
        %v982 = vshrl.u32 %v981, 7
        %v983 = vsub.s32 2, %v982
        %v984 = vrot.slane %v949, %v983
        %v985 = vlaneseq
        %v986 = vshrl.u32 %v985, 7
        %v987 = vsub.s32 2, %v986
        %v988 = vrot.slane %v953, %v987
        %v989 = vlaneseq
        %v990 = vshrl.u32 %v989, 7
        %v991 = vsub.s32 2, %v990
        %v992 = vrot.slane %v957, %v991
        %v993 = vlaneseq
        %v994 = vshrl.u32 %v993, 7
        %v995 = vsub.s32 2, %v994
        %v996 = vrot.slane %v961, %v995
        %v997 = vlaneseq
        %v998 = vshrl.u32 %v997, 7
        %v999 = vsub.s32 2, %v998
        %v1000 = vrot.slane %v965, %v999
        %v1001 = vmul.f32 %v527, %v976
        %v1002 = vmul.f32 %v529, %v980
        %v1003 = vmul.f32 %v604, %v984
        %v1004 = vmul.f32 %v606, %v988
        %v1005 = vmul.f32 %v681, %v992
        %v1006 = vmul.f32 %v683, %v996
        %v1007 = vmul.f32 %v758, %v1000
        %v1008 = vmul.f32 %v533, %v976
        %v1009 = vmul.f32 %v535, %v980
        %v1010 = vmul.f32 %v610, %v984
        %v1011 = vmul.f32 %v612, %v988
        %v1012 = vmul.f32 %v687, %v992
        %v1013 = vmul.f32 %v689, %v996
        %v1014 = vmul.f32 %v763, %v1000
        %vm1029 = vcmask 1041408
        %v1030 = vrot.slane %v1001, 6
        %v1031 = vrot.slane %v1008, 6
        %v1032 = vsel %vm1029, %v1030, %v1031
        %v1033 = vrot.slane %v1002, 6
        %v1034 = vrot.slane %v1009, 6
        %v1035 = vsel %vm1029, %v1033, %v1034
        %v1036 = vrot.slane %v1003, 6
        %v1037 = vrot.slane %v1010, 6
        %v1038 = vsel %vm1029, %v1036, %v1037
        %v1039 = vrot.slane %v1004, 6
        %v1040 = vrot.slane %v1011, 6
        %v1041 = vsel %vm1029, %v1039, %v1040
        %v1042 = vrot.slane %v1005, 6
        %v1043 = vrot.slane %v1012, 6
        %v1044 = vsel %vm1029, %v1042, %v1043
        %v1045 = vrot.slane %v1006, 6
        %v1046 = vrot.slane %v1013, 6
        %v1047 = vsel %vm1029, %v1045, %v1046
        %v1048 = vrot.slane %v1007, 6
        %v1049 = vrot.slane %v1014, 6
        %v1050 = vsel %vm1029, %v1048, %v1049
        %v1058 = vadd.f32 %v931, %v1032
        %v1059 = vadd.f32 %v932, %v1035
        %v1060 = vadd.f32 %v933, %v1038
        %v1061 = vadd.f32 %v934, %v1041
        %v1062 = vadd.f32 %v935, %v1044
        %v1063 = vadd.f32 %v936, %v1047
        %v1064 = vadd.f32 %v937, %v1050
        %v1072 = vrot.slane %v533, 1
        %v1073 = vrot.slane %v535, 1
        %v1074 = vrot.slane %v610, 1
        %v1075 = vrot.slane %v612, 1
        %v1076 = vrot.slane %v687, 1
        %v1077 = vrot.slane %v689, 1
        %v1078 = vrot.slane %v763, 1
        %v1086 = vadd.f32 %v1058, %v1072
        %v1087 = vadd.f32 %v1059, %v1073
        %v1088 = vadd.f32 %v1060, %v1074
        %v1089 = vadd.f32 %v1061, %v1075
        %v1090 = vadd.f32 %v1062, %v1076
        %v1091 = vadd.f32 %v1063, %v1077
        %v1092 = vadd.f32 %v1064, %v1078
        %1093 = vmatprep.subr.mxu0 0.0
        %1094 = vmatpush1.msra.mxu0 %v317
        %1095 = vmatprep.subr.mxu0 0.0
        %1096 = vmatpush1.msra.mxu0 %v318
        %1097 = vmatprep.subr.mxu0 0.0
        %1098 = vmatpush1.msra.mxu0 %v319
        %1099 = vmatprep.subr.mxu0 0.0
        %1100 = vmatpush1.msra.mxu0 %v320
        %1101 = vmatprep.subr.mxu0 0.0
        %1102 = vmatpush1.msra.mxu0 %v321
        %1103 = vmatprep.subr.mxu0 0.0
        %1104 = vmatpush1.msra.mxu0 %v322
        %1105 = vmatprep.subr.mxu0 0.0
        %1106 = vmatpush1.msra.mxu0 %v323
        %1107 = vmatprep.subr.mxu0 0.0
        %1108 = vmatpush1.msra.mxu0 %v324
        %1109 = vmatprep.subr.mxu0 0.0
        %1110 = vmatpush1.msra.mxu0 %v325
        %1111 = vmatprep.subr.mxu0 0.0
        %1112 = vmatpush1.msra.mxu0 %v326
        %1113 = vmatprep.subr.mxu0 0.0
        %1114 = vmatpush1.msra.mxu0 %v327
        %1115 = vmatprep.subr.mxu0 0.0
        %1116 = vmatpush1.msra.mxu0 %v328
        %1117 = vmatprep.subr.mxu0 0.0
        %1118 = vmatpush1.msra.mxu0 %v329
        %1119 = vmatprep.subr.mxu0 0.0
        %1120 = vmatpush1.msra.mxu0 %v330
        %1121 = vmatprep.subr.mxu0 0.0
        %1122 = vmatpush1.msra.mxu0 %v331
        %1123 = vmatprep.subr.mxu0 0.0
        %1124 = vmatpush1.msra.mxu0 %v332
        %1125 = vmatprep.subr.mxu0 0.0
        %1126 = vmatpush1.msra.mxu0 %v333
        %1127 = vmatprep.subr.mxu0 0.0
        %1128 = vmatpush1.msra.mxu0 %v334
        %1129 = vmatprep.subr.mxu0 0.0
        %1130 = vmatpush1.msra.mxu0 %v335
        %1131 = vmatprep.subr.mxu0 0.0
        %1132 = vmatpush1.msra.mxu0 %v336
        %1133 = vmatprep.subr.mxu0 0.0
        %1134 = vmatpush1.msra.mxu0 %v337
        %1135 = vmatprep.subr.mxu0 0.0
        %1136 = vmatpush1.msra.mxu0 %v338
        %1137 = vmatprep.subr.mxu0 0.0
        %1138 = vmatpush1.msra.mxu0 %v339
        %1139 = vmatprep.subr.mxu0 0.0
        %1140 = vmatpush1.msra.mxu0 %v340
        %1141 = vmatprep.subr.mxu0 0.0
        %1142 = vmatpush1.msra.mxu0 %v341
        %1143 = vmatprep.subr.mxu0 0.0
        %1144 = vmatpush1.msra.mxu0 %v342
        %1145 = vmatprep.subr.mxu0 0.0
        %1146 = vmatpush1.msra.mxu0 %v343
        %1147 = vmatprep.subr.mxu0 0.0
        %1148 = vmatpush1.msra.mxu0 %v344
        %1149 = vmatprep.subr.mxu0 0.0
        %1150 = vmatpush1.msra.mxu0 %v345
        %1151 = vmatprep.subr.mxu0 0.0
        %1152 = vmatpush1.msra.mxu0 %v346
        %1153 = vmatprep.subr.mxu0 0.0
        %1154 = vmatpush1.msra.mxu0 %v347
        %1155 = vmatprep.subr.mxu0 0.0
        %1156 = vmatpush1.msra.mxu0 %v348
        %1157 = vmatprep.mubr.f32.mxu0 %v1087
        %1158 = vmatmul.mubr.f32.gmra.mrb[0].mxu0 %v1086
        %v1159 = vpop.f32.mrb[0].mxu0
        %v1160 = vadd.f32 0.0, %v1159
        %v1161 = vpop.f32.mrb[0].mxu0
        %1162 = vdwg.mxu0
        %1163 = vmatprep.subr.mxu0 0.0
        %1164 = vmatpush1.msra.mxu0 %v349
        %1165 = vmatprep.subr.mxu0 0.0
        %1166 = vmatpush1.msra.mxu0 %v350
        %1167 = vmatprep.subr.mxu0 0.0
        %1168 = vmatpush1.msra.mxu0 %v351
        %1169 = vmatprep.subr.mxu0 0.0
        %1170 = vmatpush1.msra.mxu0 %v352
        %1171 = vmatprep.subr.mxu0 0.0
        %1172 = vmatpush1.msra.mxu0 %v353
        %1173 = vmatprep.subr.mxu0 0.0
        %1174 = vmatpush1.msra.mxu0 %v354
        %1175 = vmatprep.subr.mxu0 0.0
        %1176 = vmatpush1.msra.mxu0 %v355
        %1177 = vmatprep.subr.mxu0 0.0
        %1178 = vmatpush1.msra.mxu0 %v356
        %1179 = vmatprep.subr.mxu0 0.0
        %1180 = vmatpush1.msra.mxu0 %v357
        %1181 = vmatprep.subr.mxu0 0.0
        %1182 = vmatpush1.msra.mxu0 %v358
        %1183 = vmatprep.subr.mxu0 0.0
        %1184 = vmatpush1.msra.mxu0 %v359
        %1185 = vmatprep.subr.mxu0 0.0
        %1186 = vmatpush1.msra.mxu0 %v360
        %1187 = vmatprep.subr.mxu0 0.0
        %1188 = vmatpush1.msra.mxu0 %v361
        %1189 = vmatprep.subr.mxu0 0.0
        %1190 = vmatpush1.msra.mxu0 %v362
        %1191 = vmatprep.subr.mxu0 0.0
        %1192 = vmatpush1.msra.mxu0 %v363
        %1193 = vmatprep.subr.mxu0 0.0
        %1194 = vmatpush1.msra.mxu0 %v364
        %1195 = vmatprep.subr.mxu0 0.0
        %1196 = vmatpush1.msra.mxu0 %v365
        %1197 = vmatprep.subr.mxu0 0.0
        %1198 = vmatpush1.msra.mxu0 %v366
        %1199 = vmatprep.subr.mxu0 0.0
        %1200 = vmatpush1.msra.mxu0 %v367
        %1201 = vmatprep.subr.mxu0 0.0
        %1202 = vmatpush1.msra.mxu0 %v368
        %1203 = vmatprep.subr.mxu0 0.0
        %1204 = vmatpush1.msra.mxu0 %v369
        %1205 = vmatprep.subr.mxu0 0.0
        %1206 = vmatpush1.msra.mxu0 %v370
        %1207 = vmatprep.subr.mxu0 0.0
        %1208 = vmatpush1.msra.mxu0 %v371
        %1209 = vmatprep.subr.mxu0 0.0
        %1210 = vmatpush1.msra.mxu0 %v372
        %1211 = vmatprep.subr.mxu0 0.0
        %1212 = vmatpush1.msra.mxu0 %v373
        %1213 = vmatprep.subr.mxu0 0.0
        %1214 = vmatpush1.msra.mxu0 %v374
        %1215 = vmatprep.subr.mxu0 0.0
        %1216 = vmatpush1.msra.mxu0 %v375
        %1217 = vmatprep.subr.mxu0 0.0
        %1218 = vmatpush1.msra.mxu0 %v376
        %1219 = vmatprep.subr.mxu0 0.0
        %1220 = vmatpush1.msra.mxu0 %v377
        %1221 = vmatprep.subr.mxu0 0.0
        %1222 = vmatpush1.msra.mxu0 %v378
        %1223 = vmatprep.subr.mxu0 0.0
        %1224 = vmatpush1.msra.mxu0 %v379
        %1225 = vmatprep.subr.mxu0 0.0
        %1226 = vmatpush1.msra.mxu0 %v380
        %1227 = vmatprep.mubr.f32.mxu0 %v1089
        %1228 = vmatmul.mubr.f32.gmra.mrb[0].mxu0 %v1088
        %v1229 = vpop.f32.mrb[0].mxu0
        %v1230 = vadd.f32 %v1160, %v1229
        %v1231 = vpop.f32.mrb[0].mxu0
        %1232 = vdwg.mxu0
        %1233 = vmatprep.subr.mxu0 0.0
        %1234 = vmatpush1.msra.mxu0 %v381
        %1235 = vmatprep.subr.mxu0 0.0
        %1236 = vmatpush1.msra.mxu0 %v382
        %1237 = vmatprep.subr.mxu0 0.0
        %1238 = vmatpush1.msra.mxu0 %v383
        %1239 = vmatprep.subr.mxu0 0.0
        %1240 = vmatpush1.msra.mxu0 %v384
        %1241 = vmatprep.subr.mxu0 0.0
        %1242 = vmatpush1.msra.mxu0 %v385
        %1243 = vmatprep.subr.mxu0 0.0
        %1244 = vmatpush1.msra.mxu0 %v386
        %1245 = vmatprep.subr.mxu0 0.0
        %1246 = vmatpush1.msra.mxu0 %v387
        %1247 = vmatprep.subr.mxu0 0.0
        %1248 = vmatpush1.msra.mxu0 %v388
        %1249 = vmatprep.subr.mxu0 0.0
        %1250 = vmatpush1.msra.mxu0 %v389
        %1251 = vmatprep.subr.mxu0 0.0
        %1252 = vmatpush1.msra.mxu0 %v390
        %1253 = vmatprep.subr.mxu0 0.0
        %1254 = vmatpush1.msra.mxu0 %v391
        %1255 = vmatprep.subr.mxu0 0.0
        %1256 = vmatpush1.msra.mxu0 %v392
        %1257 = vmatprep.subr.mxu0 0.0
        %1258 = vmatpush1.msra.mxu0 %v393
        %1259 = vmatprep.subr.mxu0 0.0
        %1260 = vmatpush1.msra.mxu0 %v394
        %1261 = vmatprep.subr.mxu0 0.0
        %1262 = vmatpush1.msra.mxu0 %v395
        %1263 = vmatprep.subr.mxu0 0.0
        %1264 = vmatpush1.msra.mxu0 %v396
        %1265 = vmatprep.subr.mxu0 0.0
        %1266 = vmatpush1.msra.mxu0 %v397
        %1267 = vmatprep.subr.mxu0 0.0
        %1268 = vmatpush1.msra.mxu0 %v398
        %1269 = vmatprep.subr.mxu0 0.0
        %1270 = vmatpush1.msra.mxu0 %v399
        %1271 = vmatprep.subr.mxu0 0.0
        %1272 = vmatpush1.msra.mxu0 %v400
        %1273 = vmatprep.subr.mxu0 0.0
        %1274 = vmatpush1.msra.mxu0 %v401
        %1275 = vmatprep.subr.mxu0 0.0
        %1276 = vmatpush1.msra.mxu0 %v402
        %1277 = vmatprep.subr.mxu0 0.0
        %1278 = vmatpush1.msra.mxu0 %v403
        %1279 = vmatprep.subr.mxu0 0.0
        %1280 = vmatpush1.msra.mxu0 %v404
        %1281 = vmatprep.subr.mxu0 0.0
        %1282 = vmatpush1.msra.mxu0 %v405
        %1283 = vmatprep.subr.mxu0 0.0
        %1284 = vmatpush1.msra.mxu0 %v406
        %1285 = vmatprep.subr.mxu0 0.0
        %1286 = vmatpush1.msra.mxu0 %v407
        %1287 = vmatprep.subr.mxu0 0.0
        %1288 = vmatpush1.msra.mxu0 %v408
        %1289 = vmatprep.subr.mxu0 0.0
        %1290 = vmatpush1.msra.mxu0 %v409
        %1291 = vmatprep.subr.mxu0 0.0
        %1292 = vmatpush1.msra.mxu0 %v410
        %1293 = vmatprep.subr.mxu0 0.0
        %1294 = vmatpush1.msra.mxu0 %v411
        %1295 = vmatprep.subr.mxu0 0.0
        %1296 = vmatpush1.msra.mxu0 %v412
        %1297 = vmatprep.mubr.f32.mxu0 %v1091
        %1298 = vmatmul.mubr.f32.gmra.mrb[0].mxu0 %v1090
        %v1299 = vpop.f32.mrb[0].mxu0
        %v1300 = vadd.f32 %v1230, %v1299
        %v1301 = vpop.f32.mrb[0].mxu0
        %1302 = vdwg.mxu0
        %1303 = vmatprep.subr.mxu0 0.0
        %1304 = vmatpush1.msra.mxu0 %v413
        %1305 = vmatprep.subr.mxu0 0.0
        %1306 = vmatpush1.msra.mxu0 %v414
        %1307 = vmatprep.subr.mxu0 0.0
        %1308 = vmatpush1.msra.mxu0 %v415
        %1309 = vmatprep.subr.mxu0 0.0
        %1310 = vmatpush1.msra.mxu0 %v416
        %1311 = vmatprep.subr.mxu0 0.0
        %1312 = vmatpush1.msra.mxu0 %v417
        %1313 = vmatprep.subr.mxu0 0.0
        %1314 = vmatpush1.msra.mxu0 %v418
        %1315 = vmatprep.subr.mxu0 0.0
        %1316 = vmatpush1.msra.mxu0 %v419
        %1317 = vmatprep.subr.mxu0 0.0
        %1318 = vmatpush1.msra.mxu0 %v420
        %1319 = vmatprep.subr.mxu0 0.0
        %1320 = vmatpush1.msra.mxu0 %v421
        %1321 = vmatprep.subr.mxu0 0.0
        %1322 = vmatpush1.msra.mxu0 %v422
        %1323 = vmatprep.subr.mxu0 0.0
        %1324 = vmatpush1.msra.mxu0 %v423
        %1325 = vmatprep.subr.mxu0 0.0
        %1326 = vmatpush1.msra.mxu0 %v424
        %1327 = vmatprep.subr.mxu0 0.0
        %1328 = vmatpush1.msra.mxu0 %v425
        %1329 = vmatprep.subr.mxu0 0.0
        %1330 = vmatpush1.msra.mxu0 %v426
        %1331 = vmatprep.subr.mxu0 0.0
        %1332 = vmatpush1.msra.mxu0 %v427
        %1333 = vmatprep.subr.mxu0 0.0
        %1334 = vmatpush1.msra.mxu0 %v428
        %1335 = vmatprep.subr.mxu0 0.0
        %1336 = vmatpush1.msra.mxu0 0.0
        %1337 = vmatprep.subr.mxu0 0.0
        %1338 = vmatpush1.msra.mxu0 0.0
        %1339 = vmatprep.subr.mxu0 0.0
        %1340 = vmatpush1.msra.mxu0 0.0
        %1341 = vmatprep.subr.mxu0 0.0
        %1342 = vmatpush1.msra.mxu0 0.0
        %1343 = vmatprep.subr.mxu0 0.0
        %1344 = vmatpush1.msra.mxu0 0.0
        %1345 = vmatprep.subr.mxu0 0.0
        %1346 = vmatpush1.msra.mxu0 0.0
        %1347 = vmatprep.subr.mxu0 0.0
        %1348 = vmatpush1.msra.mxu0 0.0
        %1349 = vmatprep.subr.mxu0 0.0
        %1350 = vmatpush1.msra.mxu0 0.0
        %1351 = vmatprep.subr.mxu0 0.0
        %1352 = vmatpush1.msra.mxu0 0.0
        %1353 = vmatprep.subr.mxu0 0.0
        %1354 = vmatpush1.msra.mxu0 0.0
        %1355 = vmatprep.subr.mxu0 0.0
        %1356 = vmatpush1.msra.mxu0 0.0
        %1357 = vmatprep.subr.mxu0 0.0
        %1358 = vmatpush1.msra.mxu0 0.0
        %1359 = vmatprep.subr.mxu0 0.0
        %1360 = vmatpush1.msra.mxu0 0.0
        %1361 = vmatprep.subr.mxu0 0.0
        %1362 = vmatpush1.msra.mxu0 0.0
        %1363 = vmatprep.subr.mxu0 0.0
        %1364 = vmatpush1.msra.mxu0 0.0
        %1365 = vmatprep.subr.mxu0 0.0
        %1366 = vmatpush1.msra.mxu0 0.0
        %1367 = vmatprep.mubr.f32.mxu0 0.0
        %1368 = vmatmul.mubr.f32.gmra.mrb[0].mxu0 %v1092
        %v1369 = vpop.f32.mrb[0].mxu0
        %v1370 = vadd.f32 %v1300, %v1369
        %v1371 = vpop.f32.mrb[0].mxu0
        %1372 = vdwg.mxu0
        %v1373 = vstv %s430
        %v1374 = vadd.f32 %v1086, %v1373
        %v1375 = vadd.f32 %v1087, %v1373
        %v1376 = vadd.f32 %v1088, %v1373
        %v1377 = vadd.f32 %v1089, %v1373
        %v1378 = vadd.f32 %v1090, %v1373
        %v1379 = vadd.f32 %v1091, %v1373
        %v1380 = vadd.f32 %v1092, %v1373
        %v1381 = vstv %s432
        %v1382 = vadd.f32 %v1086, %v1381
        %v1383 = vadd.f32 %v1087, %v1381
        %v1384 = vadd.f32 %v1088, %v1381
        %v1385 = vadd.f32 %v1089, %v1381
        %v1386 = vadd.f32 %v1090, %v1381
        %v1387 = vadd.f32 %v1091, %v1381
        %v1388 = vadd.f32 %v1092, %v1381
        %v1389 = vstv %s434
        %v1390 = vadd.f32 %v1086, %v1389
        %v1391 = vadd.f32 %v1087, %v1389
        %v1392 = vadd.f32 %v1088, %v1389
        %v1393 = vadd.f32 %v1089, %v1389
        %v1394 = vadd.f32 %v1090, %v1389
        %v1395 = vadd.f32 %v1091, %v1389
        %v1396 = vadd.f32 %v1092, %v1389
        %v1404 = vrot.slane %v1374, 5
        %v1405 = vrot.slane %v1375, 5
        %v1406 = vrot.slane %v1376, 5
        %v1407 = vrot.slane %v1377, 5
        %v1408 = vrot.slane %v1378, 5
        %v1409 = vrot.slane %v1379, 5
        %v1410 = vrot.slane %v1380, 5
        %v1425 = vrot.slane %v1382, 5
        %v1426 = vrot.slane %v1383, 5
        %v1427 = vrot.slane %v1384, 5
        %v1428 = vrot.slane %v1385, 5
        %v1429 = vrot.slane %v1386, 5
        %v1430 = vrot.slane %v1387, 5
        %v1431 = vrot.slane %v1388, 5
        %v1446 = vrot.slane %v1390, 5
        %v1447 = vrot.slane %v1391, 5
        %v1448 = vrot.slane %v1392, 5
        %v1449 = vrot.slane %v1393, 5
        %v1450 = vrot.slane %v1394, 5
        %v1451 = vrot.slane %v1395, 5
        %v1452 = vrot.slane %v1396, 5
        %vm1460 = vcmask 1042432
        %v1461 = vsel %vm1460, %v1086, %v1404
        %v1462 = vsel %vm1460, %v1087, %v1405
        %v1463 = vsel %vm1460, %v1088, %v1406
        %v1464 = vsel %vm1460, %v1089, %v1407
        %v1465 = vsel %vm1460, %v1090, %v1408
        %v1466 = vsel %vm1460, %v1091, %v1409
        %v1467 = vsel %vm1460, %v1092, %v1410
        %vm1468 = vcmask 1043456
        %v1469 = vsel %vm1468, %v1461, %v1425
        %v1470 = vsel %vm1468, %v1462, %v1426
        %v1471 = vsel %vm1468, %v1463, %v1427
        %v1472 = vsel %vm1468, %v1464, %v1428
        %v1473 = vsel %vm1468, %v1465, %v1429
        %v1474 = vsel %vm1468, %v1466, %v1430
        %v1475 = vsel %vm1468, %v1467, %v1431
        %vm1476 = vcmask 1044480
        %v1477 = vsel %vm1476, %v1469, %v1446
        %v1478 = vsel %vm1476, %v1470, %v1447
        %v1479 = vsel %vm1476, %v1471, %v1448
        %v1480 = vsel %vm1476, %v1472, %v1449
        %v1481 = vsel %vm1476, %v1473, %v1450
        %v1482 = vsel %vm1476, %v1474, %v1451
        %v1483 = vsel %vm1476, %v1475, %v1452
        %1484 = vst [vmem:[%s292] sm:$0x3f] %v1477
        %1485 = vst [vmem:[%s292 + $0x8] sm:$0x3f] %v1478
        %1486 = vst [vmem:[%s292 + $0x10] sm:$0x3f] %v1479
        %1487 = vst [vmem:[%s292 + $0x18] sm:$0x3f] %v1480
        %1488 = vst [vmem:[%s292 + $0x20] sm:$0x3f] %v1481
        %1489 = vst [vmem:[%s292 + $0x28] sm:$0x3f] %v1482
        %1490 = vst [vmem:[%s292 + $0x30] sm:$0x3f] %v1483
        %v1491 = vadd.f32 %v1370, %v1373
        %v1492 = vadd.f32 %v1370, %v1381
        %v1493 = vadd.f32 %v1370, %v1389
        %v1494 = vstv %s436
        %v1495 = vmul.f32 %v1494, %v1491
        %v1496 = vstv %s438
        %v1497 = vmul.f32 %v1496, %v1492
        %v1499 = vrot.slane %v1497, 1
        %v1501 = vadd.f32 %v1495, %v1499
        %v1502 = vstv %s440
        %v1503 = vmul.f32 %v1502, %v1493
        %v1505 = vrot.slane %v1503, 2
        %v1507 = vadd.f32 %v1501, %v1505
        %v1508 = vstv %s442
        %v1509 = vmul.f32 %v1508, %v1491
        %v1510 = vstv %s444
        %v1511 = vmul.f32 %v1510, %v1492
        %v1513 = vrot.slane %v1511, 1
        %v1515 = vadd.f32 %v1509, %v1513
        %v1516 = vstv %s446
        %v1517 = vmul.f32 %v1516, %v1493
        %v1519 = vrot.slane %v1517, 2
        %v1521 = vadd.f32 %v1515, %v1519
        %v1522 = vstv %s448
        %v1523 = vmul.f32 %v1522, %v1491
        %v1524 = vstv %s450
        %v1525 = vmul.f32 %v1524, %v1492
        %v1527 = vrot.slane %v1525, 1
        %v1529 = vadd.f32 %v1523, %v1527
        %v1530 = vstv %s452
        %v1531 = vmul.f32 %v1530, %v1493
        %v1533 = vrot.slane %v1531, 2
        %v1535 = vadd.f32 %v1529, %v1533
        %v1536 = vrcp.pop %v1535
        %v1537 = vmul.f32 1.0, %v1536
        %v1538 = vmul.f32 %v1507, %v1537
        %v1539 = vmul.f32 %v1538, 2.0
        %v1540 = vrcp.pop 224.0
        %v1541 = vmul.f32 %v1539, %v1540
        %v1542 = vsub.f32 %v1541, 1.0
        %v1543 = vmul.f32 %v1521, %v1537
        %v1544 = vmul.f32 %v1543, 2.0
        %v1545 = vmul.f32 %v1544, %v1540
        %v1546 = vsub.f32 %v1545, 1.0
        %v1548 = vrot.slane %v1491, 5
        %v1551 = vrot.slane %v1492, 5
        %v1554 = vrot.slane %v1493, 5
        %v1557 = vrot.slane %v1542, 2
        %v1560 = vrot.slane %v1546, 1
        %v1562 = vsel %vm1460, %v1370, %v1548
        %v1563 = vsel %vm1468, %v1562, %v1551
        %v1564 = vsel %vm1476, %v1563, %v1554
        %vm1565 = vcmask 1045504
        %v1566 = vsel %vm1565, %v1564, %v1557
        %vm1567 = vcmask 1046528
        %v1568 = vsel %vm1567, %v1566, %v1560
        %vm1569 = vcmask 171008
        %1570 = vst.msk [vmem:[%s296] sm:$0xff] %vm1569, %v1568
        %p1571 = scmp.lt.s32.totalorder %s19, 1
        %s1572 = scalar_select %p1571, %s19, 1
        %s1573 = smul.addr %s1572, 7
        %s1574 = smul.addr %s1573, 8
        %s1575 = scalar_lea.vmem %s5, %s1574
        %p1576 = scmp.lt.s32.totalorder %s19, 1
        %s1577 = scalar_select %p1576, %s19, 1
        %s1578 = smul.addr %s1577, 8
        %s1579 = scalar_lea.vmem %s6, %s1578
        // Predicated region
        $region45: #{mano_head_forward.3} parent=39 // pred_check
          %p1580 = pneg %p152
        $region46: #{mano_head_forward.3} parent=39 // pred_check_branch
          %1582 = sbr.rel (%p1580) target = $region48
        $region47: #{mano_head_forward.3} parent=39 // pred_region
          _
        $region48: #{mano_head_forward.3} parent=39 // pred_fallthru
          _
        // Predicated region
        $region49: #{mano_head_forward.3} parent=39 // pred_check
          %p1583 = pneg %p178
        $region50: #{mano_head_forward.3} parent=39 // pred_check_branch
          %1585 = sbr.rel (%p1583) target = $region52
        $region51: #{mano_head_forward.3} parent=39 // pred_region
          _
        $region52: #{mano_head_forward.3} parent=39 // pred_fallthru
          _
      $region40: #{mano_head_forward.3} parent=5 // pred_fallthru
        _
      %p1586 = scmp.le.s32.totalorder 2, %s14
      // Predicated region
      $region53: #{mano_head_forward.3} parent=5 // pred_check
        %p1587 = pneg %p1586
      $region54: #{mano_head_forward.3} parent=5 // pred_check_branch
        %1589 = sbr.rel (%p1587) target = $region56
      $region55: #{mano_head_forward.3} parent=5 // pred_region
        %s1590 = ssub.s32 %s14, 2
        // Predicated region
        $region57: #{mano_head_forward.3} parent=55 // pred_check
          %p1591 = pneg %p158
        $region58: #{mano_head_forward.3} parent=55 // pred_check_branch
          %1593 = sbr.rel (%p1591) target = $region60
        $region59: #{mano_head_forward.3} parent=55 // pred_region
          %p1594 = scmp.lt.s32.totalorder %s20, 1
          %s1595 = scalar_select %p1594, %s20, 1
          %s1596 = smul.addr %s1595, 7
          %s1597 = smul.addr %s1596, 8
          %s1598 = scalar_lea.vmem %s5, %s1597
        $region60: #{mano_head_forward.3} parent=55 // pred_fallthru
          _
        // Predicated region
        $region61: #{mano_head_forward.3} parent=55 // pred_check
          %p1599 = pneg %p184
        $region62: #{mano_head_forward.3} parent=55 // pred_check_branch
          %1601 = sbr.rel (%p1599) target = $region64
        $region63: #{mano_head_forward.3} parent=55 // pred_region
          %p1602 = scmp.lt.s32.totalorder %s20, 1
          %s1603 = scalar_select %p1602, %s20, 1
          %s1604 = smul.addr %s1603, 8
          %s1605 = scalar_lea.vmem %s6, %s1604
        $region64: #{mano_head_forward.3} parent=55 // pred_fallthru
          _
      $region56: #{mano_head_forward.3} parent=5 // pred_fallthru
        _
    $region6: #{mano_head_forward.3} parent=1 // loop_footer
      %s18 = sadd.s32 1, %s14
    $region7: #{mano_head_forward.3} parent=1 // loop_footer_branch
      %13 = sbr.rel target = $region3
    $region8: #{mano_head_forward.3} parent=1 // loop_exit
      _
    %1606 = vsyncpa [#allocation3], 1
    %s1607 = scalar_lea.sflag [#allocation3], 1
    %1608 = vsyncpa %s1607, 1

// kernel: mano_head_forward.2
$region0: #{mano_head_forward.2}
  #allocation0 [shape = 'u32[]', space=smem, size = 0x4, offset = 0x4, fixed_abs, tag = 'smem constant byte address 0x4 - core index']
  #allocation1 [shape = 'u32[144,128]{1,0:T(1,128)}', space=vmem, size = 0x12000, scoped, tag = 'internal scratch']
  %s0 = inlined_call_operand.vmem [shape: bf16[2,145], index: 0, kind: input, shape index: {}]
  %s1 = inlined_call_operand.vmem [shape: bf16[145,2688], index: 1, kind: input, shape index: {}]
  %s2 = inlined_call_operand.vmem [shape: f32[1,2688], index: 2, kind: input, shape index: {}]
  %s3 = inlined_call_operand.vmem [shape: f32[2,2688], index: 3, kind: output, shape index: {}]
  %s4 = sld [smem:[#allocation0]]
  $region22: #{mano_head_forward.2} parent=0
    _
  %s6 = ssub.s32 1, %s4
  %s7 = scalar_select 0, %s6, %s4
  // Predicated region
  $region2: #{mano_head_forward.2} parent=0 // pred_check
    _
  $region3: #{mano_head_forward.2} parent=0 // pred_check_branch
    %9 = sbr.rel (0) target = $region5
  $region4: #{mano_head_forward.2} parent=0 // pred_region
    _
  $region5: #{mano_head_forward.2} parent=0 // pred_fallthru
    _
  // Predicated region
  $region6: #{mano_head_forward.2} parent=0 // pred_check
    _
  $region7: #{mano_head_forward.2} parent=0 // pred_check_branch
    %11 = sbr.rel (0) target = $region9
  $region8: #{mano_head_forward.2} parent=0 // pred_region
    _
  $region9: #{mano_head_forward.2} parent=0 // pred_fallthru
    _
  // Predicated region
  $region10: #{mano_head_forward.2} parent=0 // pred_check
    _
  $region11: #{mano_head_forward.2} parent=0 // pred_check_branch
    %13 = sbr.rel (0) target = $region13
  $region12: #{mano_head_forward.2} parent=0 // pred_region
    _
  $region13: #{mano_head_forward.2} parent=0 // pred_fallthru
    _
  %v15 = vld [vmem:[%s2] sm:$0xff]
  %v16 = vld [vmem:[%s2 + $0x8] sm:$0xff]
  %v17 = vld [vmem:[%s2 + $0x10] sm:$0x1f]
  %v18 = vld [vmem:[%s0] sm:$0x3]
  %v19 = vld [vmem:[%s1] sm:$0xff]
  %v20 = vld [vmem:[%s1 + $0x8] sm:$0xff]
  %v21 = vld [vmem:[%s1 + $0x10] sm:$0xff]
  %v22 = vld [vmem:[%s1 + $0x18] sm:$0xff]
  %v23 = vld [vmem:[%s1 + $0x20] sm:$0xff]
  %v24 = vld [vmem:[%s1 + $0x28] sm:$0xff]
  %v25 = vld [vmem:[%s1 + $0x30] sm:$0xff]
  %v26 = vld [vmem:[%s1 + $0x38] sm:$0xff]
  %v27 = vld [vmem:[%s1 + $0x40] sm:$0xff]
  %v28 = vld [vmem:[%s1 + $0x48] sm:$0xff]
  %v29 = vld [vmem:[%s1 + $0x50] sm:$0xf]
  %v30 = vld [vmem:[%s1 + $0x54] sm:$0xff]
  %v31 = vld [vmem:[%s1 + $0x5c] sm:$0xff]
  %v32 = vld [vmem:[%s1 + $0x64] sm:$0xff]
  %v33 = vld [vmem:[%s1 + $0x6c] sm:$0xff]
  %v34 = vld [vmem:[%s1 + $0x74] sm:$0xff]
  %v35 = vld [vmem:[%s1 + $0x7c] sm:$0xff]
  %v36 = vld [vmem:[%s1 + $0x84] sm:$0xff]
  %v37 = vld [vmem:[%s1 + $0x8c] sm:$0xff]
  %v38 = vld [vmem:[%s1 + $0x94] sm:$0xff]
  %v39 = vld [vmem:[%s1 + $0x9c] sm:$0xff]
  %v40 = vld [vmem:[%s1 + $0xa4] sm:$0xf]
  %v41 = vld [vmem:[%s1 + $0xa8] sm:$0xff]
  %v42 = vld [vmem:[%s1 + $0xb0] sm:$0xff]
  %v43 = vld [vmem:[%s1 + $0xb8] sm:$0xff]
  %v44 = vld [vmem:[%s1 + $0xc0] sm:$0xff]
  %v45 = vld [vmem:[%s1 + $0xc8] sm:$0xff]
  %v46 = vld [vmem:[%s1 + $0xd0] sm:$0xff]
  %v47 = vld [vmem:[%s1 + $0xd8] sm:$0xff]
  %v48 = vld [vmem:[%s1 + $0xe0] sm:$0xff]
  %v49 = vld [vmem:[%s1 + $0xe8] sm:$0xff]
  %v50 = vld [vmem:[%s1 + $0xf0] sm:$0xff]
  %v51 = vld [vmem:[%s1 + $0xf8] sm:$0xf]
  %v52 = vld [vmem:[%s1 + $0xfc] sm:$0xff]
  %v53 = vld [vmem:[%s1 + $0x104] sm:$0xff]
  %v54 = vld [vmem:[%s1 + $0x10c] sm:$0xff]
  %v55 = vld [vmem:[%s1 + $0x114] sm:$0xff]
  %v56 = vld [vmem:[%s1 + $0x11c] sm:$0xff]
  %v57 = vld [vmem:[%s1 + $0x124] sm:$0xff]
  %v58 = vld [vmem:[%s1 + $0x12c] sm:$0xff]
  %v59 = vld [vmem:[%s1 + $0x134] sm:$0xff]
  %v60 = vld [vmem:[%s1 + $0x13c] sm:$0xff]
  %v61 = vld [vmem:[%s1 + $0x144] sm:$0xff]
  %v62 = vld [vmem:[%s1 + $0x14c] sm:$0xf]
  %v63 = vld [vmem:[%s1 + $0x150] sm:$0xff]
  %v64 = vld [vmem:[%s1 + $0x158] sm:$0xff]
  %v65 = vld [vmem:[%s1 + $0x160] sm:$0xff]
  %v66 = vld [vmem:[%s1 + $0x168] sm:$0xff]
  %v67 = vld [vmem:[%s1 + $0x170] sm:$0xff]
  %v68 = vld [vmem:[%s1 + $0x178] sm:$0xff]
  %v69 = vld [vmem:[%s1 + $0x180] sm:$0xff]
  %v70 = vld [vmem:[%s1 + $0x188] sm:$0xff]
  %v71 = vld [vmem:[%s1 + $0x190] sm:$0xff]
  %v72 = vld [vmem:[%s1 + $0x198] sm:$0xff]
  %v73 = vld [vmem:[%s1 + $0x1a0] sm:$0xf]
  %v74 = vld [vmem:[%s1 + $0x1a4] sm:$0xff]
  %v75 = vld [vmem:[%s1 + $0x1ac] sm:$0xff]
  %v76 = vld [vmem:[%s1 + $0x1b4] sm:$0xff]
  %v77 = vld [vmem:[%s1 + $0x1bc] sm:$0xff]
  %v78 = vld [vmem:[%s1 + $0x1c4] sm:$0xff]
  %v79 = vld [vmem:[%s1 + $0x1cc] sm:$0xff]
  %v80 = vld [vmem:[%s1 + $0x1d4] sm:$0xff]
  %v81 = vld [vmem:[%s1 + $0x1dc] sm:$0xff]
  %v82 = vld [vmem:[%s1 + $0x1e4] sm:$0xff]
  %v83 = vld [vmem:[%s1 + $0x1ec] sm:$0xff]
  %v84 = vld [vmem:[%s1 + $0x1f4] sm:$0xf]
  %v85 = vld [vmem:[%s1 + $0x1f8] sm:$0xff]
  %v86 = vld [vmem:[%s1 + $0x200] sm:$0xff]
  %v87 = vld [vmem:[%s1 + $0x208] sm:$0xff]
  %v88 = vld [vmem:[%s1 + $0x210] sm:$0xff]
  %v89 = vld [vmem:[%s1 + $0x218] sm:$0xff]
  %v90 = vld [vmem:[%s1 + $0x220] sm:$0xff]
  %v91 = vld [vmem:[%s1 + $0x228] sm:$0xff]
  %v92 = vld [vmem:[%s1 + $0x230] sm:$0xff]
  %v93 = vld [vmem:[%s1 + $0x238] sm:$0xff]
  %v94 = vld [vmem:[%s1 + $0x240] sm:$0xff]
  %v95 = vld [vmem:[%s1 + $0x248] sm:$0xf]
  %v96 = vld [vmem:[%s1 + $0x24c] sm:$0xff]
  %v97 = vld [vmem:[%s1 + $0x254] sm:$0xff]
  %v98 = vld [vmem:[%s1 + $0x25c] sm:$0xff]
  %v99 = vld [vmem:[%s1 + $0x264] sm:$0xff]
  %v100 = vld [vmem:[%s1 + $0x26c] sm:$0xff]
  %v101 = vld [vmem:[%s1 + $0x274] sm:$0xff]
  %v102 = vld [vmem:[%s1 + $0x27c] sm:$0xff]
  %v103 = vld [vmem:[%s1 + $0x284] sm:$0xff]
  %v104 = vld [vmem:[%s1 + $0x28c] sm:$0xff]
  %v105 = vld [vmem:[%s1 + $0x294] sm:$0xff]
  %v106 = vld [vmem:[%s1 + $0x29c] sm:$0xf]
  %v107 = vld [vmem:[%s1 + $0x2a0] sm:$0xff]
  %v108 = vld [vmem:[%s1 + $0x2a8] sm:$0xff]
  %v109 = vld [vmem:[%s1 + $0x2b0] sm:$0xff]
  %v110 = vld [vmem:[%s1 + $0x2b8] sm:$0xff]
  %v111 = vld [vmem:[%s1 + $0x2c0] sm:$0xff]
  %v112 = vld [vmem:[%s1 + $0x2c8] sm:$0xff]
  %v113 = vld [vmem:[%s1 + $0x2d0] sm:$0xff]
  %v114 = vld [vmem:[%s1 + $0x2d8] sm:$0xff]
  %v115 = vld [vmem:[%s1 + $0x2e0] sm:$0xff]
  %v116 = vld [vmem:[%s1 + $0x2e8] sm:$0xff]
  %v117 = vld [vmem:[%s1 + $0x2f0] sm:$0xf]
  %v118 = vld [vmem:[%s1 + $0x2f4] sm:$0xff]
  %v119 = vld [vmem:[%s1 + $0x2fc] sm:$0xff]
  %v120 = vld [vmem:[%s1 + $0x304] sm:$0xff]
  %v121 = vld [vmem:[%s1 + $0x30c] sm:$0xff]
  %v122 = vld [vmem:[%s1 + $0x314] sm:$0xff]
  %v123 = vld [vmem:[%s1 + $0x31c] sm:$0xff]
  %v124 = vld [vmem:[%s1 + $0x324] sm:$0xff]
  %v125 = vld [vmem:[%s1 + $0x32c] sm:$0xff]
  %v126 = vld [vmem:[%s1 + $0x334] sm:$0xff]
  %v127 = vld [vmem:[%s1 + $0x33c] sm:$0xff]
  %v128 = vld [vmem:[%s1 + $0x344] sm:$0xf]
  %v129 = vld [vmem:[%s1 + $0x348] sm:$0xff]
  %v130 = vld [vmem:[%s1 + $0x350] sm:$0xff]
  %v131 = vld [vmem:[%s1 + $0x358] sm:$0xff]
  %v132 = vld [vmem:[%s1 + $0x360] sm:$0xff]
  %v133 = vld [vmem:[%s1 + $0x368] sm:$0xff]
  %v134 = vld [vmem:[%s1 + $0x370] sm:$0xff]
  %v135 = vld [vmem:[%s1 + $0x378] sm:$0xff]
  %v136 = vld [vmem:[%s1 + $0x380] sm:$0xff]
  %v137 = vld [vmem:[%s1 + $0x388] sm:$0xff]
  %v138 = vld [vmem:[%s1 + $0x390] sm:$0xff]
  %v139 = vld [vmem:[%s1 + $0x398] sm:$0xf]
  %v140 = vld [vmem:[%s1 + $0x39c] sm:$0xff]
  %v141 = vld [vmem:[%s1 + $0x3a4] sm:$0xff]
  %v142 = vld [vmem:[%s1 + $0x3ac] sm:$0xff]
  %v143 = vld [vmem:[%s1 + $0x3b4] sm:$0xff]
  %v144 = vld [vmem:[%s1 + $0x3bc] sm:$0xff]
  %v145 = vld [vmem:[%s1 + $0x3c4] sm:$0xff]
  %v146 = vld [vmem:[%s1 + $0x3cc] sm:$0xff]
  %v147 = vld [vmem:[%s1 + $0x3d4] sm:$0xff]
  %v148 = vld [vmem:[%s1 + $0x3dc] sm:$0xff]
  %v149 = vld [vmem:[%s1 + $0x3e4] sm:$0xff]
  %v150 = vld [vmem:[%s1 + $0x3ec] sm:$0xf]
  %v151 = vld [vmem:[%s1 + $0x3f0] sm:$0xff]
  %v152 = vld [vmem:[%s1 + $0x3f8] sm:$0xff]
  %v153 = vld [vmem:[%s1 + $0x400] sm:$0xff]
  %v154 = vld [vmem:[%s1 + $0x408] sm:$0xff]
  %v155 = vld [vmem:[%s1 + $0x410] sm:$0xff]
  %v156 = vld [vmem:[%s1 + $0x418] sm:$0xff]
  %v157 = vld [vmem:[%s1 + $0x420] sm:$0xff]
  %v158 = vld [vmem:[%s1 + $0x428] sm:$0xff]
  %v159 = vld [vmem:[%s1 + $0x430] sm:$0xff]
  %v160 = vld [vmem:[%s1 + $0x438] sm:$0xff]
  %v161 = vld [vmem:[%s1 + $0x440] sm:$0xf]
  %v162 = vld [vmem:[%s1 + $0x444] sm:$0xff]
  %v163 = vld [vmem:[%s1 + $0x44c] sm:$0xff]
  %v164 = vld [vmem:[%s1 + $0x454] sm:$0xff]
  %v165 = vld [vmem:[%s1 + $0x45c] sm:$0xff]
  %v166 = vld [vmem:[%s1 + $0x464] sm:$0xff]
  %v167 = vld [vmem:[%s1 + $0x46c] sm:$0xff]
  %v168 = vld [vmem:[%s1 + $0x474] sm:$0xff]
  %v169 = vld [vmem:[%s1 + $0x47c] sm:$0xff]
  %v170 = vld [vmem:[%s1 + $0x484] sm:$0xff]
  %v171 = vld [vmem:[%s1 + $0x48c] sm:$0xff]
  %v172 = vld [vmem:[%s1 + $0x494] sm:$0xf]
  %v173 = vld [vmem:[%s1 + $0x498] sm:$0xff]
  %v174 = vld [vmem:[%s1 + $0x4a0] sm:$0xff]
  %v175 = vld [vmem:[%s1 + $0x4a8] sm:$0xff]
  %v176 = vld [vmem:[%s1 + $0x4b0] sm:$0xff]
  %v177 = vld [vmem:[%s1 + $0x4b8] sm:$0xff]
  %v178 = vld [vmem:[%s1 + $0x4c0] sm:$0xff]
  %v179 = vld [vmem:[%s1 + $0x4c8] sm:$0xff]
  %v180 = vld [vmem:[%s1 + $0x4d0] sm:$0xff]
  %v181 = vld [vmem:[%s1 + $0x4d8] sm:$0xff]
  %v182 = vld [vmem:[%s1 + $0x4e0] sm:$0xff]
  %v183 = vld [vmem:[%s1 + $0x4e8] sm:$0xf]
  %v184 = vld [vmem:[%s1 + $0x4ec] sm:$0xff]
  %v185 = vld [vmem:[%s1 + $0x4f4] sm:$0xff]
  %v186 = vld [vmem:[%s1 + $0x4fc] sm:$0xff]
  %v187 = vld [vmem:[%s1 + $0x504] sm:$0xff]
  %v188 = vld [vmem:[%s1 + $0x50c] sm:$0xff]
  %v189 = vld [vmem:[%s1 + $0x514] sm:$0xff]
  %v190 = vld [vmem:[%s1 + $0x51c] sm:$0xff]
  %v191 = vld [vmem:[%s1 + $0x524] sm:$0xff]
  %v192 = vld [vmem:[%s1 + $0x52c] sm:$0xff]
  %v193 = vld [vmem:[%s1 + $0x534] sm:$0xff]
  %v194 = vld [vmem:[%s1 + $0x53c] sm:$0xf]
  %v195 = vld [vmem:[%s1 + $0x540] sm:$0xff]
  %v196 = vld [vmem:[%s1 + $0x548] sm:$0xff]
  %v197 = vld [vmem:[%s1 + $0x550] sm:$0xff]
  %v198 = vld [vmem:[%s1 + $0x558] sm:$0xff]
  %v199 = vld [vmem:[%s1 + $0x560] sm:$0xff]
  %v200 = vld [vmem:[%s1 + $0x568] sm:$0xff]
  %v201 = vld [vmem:[%s1 + $0x570] sm:$0xff]
  %v202 = vld [vmem:[%s1 + $0x578] sm:$0xff]
  %v203 = vld [vmem:[%s1 + $0x580] sm:$0xff]
  %v204 = vld [vmem:[%s1 + $0x588] sm:$0xff]
  %v205 = vld [vmem:[%s1 + $0x590] sm:$0xf]
  %v206 = vld [vmem:[%s1 + $0x594] sm:$0xff]
  %v207 = vld [vmem:[%s1 + $0x59c] sm:$0xff]
  %v208 = vld [vmem:[%s1 + $0x5a4] sm:$0xff]
  %v209 = vld [vmem:[%s1 + $0x5ac] sm:$0xff]
  %v210 = vld [vmem:[%s1 + $0x5b4] sm:$0xff]
  %v211 = vld [vmem:[%s1 + $0x5bc] sm:$0xff]
  %v212 = vld [vmem:[%s1 + $0x5c4] sm:$0xff]
  %v213 = vld [vmem:[%s1 + $0x5cc] sm:$0xff]
  %v214 = vld [vmem:[%s1 + $0x5d4] sm:$0xff]
  %v215 = vld [vmem:[%s1 + $0x5dc] sm:$0xff]
  %v216 = vld [vmem:[%s1 + $0x5e4] sm:$0xf]
  %v217 = vld [vmem:[%s1 + $0x5e8] sm:$0x11]
  %v218 = vld [vmem:[%s1 + $0x5f0] sm:$0x11]
  %v219 = vld [vmem:[%s1 + $0x5f8] sm:$0x11]
  %v220 = vld [vmem:[%s1 + $0x600] sm:$0x11]
  %v221 = vld [vmem:[%s1 + $0x608] sm:$0x11]
  %v222 = vld [vmem:[%s1 + $0x610] sm:$0x11]
  %v223 = vld [vmem:[%s1 + $0x618] sm:$0x11]
  %v224 = vld [vmem:[%s1 + $0x620] sm:$0x11]
  %v225 = vld [vmem:[%s1 + $0x628] sm:$0x11]
  %v226 = vld [vmem:[%s1 + $0x630] sm:$0x11]
  %v227 = vld [vmem:[%s1 + $0x638] sm:$0x1]
  %v230 = vunpack.c.l.s4 1966171168
  %v231 = vunpack.c.0.s8 %v230
  %v232 = vlaneseq
  %v233 = vshrl.u32 %v232, 7
  %v234 = vsub.s32 %v231, %v233
  %v235 = vrot.slane %v18, %v234
  %v236 = vcombine.high %v235, %v235
  %v238 = vunpack.c.l.s4 1966171168
  %v239 = vunpack.c.0.s8 %v238
  %v240 = vlaneseq
  %v241 = vshrl.u32 %v240, 7
  %v242 = vsub.s32 %v239, %v241
  %v243 = vrot.slane %v235, %v242
  %v245 = vunpack.c.l.s4 1966171168
  %v246 = vunpack.c.0.s8 %v245
  %v247 = vlaneseq
  %v248 = vshrl.u32 %v247, 7
  %v249 = vsub.s32 %v246, %v248
  %v250 = vrot.slane %v236, %v249
  %v461 = vunpack.c.l.b16 %v19
  %v462 = vunpack.c.h.b16 %v19
  %v463 = vunpack.c.l.b16 %v20
  %v464 = vunpack.c.h.b16 %v20
  %v465 = vunpack.c.l.b16 %v21
  %v466 = vunpack.c.h.b16 %v21
  %v467 = vunpack.c.l.b16 %v22
  %v468 = vunpack.c.h.b16 %v22
  %v469 = vunpack.c.l.b16 %v23
  %v470 = vunpack.c.h.b16 %v23
  %v471 = vunpack.c.l.b16 %v24
  %v472 = vunpack.c.h.b16 %v24
  %v473 = vunpack.c.l.b16 %v25
  %v474 = vunpack.c.h.b16 %v25
  %v475 = vunpack.c.l.b16 %v26
  %v476 = vunpack.c.h.b16 %v26
  %v477 = vunpack.c.l.b16 %v27
  %v478 = vunpack.c.h.b16 %v27
  %v479 = vunpack.c.l.b16 %v28
  %v480 = vunpack.c.h.b16 %v28
  %v481 = vunpack.c.l.b16 %v29
  %v482 = vunpack.c.l.b16 %v30
  %v483 = vunpack.c.h.b16 %v30
  %v484 = vunpack.c.l.b16 %v31
  %v485 = vunpack.c.h.b16 %v31
  %v486 = vunpack.c.l.b16 %v32
  %v487 = vunpack.c.h.b16 %v32
  %v488 = vunpack.c.l.b16 %v33
  %v489 = vunpack.c.h.b16 %v33
  %v490 = vunpack.c.l.b16 %v34
  %v491 = vunpack.c.h.b16 %v34
  %v492 = vunpack.c.l.b16 %v35
  %v493 = vunpack.c.h.b16 %v35
  %v494 = vunpack.c.l.b16 %v36
  %v495 = vunpack.c.h.b16 %v36
  %v496 = vunpack.c.l.b16 %v37
  %v497 = vunpack.c.h.b16 %v37
  %v498 = vunpack.c.l.b16 %v38
  %v499 = vunpack.c.h.b16 %v38
  %v500 = vunpack.c.l.b16 %v39
  %v501 = vunpack.c.h.b16 %v39
  %v502 = vunpack.c.l.b16 %v40
  %v503 = vunpack.c.l.b16 %v41
  %v504 = vunpack.c.h.b16 %v41
  %v505 = vunpack.c.l.b16 %v42
  %v506 = vunpack.c.h.b16 %v42
  %v507 = vunpack.c.l.b16 %v43
  %v508 = vunpack.c.h.b16 %v43
  %v509 = vunpack.c.l.b16 %v44
  %v510 = vunpack.c.h.b16 %v44
  %v511 = vunpack.c.l.b16 %v45
  %v512 = vunpack.c.h.b16 %v45
  %v513 = vunpack.c.l.b16 %v46
  %v514 = vunpack.c.h.b16 %v46
  %v515 = vunpack.c.l.b16 %v47
  %v516 = vunpack.c.h.b16 %v47
  %v517 = vunpack.c.l.b16 %v48
  %v518 = vunpack.c.h.b16 %v48
  %v519 = vunpack.c.l.b16 %v49
  %v520 = vunpack.c.h.b16 %v49
  %v521 = vunpack.c.l.b16 %v50
  %v522 = vunpack.c.h.b16 %v50
  %v523 = vunpack.c.l.b16 %v51
  %v524 = vunpack.c.l.b16 %v52
  %v525 = vunpack.c.h.b16 %v52
  %v526 = vunpack.c.l.b16 %v53
  %v527 = vunpack.c.h.b16 %v53
  %v528 = vunpack.c.l.b16 %v54
  %v529 = vunpack.c.h.b16 %v54
  %v530 = vunpack.c.l.b16 %v55
  %v531 = vunpack.c.h.b16 %v55
  %v532 = vunpack.c.l.b16 %v56
  %v533 = vunpack.c.h.b16 %v56
  %v534 = vunpack.c.l.b16 %v57
  %v535 = vunpack.c.h.b16 %v57
  %v536 = vunpack.c.l.b16 %v58
  %v537 = vunpack.c.h.b16 %v58
  %v538 = vunpack.c.l.b16 %v59
  %v539 = vunpack.c.h.b16 %v59
  %v540 = vunpack.c.l.b16 %v60
  %v541 = vunpack.c.h.b16 %v60
  %v542 = vunpack.c.l.b16 %v61
  %v543 = vunpack.c.h.b16 %v61
  %v544 = vunpack.c.l.b16 %v62
  %v545 = vunpack.c.l.b16 %v63
  %v546 = vunpack.c.h.b16 %v63
  %v547 = vunpack.c.l.b16 %v64
  %v548 = vunpack.c.h.b16 %v64
  %v549 = vunpack.c.l.b16 %v65
  %v550 = vunpack.c.h.b16 %v65
  %v551 = vunpack.c.l.b16 %v66
  %v552 = vunpack.c.h.b16 %v66
  %v553 = vunpack.c.l.b16 %v67
  %v554 = vunpack.c.h.b16 %v67
  %v555 = vunpack.c.l.b16 %v68
  %v556 = vunpack.c.h.b16 %v68
  %v557 = vunpack.c.l.b16 %v69
  %v558 = vunpack.c.h.b16 %v69
  %v559 = vunpack.c.l.b16 %v70
  %v560 = vunpack.c.h.b16 %v70
  %v561 = vunpack.c.l.b16 %v71
  %v562 = vunpack.c.h.b16 %v71
  %v563 = vunpack.c.l.b16 %v72
  %v564 = vunpack.c.h.b16 %v72
  %v565 = vunpack.c.l.b16 %v73
  %v566 = vunpack.c.l.b16 %v74
  %v567 = vunpack.c.h.b16 %v74
  %v568 = vunpack.c.l.b16 %v75
  %v569 = vunpack.c.h.b16 %v75
  %v570 = vunpack.c.l.b16 %v76
  %v571 = vunpack.c.h.b16 %v76
  %v572 = vunpack.c.l.b16 %v77
  %v573 = vunpack.c.h.b16 %v77
  %v574 = vunpack.c.l.b16 %v78
  %v575 = vunpack.c.h.b16 %v78
  %v576 = vunpack.c.l.b16 %v79
  %v577 = vunpack.c.h.b16 %v79
  %v578 = vunpack.c.l.b16 %v80
  %v579 = vunpack.c.h.b16 %v80
  %v580 = vunpack.c.l.b16 %v81
  %v581 = vunpack.c.h.b16 %v81
  %v582 = vunpack.c.l.b16 %v82
  %v583 = vunpack.c.h.b16 %v82
  %v584 = vunpack.c.l.b16 %v83
  %v585 = vunpack.c.h.b16 %v83
  %v586 = vunpack.c.l.b16 %v84
  %v587 = vunpack.c.l.b16 %v85
  %v588 = vunpack.c.h.b16 %v85
  %v589 = vunpack.c.l.b16 %v86
  %v590 = vunpack.c.h.b16 %v86
  %v591 = vunpack.c.l.b16 %v87
  %v592 = vunpack.c.h.b16 %v87
  %v593 = vunpack.c.l.b16 %v88
  %v594 = vunpack.c.h.b16 %v88
  %v595 = vunpack.c.l.b16 %v89
  %v596 = vunpack.c.h.b16 %v89
  %v597 = vunpack.c.l.b16 %v90
  %v598 = vunpack.c.h.b16 %v90
  %v599 = vunpack.c.l.b16 %v91
  %v600 = vunpack.c.h.b16 %v91
  %v601 = vunpack.c.l.b16 %v92
  %v602 = vunpack.c.h.b16 %v92
  %v603 = vunpack.c.l.b16 %v93
  %v604 = vunpack.c.h.b16 %v93
  %v605 = vunpack.c.l.b16 %v94
  %v606 = vunpack.c.h.b16 %v94
  %v607 = vunpack.c.l.b16 %v95
  %v608 = vunpack.c.l.b16 %v96
  %v609 = vunpack.c.h.b16 %v96
  %v610 = vunpack.c.l.b16 %v97
  %v611 = vunpack.c.h.b16 %v97
  %v612 = vunpack.c.l.b16 %v98
  %v613 = vunpack.c.h.b16 %v98
  %v614 = vunpack.c.l.b16 %v99
  %v615 = vunpack.c.h.b16 %v99
  %v616 = vunpack.c.l.b16 %v100
  %v617 = vunpack.c.h.b16 %v100
  %v618 = vunpack.c.l.b16 %v101
  %v619 = vunpack.c.h.b16 %v101
  %v620 = vunpack.c.l.b16 %v102
  %v621 = vunpack.c.h.b16 %v102
  %v622 = vunpack.c.l.b16 %v103
  %v623 = vunpack.c.h.b16 %v103
  %v624 = vunpack.c.l.b16 %v104
  %v625 = vunpack.c.h.b16 %v104
  %v626 = vunpack.c.l.b16 %v105
  %v627 = vunpack.c.h.b16 %v105
  %v628 = vunpack.c.l.b16 %v106
  %v629 = vunpack.c.l.b16 %v107
  %v630 = vunpack.c.h.b16 %v107
  %v631 = vunpack.c.l.b16 %v108
  %v632 = vunpack.c.h.b16 %v108
  %v633 = vunpack.c.l.b16 %v109
  %v634 = vunpack.c.h.b16 %v109
  %v635 = vunpack.c.l.b16 %v110
  %v636 = vunpack.c.h.b16 %v110
  %v637 = vunpack.c.l.b16 %v111
  %v638 = vunpack.c.h.b16 %v111
  %v639 = vunpack.c.l.b16 %v112
  %v640 = vunpack.c.h.b16 %v112
  %v641 = vunpack.c.l.b16 %v113
  %v642 = vunpack.c.h.b16 %v113
  %v643 = vunpack.c.l.b16 %v114
  %v644 = vunpack.c.h.b16 %v114
  %v645 = vunpack.c.l.b16 %v115
  %v646 = vunpack.c.h.b16 %v115
  %v647 = vunpack.c.l.b16 %v116
  %v648 = vunpack.c.h.b16 %v116
  %v649 = vunpack.c.l.b16 %v117
  %v650 = vunpack.c.l.b16 %v118
  %v651 = vunpack.c.h.b16 %v118
  %v652 = vunpack.c.l.b16 %v119
  %v653 = vunpack.c.h.b16 %v119
  %v654 = vunpack.c.l.b16 %v120
  %v655 = vunpack.c.h.b16 %v120
  %v656 = vunpack.c.l.b16 %v121
  %v657 = vunpack.c.h.b16 %v121
  %v658 = vunpack.c.l.b16 %v122
  %v659 = vunpack.c.h.b16 %v122
  %v660 = vunpack.c.l.b16 %v123
  %v661 = vunpack.c.h.b16 %v123
  %v662 = vunpack.c.l.b16 %v124
  %v663 = vunpack.c.h.b16 %v124
  %v664 = vunpack.c.l.b16 %v125
  %v665 = vunpack.c.h.b16 %v125
  %v666 = vunpack.c.l.b16 %v126
  %v667 = vunpack.c.h.b16 %v126
  %v668 = vunpack.c.l.b16 %v127
  %v669 = vunpack.c.h.b16 %v127
  %v670 = vunpack.c.l.b16 %v128
  %v671 = vunpack.c.l.b16 %v129
  %v672 = vunpack.c.h.b16 %v129
  %v673 = vunpack.c.l.b16 %v130
  %v674 = vunpack.c.h.b16 %v130
  %v675 = vunpack.c.l.b16 %v131
  %v676 = vunpack.c.h.b16 %v131
  %v677 = vunpack.c.l.b16 %v132
  %v678 = vunpack.c.h.b16 %v132
  %v679 = vunpack.c.l.b16 %v133
  %v680 = vunpack.c.h.b16 %v133
  %v681 = vunpack.c.l.b16 %v134
  %v682 = vunpack.c.h.b16 %v134
  %v683 = vunpack.c.l.b16 %v135
  %v684 = vunpack.c.h.b16 %v135
  %v685 = vunpack.c.l.b16 %v136
  %v686 = vunpack.c.h.b16 %v136
  %v687 = vunpack.c.l.b16 %v137
  %v688 = vunpack.c.h.b16 %v137
  %v689 = vunpack.c.l.b16 %v138
  %v690 = vunpack.c.h.b16 %v138
  %v691 = vunpack.c.l.b16 %v139
  %v692 = vunpack.c.l.b16 %v140
  %v693 = vunpack.c.h.b16 %v140
  %v694 = vunpack.c.l.b16 %v141
  %v695 = vunpack.c.h.b16 %v141
  %v696 = vunpack.c.l.b16 %v142
  %v697 = vunpack.c.h.b16 %v142
  %v698 = vunpack.c.l.b16 %v143
  %v699 = vunpack.c.h.b16 %v143
  %v700 = vunpack.c.l.b16 %v144
  %v701 = vunpack.c.h.b16 %v144
  %v702 = vunpack.c.l.b16 %v145
  %v703 = vunpack.c.h.b16 %v145
  %v704 = vunpack.c.l.b16 %v146
  %v705 = vunpack.c.h.b16 %v146
  %v706 = vunpack.c.l.b16 %v147
  %v707 = vunpack.c.h.b16 %v147
  %v708 = vunpack.c.l.b16 %v148
  %v709 = vunpack.c.h.b16 %v148
  %v710 = vunpack.c.l.b16 %v149
  %v711 = vunpack.c.h.b16 %v149
  %v712 = vunpack.c.l.b16 %v150
  %v713 = vunpack.c.l.b16 %v151
  %v714 = vunpack.c.h.b16 %v151
  %v715 = vunpack.c.l.b16 %v152
  %v716 = vunpack.c.h.b16 %v152
  %v717 = vunpack.c.l.b16 %v153
  %v718 = vunpack.c.h.b16 %v153
  %v719 = vunpack.c.l.b16 %v154
  %v720 = vunpack.c.h.b16 %v154
  %v721 = vunpack.c.l.b16 %v155
  %v722 = vunpack.c.h.b16 %v155
  %v723 = vunpack.c.l.b16 %v156
  %v724 = vunpack.c.h.b16 %v156
  %v725 = vunpack.c.l.b16 %v157
  %v726 = vunpack.c.h.b16 %v157
  %v727 = vunpack.c.l.b16 %v158
  %v728 = vunpack.c.h.b16 %v158
  %v729 = vunpack.c.l.b16 %v159
  %v730 = vunpack.c.h.b16 %v159
  %v731 = vunpack.c.l.b16 %v160
  %v732 = vunpack.c.h.b16 %v160
  %v733 = vunpack.c.l.b16 %v161
  %v734 = vunpack.c.l.b16 %v162
  %v735 = vunpack.c.h.b16 %v162
  %v736 = vunpack.c.l.b16 %v163
  %v737 = vunpack.c.h.b16 %v163
  %v738 = vunpack.c.l.b16 %v164
  %v739 = vunpack.c.h.b16 %v164
  %v740 = vunpack.c.l.b16 %v165
  %v741 = vunpack.c.h.b16 %v165
  %v742 = vunpack.c.l.b16 %v166
  %v743 = vunpack.c.h.b16 %v166
  %v744 = vunpack.c.l.b16 %v167
  %v745 = vunpack.c.h.b16 %v167
  %v746 = vunpack.c.l.b16 %v168
  %v747 = vunpack.c.h.b16 %v168
  %v748 = vunpack.c.l.b16 %v169
  %v749 = vunpack.c.h.b16 %v169
  %v750 = vunpack.c.l.b16 %v170
  %v751 = vunpack.c.h.b16 %v170
  %v752 = vunpack.c.l.b16 %v171
  %v753 = vunpack.c.h.b16 %v171
  %v754 = vunpack.c.l.b16 %v172
  %v755 = vunpack.c.l.b16 %v173
  %v756 = vunpack.c.h.b16 %v173
  %v757 = vunpack.c.l.b16 %v174
  %v758 = vunpack.c.h.b16 %v174
  %v759 = vunpack.c.l.b16 %v175
  %v760 = vunpack.c.h.b16 %v175
  %v761 = vunpack.c.l.b16 %v176
  %v762 = vunpack.c.h.b16 %v176
  %v763 = vunpack.c.l.b16 %v177
  %v764 = vunpack.c.h.b16 %v177
  %v765 = vunpack.c.l.b16 %v178
  %v766 = vunpack.c.h.b16 %v178
  %v767 = vunpack.c.l.b16 %v179
  %v768 = vunpack.c.h.b16 %v179
  %v769 = vunpack.c.l.b16 %v180
  %v770 = vunpack.c.h.b16 %v180
  %v771 = vunpack.c.l.b16 %v181
  %v772 = vunpack.c.h.b16 %v181
  %v773 = vunpack.c.l.b16 %v182
  %v774 = vunpack.c.h.b16 %v182
  %v775 = vunpack.c.l.b16 %v183
  %v776 = vunpack.c.l.b16 %v184
  %v777 = vunpack.c.h.b16 %v184
  %v778 = vunpack.c.l.b16 %v185
  %v779 = vunpack.c.h.b16 %v185
  %v780 = vunpack.c.l.b16 %v186
  %v781 = vunpack.c.h.b16 %v186
  %v782 = vunpack.c.l.b16 %v187
  %v783 = vunpack.c.h.b16 %v187
  %v784 = vunpack.c.l.b16 %v188
  %v785 = vunpack.c.h.b16 %v188
  %v786 = vunpack.c.l.b16 %v189
  %v787 = vunpack.c.h.b16 %v189
  %v788 = vunpack.c.l.b16 %v190
  %v789 = vunpack.c.h.b16 %v190
  %v790 = vunpack.c.l.b16 %v191
  %v791 = vunpack.c.h.b16 %v191
  %v792 = vunpack.c.l.b16 %v192
  %v793 = vunpack.c.h.b16 %v192
  %v794 = vunpack.c.l.b16 %v193
  %v795 = vunpack.c.h.b16 %v193
  %v796 = vunpack.c.l.b16 %v194
  %v797 = vunpack.c.l.b16 %v195
  %v798 = vunpack.c.h.b16 %v195
  %v799 = vunpack.c.l.b16 %v196
  %v800 = vunpack.c.h.b16 %v196
  %v801 = vunpack.c.l.b16 %v197
  %v802 = vunpack.c.h.b16 %v197
  %v803 = vunpack.c.l.b16 %v198
  %v804 = vunpack.c.h.b16 %v198
  %v805 = vunpack.c.l.b16 %v199
  %v806 = vunpack.c.h.b16 %v199
  %v807 = vunpack.c.l.b16 %v200
  %v808 = vunpack.c.h.b16 %v200
  %v809 = vunpack.c.l.b16 %v201
  %v810 = vunpack.c.h.b16 %v201
  %v811 = vunpack.c.l.b16 %v202
  %v812 = vunpack.c.h.b16 %v202
  %v813 = vunpack.c.l.b16 %v203
  %v814 = vunpack.c.h.b16 %v203
  %v815 = vunpack.c.l.b16 %v204
  %v816 = vunpack.c.h.b16 %v204
  %v817 = vunpack.c.l.b16 %v205
  %v818 = vunpack.c.l.b16 %v206
  %v819 = vunpack.c.h.b16 %v206
  %v820 = vunpack.c.l.b16 %v207
  %v821 = vunpack.c.h.b16 %v207
  %v822 = vunpack.c.l.b16 %v208
  %v823 = vunpack.c.h.b16 %v208
  %v824 = vunpack.c.l.b16 %v209
  %v825 = vunpack.c.h.b16 %v209
  %v826 = vunpack.c.l.b16 %v210
  %v827 = vunpack.c.h.b16 %v210
  %v828 = vunpack.c.l.b16 %v211
  %v829 = vunpack.c.h.b16 %v211
  %v830 = vunpack.c.l.b16 %v212
  %v831 = vunpack.c.h.b16 %v212
  %v832 = vunpack.c.l.b16 %v213
  %v833 = vunpack.c.h.b16 %v213
  %v834 = vunpack.c.l.b16 %v214
  %v835 = vunpack.c.h.b16 %v214
  %v836 = vunpack.c.l.b16 %v215
  %v837 = vunpack.c.h.b16 %v215
  %v838 = vunpack.c.l.b16 %v216
  %v839 = vunpack.c.l.b16 %v217
  %v840 = vunpack.c.h.b16 %v217
  %v841 = vunpack.c.l.b16 %v218
  %v842 = vunpack.c.h.b16 %v218
  %v843 = vunpack.c.l.b16 %v219
  %v844 = vunpack.c.h.b16 %v219
  %v845 = vunpack.c.l.b16 %v220
  %v846 = vunpack.c.h.b16 %v220
  %v847 = vunpack.c.l.b16 %v221
  %v848 = vunpack.c.h.b16 %v221
  %v849 = vunpack.c.l.b16 %v222
  %v850 = vunpack.c.h.b16 %v222
  %v851 = vunpack.c.l.b16 %v223
  %v852 = vunpack.c.h.b16 %v223
  %v853 = vunpack.c.l.b16 %v224
  %v854 = vunpack.c.h.b16 %v224
  %v855 = vunpack.c.l.b16 %v225
  %v856 = vunpack.c.h.b16 %v225
  %v857 = vunpack.c.l.b16 %v226
  %v858 = vunpack.c.h.b16 %v226
  %v859 = vunpack.c.l.b16 %v227
  %v860 = vpack.c.b16 %v482, %v461
  %v861 = vpack.c.b16 %v483, %v462
  %v862 = vpack.c.b16 %v484, %v463
  %v863 = vpack.c.b16 %v485, %v464
  %v864 = vpack.c.b16 %v486, %v465
  %v865 = vpack.c.b16 %v487, %v466
  %v866 = vpack.c.b16 %v488, %v467
  %v867 = vpack.c.b16 %v489, %v468
  %v868 = vpack.c.b16 %v490, %v469
  %v869 = vpack.c.b16 %v491, %v470
  %v870 = vpack.c.b16 %v492, %v471
  %v871 = vpack.c.b16 %v493, %v472
  %v872 = vpack.c.b16 %v494, %v473
  %v873 = vpack.c.b16 %v495, %v474
  %v874 = vpack.c.b16 %v496, %v475
  %v875 = vpack.c.b16 %v497, %v476
  %v876 = vpack.c.b16 %v498, %v477
  %v877 = vpack.c.b16 %v499, %v478
  %v878 = vpack.c.b16 %v500, %v479
  %v879 = vpack.c.b16 %v501, %v480
  %v880 = vpack.c.b16 %v502, %v481
  %v881 = vpack.c.b16 %v524, %v503
  %v882 = vpack.c.b16 %v525, %v504
  %v883 = vpack.c.b16 %v526, %v505
  %v884 = vpack.c.b16 %v527, %v506
  %v885 = vpack.c.b16 %v528, %v507
  %v886 = vpack.c.b16 %v529, %v508
  %v887 = vpack.c.b16 %v530, %v509
  %v888 = vpack.c.b16 %v531, %v510
  %v889 = vpack.c.b16 %v532, %v511
  %v890 = vpack.c.b16 %v533, %v512
  %v891 = vpack.c.b16 %v534, %v513
  %v892 = vpack.c.b16 %v535, %v514
  %v893 = vpack.c.b16 %v536, %v515
  %v894 = vpack.c.b16 %v537, %v516
  %v895 = vpack.c.b16 %v538, %v517
  %v896 = vpack.c.b16 %v539, %v518
  %v897 = vpack.c.b16 %v540, %v519
  %v898 = vpack.c.b16 %v541, %v520
  %v899 = vpack.c.b16 %v542, %v521
  %v900 = vpack.c.b16 %v543, %v522
  %v901 = vpack.c.b16 %v544, %v523
  %v902 = vpack.c.b16 %v566, %v545
  %v903 = vpack.c.b16 %v567, %v546
  %v904 = vpack.c.b16 %v568, %v547
  %v905 = vpack.c.b16 %v569, %v548
  %v906 = vpack.c.b16 %v570, %v549
  %v907 = vpack.c.b16 %v571, %v550
  %v908 = vpack.c.b16 %v572, %v551
  %v909 = vpack.c.b16 %v573, %v552
  %v910 = vpack.c.b16 %v574, %v553
  %v911 = vpack.c.b16 %v575, %v554
  %v912 = vpack.c.b16 %v576, %v555
  %v913 = vpack.c.b16 %v577, %v556
  %v914 = vpack.c.b16 %v578, %v557
  %v915 = vpack.c.b16 %v579, %v558
  %v916 = vpack.c.b16 %v580, %v559
  %v917 = vpack.c.b16 %v581, %v560
  %v918 = vpack.c.b16 %v582, %v561
  %v919 = vpack.c.b16 %v583, %v562
  %v920 = vpack.c.b16 %v584, %v563
  %v921 = vpack.c.b16 %v585, %v564
  %v922 = vpack.c.b16 %v586, %v565
  %v923 = vpack.c.b16 %v608, %v587
  %v924 = vpack.c.b16 %v609, %v588
  %v925 = vpack.c.b16 %v610, %v589
  %v926 = vpack.c.b16 %v611, %v590
  %v927 = vpack.c.b16 %v612, %v591
  %v928 = vpack.c.b16 %v613, %v592
  %v929 = vpack.c.b16 %v614, %v593
  %v930 = vpack.c.b16 %v615, %v594
  %v931 = vpack.c.b16 %v616, %v595
  %v932 = vpack.c.b16 %v617, %v596
  %v933 = vpack.c.b16 %v618, %v597
  %v934 = vpack.c.b16 %v619, %v598
  %v935 = vpack.c.b16 %v620, %v599
  %v936 = vpack.c.b16 %v621, %v600
  %v937 = vpack.c.b16 %v622, %v601
  %v938 = vpack.c.b16 %v623, %v602
  %v939 = vpack.c.b16 %v624, %v603
  %v940 = vpack.c.b16 %v625, %v604
  %v941 = vpack.c.b16 %v626, %v605
  %v942 = vpack.c.b16 %v627, %v606
  %v943 = vpack.c.b16 %v628, %v607
  %v944 = vpack.c.b16 %v650, %v629
  %v945 = vpack.c.b16 %v651, %v630
  %v946 = vpack.c.b16 %v652, %v631
  %v947 = vpack.c.b16 %v653, %v632
  %v948 = vpack.c.b16 %v654, %v633
  %v949 = vpack.c.b16 %v655, %v634
  %v950 = vpack.c.b16 %v656, %v635
  %v951 = vpack.c.b16 %v657, %v636
  %v952 = vpack.c.b16 %v658, %v637
  %v953 = vpack.c.b16 %v659, %v638
  %v954 = vpack.c.b16 %v660, %v639
  %v955 = vpack.c.b16 %v661, %v640
  %v956 = vpack.c.b16 %v662, %v641
  %v957 = vpack.c.b16 %v663, %v642
  %v958 = vpack.c.b16 %v664, %v643
  %v959 = vpack.c.b16 %v665, %v644
  %v960 = vpack.c.b16 %v666, %v645
  %v961 = vpack.c.b16 %v667, %v646
  %v962 = vpack.c.b16 %v668, %v647
  %v963 = vpack.c.b16 %v669, %v648
  %v964 = vpack.c.b16 %v670, %v649
  %v965 = vpack.c.b16 %v692, %v671
  %v966 = vpack.c.b16 %v693, %v672
  %v967 = vpack.c.b16 %v694, %v673
  %v968 = vpack.c.b16 %v695, %v674
  %v969 = vpack.c.b16 %v696, %v675
  %v970 = vpack.c.b16 %v697, %v676
  %v971 = vpack.c.b16 %v698, %v677
  %v972 = vpack.c.b16 %v699, %v678
  %v973 = vpack.c.b16 %v700, %v679
  %v974 = vpack.c.b16 %v701, %v680
  %v975 = vpack.c.b16 %v702, %v681
  %v976 = vpack.c.b16 %v703, %v682
  %v977 = vpack.c.b16 %v704, %v683
  %v978 = vpack.c.b16 %v705, %v684
  %v979 = vpack.c.b16 %v706, %v685
  %v980 = vpack.c.b16 %v707, %v686
  %v981 = vpack.c.b16 %v708, %v687
  %v982 = vpack.c.b16 %v709, %v688
  %v983 = vpack.c.b16 %v710, %v689
  %v984 = vpack.c.b16 %v711, %v690
  %v985 = vpack.c.b16 %v712, %v691
  %v986 = vpack.c.b16 %v734, %v713
  %v987 = vpack.c.b16 %v735, %v714
  %v988 = vpack.c.b16 %v736, %v715
  %v989 = vpack.c.b16 %v737, %v716
  %v990 = vpack.c.b16 %v738, %v717
  %v991 = vpack.c.b16 %v739, %v718
  %v992 = vpack.c.b16 %v740, %v719
  %v993 = vpack.c.b16 %v741, %v720
  %v994 = vpack.c.b16 %v742, %v721
  %v995 = vpack.c.b16 %v743, %v722
  %v996 = vpack.c.b16 %v744, %v723
  %v997 = vpack.c.b16 %v745, %v724
  %v998 = vpack.c.b16 %v746, %v725
  %v999 = vpack.c.b16 %v747, %v726
  %v1000 = vpack.c.b16 %v748, %v727
  %v1001 = vpack.c.b16 %v749, %v728
  %v1002 = vpack.c.b16 %v750, %v729
  %v1003 = vpack.c.b16 %v751, %v730
  %v1004 = vpack.c.b16 %v752, %v731
  %v1005 = vpack.c.b16 %v753, %v732
  %v1006 = vpack.c.b16 %v754, %v733
  %v1007 = vpack.c.b16 %v776, %v755
  %v1008 = vpack.c.b16 %v777, %v756
  %v1009 = vpack.c.b16 %v778, %v757
  %v1010 = vpack.c.b16 %v779, %v758
  %v1011 = vpack.c.b16 %v780, %v759
  %v1012 = vpack.c.b16 %v781, %v760
  %v1013 = vpack.c.b16 %v782, %v761
  %v1014 = vpack.c.b16 %v783, %v762
  %v1015 = vpack.c.b16 %v784, %v763
  %v1016 = vpack.c.b16 %v785, %v764
  %v1017 = vpack.c.b16 %v786, %v765
  %v1018 = vpack.c.b16 %v787, %v766
  %v1019 = vpack.c.b16 %v788, %v767
  %v1020 = vpack.c.b16 %v789, %v768
  %v1021 = vpack.c.b16 %v790, %v769
  %v1022 = vpack.c.b16 %v791, %v770
  %v1023 = vpack.c.b16 %v792, %v771
  %v1024 = vpack.c.b16 %v793, %v772
  %v1025 = vpack.c.b16 %v794, %v773
  %v1026 = vpack.c.b16 %v795, %v774
  %v1027 = vpack.c.b16 %v796, %v775
  %v1028 = vpack.c.b16 %v818, %v797
  %v1029 = vpack.c.b16 %v819, %v798
  %v1030 = vpack.c.b16 %v820, %v799
  %v1031 = vpack.c.b16 %v821, %v800
  %v1032 = vpack.c.b16 %v822, %v801
  %v1033 = vpack.c.b16 %v823, %v802
  %v1034 = vpack.c.b16 %v824, %v803
  %v1035 = vpack.c.b16 %v825, %v804
  %v1036 = vpack.c.b16 %v826, %v805
  %v1037 = vpack.c.b16 %v827, %v806
  %v1038 = vpack.c.b16 %v828, %v807
  %v1039 = vpack.c.b16 %v829, %v808
  %v1040 = vpack.c.b16 %v830, %v809
  %v1041 = vpack.c.b16 %v831, %v810
  %v1042 = vpack.c.b16 %v832, %v811
  %v1043 = vpack.c.b16 %v833, %v812
  %v1044 = vpack.c.b16 %v834, %v813
  %v1045 = vpack.c.b16 %v835, %v814
  %v1046 = vpack.c.b16 %v836, %v815
  %v1047 = vpack.c.b16 %v837, %v816
  %v1048 = vpack.c.b16 %v838, %v817
  %v1049 = vpack.c.b16 %v839, %v839
  %v1050 = vpack.c.b16 %v840, %v840
  %v1051 = vpack.c.b16 %v841, %v841
  %v1052 = vpack.c.b16 %v842, %v842
  %v1053 = vpack.c.b16 %v843, %v843
  %v1054 = vpack.c.b16 %v844, %v844
  %v1055 = vpack.c.b16 %v845, %v845
  %v1056 = vpack.c.b16 %v846, %v846
  %v1057 = vpack.c.b16 %v847, %v847
  %v1058 = vpack.c.b16 %v848, %v848
  %v1059 = vpack.c.b16 %v849, %v849
  %v1060 = vpack.c.b16 %v850, %v850
  %v1061 = vpack.c.b16 %v851, %v851
  %v1062 = vpack.c.b16 %v852, %v852
  %v1063 = vpack.c.b16 %v853, %v853
  %v1064 = vpack.c.b16 %v854, %v854
  %v1065 = vpack.c.b16 %v855, %v855
  %v1066 = vpack.c.b16 %v856, %v856
  %v1067 = vpack.c.b16 %v857, %v857
  %v1068 = vpack.c.b16 %v858, %v858
  %v1069 = vpack.c.b16 %v859, %v859
  %vm1259 = vcmask 138240
  %v1261 = vsel %vm1259, %v250, 0
  %vm1263 = vcmask 1040384
  %v1264 = vsel 0, 4294967295, 65535
  %v1265 = vsel %vm1263, %v1264, 0
  %v1267 = vand.u32 %v1049, %v1265
  %v1270 = vand.u32 %v1050, %v1265
  %v1273 = vand.u32 %v1051, %v1265
  %v1276 = vand.u32 %v1052, %v1265
  %v1279 = vand.u32 %v1053, %v1265
  %v1282 = vand.u32 %v1054, %v1265
  %v1285 = vand.u32 %v1055, %v1265
  %v1288 = vand.u32 %v1056, %v1265
  %v1291 = vand.u32 %v1057, %v1265
  %v1294 = vand.u32 %v1058, %v1265
  %v1297 = vand.u32 %v1059, %v1265
  %v1300 = vand.u32 %v1060, %v1265
  %v1303 = vand.u32 %v1061, %v1265
  %v1306 = vand.u32 %v1062, %v1265
  %v1309 = vand.u32 %v1063, %v1265
  %v1312 = vand.u32 %v1064, %v1265
  %v1315 = vand.u32 %v1065, %v1265
  %v1318 = vand.u32 %v1066, %v1265
  %v1321 = vand.u32 %v1067, %v1265
  %v1324 = vand.u32 %v1068, %v1265
  %v1327 = vand.u32 %v1069, %v1265
  %1329 = vmatprep.subr.bf16.mxu0 %v861
  %1330 = vmatpush1.bf16.msra.mxu0 %v860
  %1331 = vmatprep.subr.bf16.mxu0 %v882
  %1332 = vmatpush1.bf16.msra.mxu0 %v881
  %1333 = vmatprep.subr.bf16.mxu0 %v903
  %1334 = vmatpush1.bf16.msra.mxu0 %v902
  %1335 = vmatprep.subr.bf16.mxu0 %v924
  %1336 = vmatpush1.bf16.msra.mxu0 %v923
  %1337 = vmatprep.subr.bf16.mxu0 %v945
  %1338 = vmatpush1.bf16.msra.mxu0 %v944
  %1339 = vmatprep.subr.bf16.mxu0 %v966
  %1340 = vmatpush1.bf16.msra.mxu0 %v965
  %1341 = vmatprep.subr.bf16.mxu0 %v987
  %1342 = vmatpush1.bf16.msra.mxu0 %v986
  %1343 = vmatprep.subr.bf16.mxu0 %v1008
  %1344 = vmatpush1.bf16.msra.mxu0 %v1007
  %1345 = vmatprep.subr.bf16.mxu0 %v1029
  %1346 = vmatpush1.bf16.msra.mxu0 %v1028
  %1347 = vmatprep.subr.bf16.mxu0 %v1270
  %1348 = vmatpush1.bf16.msra.mxu0 %v1267
  %1349 = vmatprep.subr.bf16.mxu0 0
  %1350 = vmatpush1.bf16.msra.mxu0 0
  %1351 = vmatprep.subr.bf16.mxu0 0
  %1352 = vmatpush1.bf16.msra.mxu0 0
  %1353 = vmatprep.subr.bf16.mxu0 0
  %1354 = vmatpush1.bf16.msra.mxu0 0
  %1355 = vmatprep.subr.bf16.mxu0 0
  %1356 = vmatpush1.bf16.msra.mxu0 0
  %1357 = vmatprep.subr.bf16.mxu0 0
  %1358 = vmatpush1.bf16.msra.mxu0 0
  %1359 = vmatprep.subr.bf16.mxu0 0
  %1360 = vmatpush1.bf16.msra.mxu0 0
  %1361 = vmatprep.mubr.bf16.mxu0 %v1261
  %1362 = vmatmul.mubr.bf16.gmra.mrb[0].mxu0 %v243
  %v1363 = vpop.f32.mrb[0].mxu0
  %v1364 = vadd.f32 0.0, %v1363
  %v1365 = vpop.f32.mrb[0].mxu0
  %v1366 = vadd.f32 0.0, %v1365
  %v1367 = vpop.f32.mrb[0].mxu0
  %v1368 = vpop.f32.mrb[0].mxu0
  %1369 = vdwg.mxu0
  %1370 = vmatprep.subr.bf16.mxu0 %v863
  %1371 = vmatpush1.bf16.msra.mxu0 %v862
  %1372 = vmatprep.subr.bf16.mxu0 %v884
  %1373 = vmatpush1.bf16.msra.mxu0 %v883
  %1374 = vmatprep.subr.bf16.mxu0 %v905
  %1375 = vmatpush1.bf16.msra.mxu0 %v904
  %1376 = vmatprep.subr.bf16.mxu0 %v926
  %1377 = vmatpush1.bf16.msra.mxu0 %v925
  %1378 = vmatprep.subr.bf16.mxu0 %v947
  %1379 = vmatpush1.bf16.msra.mxu0 %v946
  %1380 = vmatprep.subr.bf16.mxu0 %v968
  %1381 = vmatpush1.bf16.msra.mxu0 %v967
  %1382 = vmatprep.subr.bf16.mxu0 %v989
  %1383 = vmatpush1.bf16.msra.mxu0 %v988
  %1384 = vmatprep.subr.bf16.mxu0 %v1010
  %1385 = vmatpush1.bf16.msra.mxu0 %v1009
  %1386 = vmatprep.subr.bf16.mxu0 %v1031
  %1387 = vmatpush1.bf16.msra.mxu0 %v1030
  %1388 = vmatprep.subr.bf16.mxu0 %v1276
  %1389 = vmatpush1.bf16.msra.mxu0 %v1273
  %1390 = vmatprep.subr.bf16.mxu0 0
  %1391 = vmatpush1.bf16.msra.mxu0 0
  %1392 = vmatprep.subr.bf16.mxu0 0
  %1393 = vmatpush1.bf16.msra.mxu0 0
  %1394 = vmatprep.subr.bf16.mxu0 0
  %1395 = vmatpush1.bf16.msra.mxu0 0
  %1396 = vmatprep.subr.bf16.mxu0 0
  %1397 = vmatpush1.bf16.msra.mxu0 0
  %1398 = vmatprep.subr.bf16.mxu0 0
  %1399 = vmatpush1.bf16.msra.mxu0 0
  %1400 = vmatprep.subr.bf16.mxu0 0
  %1401 = vmatpush1.bf16.msra.mxu0 0
  %1402 = vmatprep.mubr.bf16.mxu0 %v1261
  %1403 = vmatmul.mubr.bf16.gmra.mrb[0].mxu0 %v243
  %v1404 = vpop.f32.mrb[0].mxu0
  %v1405 = vadd.f32 0.0, %v1404
  %v1406 = vpop.f32.mrb[0].mxu0
  %v1407 = vadd.f32 0.0, %v1406
  %v1408 = vpop.f32.mrb[0].mxu0
  %v1409 = vpop.f32.mrb[0].mxu0
  %1410 = vdwg.mxu0
  %1411 = vmatprep.subr.bf16.mxu0 %v865
  %1412 = vmatpush1.bf16.msra.mxu0 %v864
  %1413 = vmatprep.subr.bf16.mxu0 %v886
  %1414 = vmatpush1.bf16.msra.mxu0 %v885
  %1415 = vmatprep.subr.bf16.mxu0 %v907
  %1416 = vmatpush1.bf16.msra.mxu0 %v906
  %1417 = vmatprep.subr.bf16.mxu0 %v928
  %1418 = vmatpush1.bf16.msra.mxu0 %v927
  %1419 = vmatprep.subr.bf16.mxu0 %v949
  %1420 = vmatpush1.bf16.msra.mxu0 %v948
  %1421 = vmatprep.subr.bf16.mxu0 %v970
  %1422 = vmatpush1.bf16.msra.mxu0 %v969
  %1423 = vmatprep.subr.bf16.mxu0 %v991
  %1424 = vmatpush1.bf16.msra.mxu0 %v990
  %1425 = vmatprep.subr.bf16.mxu0 %v1012
  %1426 = vmatpush1.bf16.msra.mxu0 %v1011
  %1427 = vmatprep.subr.bf16.mxu0 %v1033
  %1428 = vmatpush1.bf16.msra.mxu0 %v1032
  %1429 = vmatprep.subr.bf16.mxu0 %v1282
  %1430 = vmatpush1.bf16.msra.mxu0 %v1279
  %1431 = vmatprep.subr.bf16.mxu0 0
  %1432 = vmatpush1.bf16.msra.mxu0 0
  %1433 = vmatprep.subr.bf16.mxu0 0
  %1434 = vmatpush1.bf16.msra.mxu0 0
  %1435 = vmatprep.subr.bf16.mxu0 0
  %1436 = vmatpush1.bf16.msra.mxu0 0
  %1437 = vmatprep.subr.bf16.mxu0 0
  %1438 = vmatpush1.bf16.msra.mxu0 0
  %1439 = vmatprep.subr.bf16.mxu0 0
  %1440 = vmatpush1.bf16.msra.mxu0 0
  %1441 = vmatprep.subr.bf16.mxu0 0
  %1442 = vmatpush1.bf16.msra.mxu0 0
  %1443 = vmatprep.mubr.bf16.mxu0 %v1261
  %1444 = vmatmul.mubr.bf16.gmra.mrb[0].mxu0 %v243
  %v1445 = vpop.f32.mrb[0].mxu0
  %v1446 = vadd.f32 0.0, %v1445
  %v1447 = vpop.f32.mrb[0].mxu0
  %v1448 = vadd.f32 0.0, %v1447
  %v1449 = vpop.f32.mrb[0].mxu0
  %v1450 = vpop.f32.mrb[0].mxu0
  %1451 = vdwg.mxu0
  %1452 = vmatprep.subr.bf16.mxu0 %v867
  %1453 = vmatpush1.bf16.msra.mxu0 %v866
  %1454 = vmatprep.subr.bf16.mxu0 %v888
  %1455 = vmatpush1.bf16.msra.mxu0 %v887
  %1456 = vmatprep.subr.bf16.mxu0 %v909
  %1457 = vmatpush1.bf16.msra.mxu0 %v908
  %1458 = vmatprep.subr.bf16.mxu0 %v930
  %1459 = vmatpush1.bf16.msra.mxu0 %v929
  %1460 = vmatprep.subr.bf16.mxu0 %v951
  %1461 = vmatpush1.bf16.msra.mxu0 %v950
  %1462 = vmatprep.subr.bf16.mxu0 %v972
  %1463 = vmatpush1.bf16.msra.mxu0 %v971
  %1464 = vmatprep.subr.bf16.mxu0 %v993
  %1465 = vmatpush1.bf16.msra.mxu0 %v992
  %1466 = vmatprep.subr.bf16.mxu0 %v1014
  %1467 = vmatpush1.bf16.msra.mxu0 %v1013
  %1468 = vmatprep.subr.bf16.mxu0 %v1035
  %1469 = vmatpush1.bf16.msra.mxu0 %v1034
  %1470 = vmatprep.subr.bf16.mxu0 %v1288
  %1471 = vmatpush1.bf16.msra.mxu0 %v1285
  %1472 = vmatprep.subr.bf16.mxu0 0
  %1473 = vmatpush1.bf16.msra.mxu0 0
  %1474 = vmatprep.subr.bf16.mxu0 0
  %1475 = vmatpush1.bf16.msra.mxu0 0
  %1476 = vmatprep.subr.bf16.mxu0 0
  %1477 = vmatpush1.bf16.msra.mxu0 0
  %1478 = vmatprep.subr.bf16.mxu0 0
  %1479 = vmatpush1.bf16.msra.mxu0 0
  %1480 = vmatprep.subr.bf16.mxu0 0
  %1481 = vmatpush1.bf16.msra.mxu0 0
  %1482 = vmatprep.subr.bf16.mxu0 0
  %1483 = vmatpush1.bf16.msra.mxu0 0
  %1484 = vmatprep.mubr.bf16.mxu0 %v1261
  %1485 = vmatmul.mubr.bf16.gmra.mrb[0].mxu0 %v243
  %v1486 = vpop.f32.mrb[0].mxu0
  %v1487 = vadd.f32 0.0, %v1486
  %v1488 = vpop.f32.mrb[0].mxu0
  %v1489 = vadd.f32 0.0, %v1488
  %v1490 = vpop.f32.mrb[0].mxu0
  %v1491 = vpop.f32.mrb[0].mxu0
  %1492 = vdwg.mxu0
  %1493 = vmatprep.subr.bf16.mxu0 %v869
  %1494 = vmatpush1.bf16.msra.mxu0 %v868
  %1495 = vmatprep.subr.bf16.mxu0 %v890
  %1496 = vmatpush1.bf16.msra.mxu0 %v889
  %1497 = vmatprep.subr.bf16.mxu0 %v911
  %1498 = vmatpush1.bf16.msra.mxu0 %v910
  %1499 = vmatprep.subr.bf16.mxu0 %v932
  %1500 = vmatpush1.bf16.msra.mxu0 %v931
  %1501 = vmatprep.subr.bf16.mxu0 %v953
  %1502 = vmatpush1.bf16.msra.mxu0 %v952
  %1503 = vmatprep.subr.bf16.mxu0 %v974
  %1504 = vmatpush1.bf16.msra.mxu0 %v973
  %1505 = vmatprep.subr.bf16.mxu0 %v995
  %1506 = vmatpush1.bf16.msra.mxu0 %v994
  %1507 = vmatprep.subr.bf16.mxu0 %v1016
  %1508 = vmatpush1.bf16.msra.mxu0 %v1015
  %1509 = vmatprep.subr.bf16.mxu0 %v1037
  %1510 = vmatpush1.bf16.msra.mxu0 %v1036
  %1511 = vmatprep.subr.bf16.mxu0 %v1294
  %1512 = vmatpush1.bf16.msra.mxu0 %v1291
  %1513 = vmatprep.subr.bf16.mxu0 0
  %1514 = vmatpush1.bf16.msra.mxu0 0
  %1515 = vmatprep.subr.bf16.mxu0 0
  %1516 = vmatpush1.bf16.msra.mxu0 0
  %1517 = vmatprep.subr.bf16.mxu0 0
  %1518 = vmatpush1.bf16.msra.mxu0 0
  %1519 = vmatprep.subr.bf16.mxu0 0
  %1520 = vmatpush1.bf16.msra.mxu0 0
  %1521 = vmatprep.subr.bf16.mxu0 0
  %1522 = vmatpush1.bf16.msra.mxu0 0
  %1523 = vmatprep.subr.bf16.mxu0 0
  %1524 = vmatpush1.bf16.msra.mxu0 0
  %1525 = vmatprep.mubr.bf16.mxu0 %v1261
  %1526 = vmatmul.mubr.bf16.gmra.mrb[0].mxu0 %v243
  %v1527 = vpop.f32.mrb[0].mxu0
  %v1528 = vadd.f32 0.0, %v1527
  %v1529 = vpop.f32.mrb[0].mxu0
  %v1530 = vadd.f32 0.0, %v1529
  %v1531 = vpop.f32.mrb[0].mxu0
  %v1532 = vpop.f32.mrb[0].mxu0
  %1533 = vdwg.mxu0
  %1534 = vmatprep.subr.bf16.mxu0 %v871
  %1535 = vmatpush1.bf16.msra.mxu0 %v870
  %1536 = vmatprep.subr.bf16.mxu0 %v892
  %1537 = vmatpush1.bf16.msra.mxu0 %v891
  %1538 = vmatprep.subr.bf16.mxu0 %v913
  %1539 = vmatpush1.bf16.msra.mxu0 %v912
  %1540 = vmatprep.subr.bf16.mxu0 %v934
  %1541 = vmatpush1.bf16.msra.mxu0 %v933
  %1542 = vmatprep.subr.bf16.mxu0 %v955
  %1543 = vmatpush1.bf16.msra.mxu0 %v954
  %1544 = vmatprep.subr.bf16.mxu0 %v976
  %1545 = vmatpush1.bf16.msra.mxu0 %v975
  %1546 = vmatprep.subr.bf16.mxu0 %v997
  %1547 = vmatpush1.bf16.msra.mxu0 %v996
  %1548 = vmatprep.subr.bf16.mxu0 %v1018
  %1549 = vmatpush1.bf16.msra.mxu0 %v1017
  %1550 = vmatprep.subr.bf16.mxu0 %v1039
  %1551 = vmatpush1.bf16.msra.mxu0 %v1038
  %1552 = vmatprep.subr.bf16.mxu0 %v1300
  %1553 = vmatpush1.bf16.msra.mxu0 %v1297
  %1554 = vmatprep.subr.bf16.mxu0 0
  %1555 = vmatpush1.bf16.msra.mxu0 0
  %1556 = vmatprep.subr.bf16.mxu0 0
  %1557 = vmatpush1.bf16.msra.mxu0 0
  %1558 = vmatprep.subr.bf16.mxu0 0
  %1559 = vmatpush1.bf16.msra.mxu0 0
  %1560 = vmatprep.subr.bf16.mxu0 0
  %1561 = vmatpush1.bf16.msra.mxu0 0
  %1562 = vmatprep.subr.bf16.mxu0 0
  %1563 = vmatpush1.bf16.msra.mxu0 0
  %1564 = vmatprep.subr.bf16.mxu0 0
  %1565 = vmatpush1.bf16.msra.mxu0 0
  %1566 = vmatprep.mubr.bf16.mxu0 %v1261
  %1567 = vmatmul.mubr.bf16.gmra.mrb[0].mxu0 %v243
  %v1568 = vpop.f32.mrb[0].mxu0
  %v1569 = vadd.f32 0.0, %v1568
  %v1570 = vpop.f32.mrb[0].mxu0
  %v1571 = vadd.f32 0.0, %v1570
  %v1572 = vpop.f32.mrb[0].mxu0
  %v1573 = vpop.f32.mrb[0].mxu0
  %1574 = vdwg.mxu0
  %1575 = vmatprep.subr.bf16.mxu0 %v873
  %1576 = vmatpush1.bf16.msra.mxu0 %v872
  %1577 = vmatprep.subr.bf16.mxu0 %v894
  %1578 = vmatpush1.bf16.msra.mxu0 %v893
  %1579 = vmatprep.subr.bf16.mxu0 %v915
  %1580 = vmatpush1.bf16.msra.mxu0 %v914
  %1581 = vmatprep.subr.bf16.mxu0 %v936
  %1582 = vmatpush1.bf16.msra.mxu0 %v935
  %1583 = vmatprep.subr.bf16.mxu0 %v957
  %1584 = vmatpush1.bf16.msra.mxu0 %v956
  %1585 = vmatprep.subr.bf16.mxu0 %v978
  %1586 = vmatpush1.bf16.msra.mxu0 %v977
  %1587 = vmatprep.subr.bf16.mxu0 %v999
  %1588 = vmatpush1.bf16.msra.mxu0 %v998
  %1589 = vmatprep.subr.bf16.mxu0 %v1020
  %1590 = vmatpush1.bf16.msra.mxu0 %v1019
  %1591 = vmatprep.subr.bf16.mxu0 %v1041
  %1592 = vmatpush1.bf16.msra.mxu0 %v1040
  %1593 = vmatprep.subr.bf16.mxu0 %v1306
  %1594 = vmatpush1.bf16.msra.mxu0 %v1303
  %1595 = vmatprep.subr.bf16.mxu0 0
  %1596 = vmatpush1.bf16.msra.mxu0 0
  %1597 = vmatprep.subr.bf16.mxu0 0
  %1598 = vmatpush1.bf16.msra.mxu0 0
  %1599 = vmatprep.subr.bf16.mxu0 0
  %1600 = vmatpush1.bf16.msra.mxu0 0
  %1601 = vmatprep.subr.bf16.mxu0 0
  %1602 = vmatpush1.bf16.msra.mxu0 0
  %1603 = vmatprep.subr.bf16.mxu0 0
  %1604 = vmatpush1.bf16.msra.mxu0 0
  %1605 = vmatprep.subr.bf16.mxu0 0
  %1606 = vmatpush1.bf16.msra.mxu0 0
  %1607 = vmatprep.mubr.bf16.mxu0 %v1261
  %1608 = vmatmul.mubr.bf16.gmra.mrb[0].mxu0 %v243
  %v1609 = vpop.f32.mrb[0].mxu0
  %v1610 = vadd.f32 0.0, %v1609
  %v1611 = vpop.f32.mrb[0].mxu0
  %v1612 = vadd.f32 0.0, %v1611
  %v1613 = vpop.f32.mrb[0].mxu0
  %v1614 = vpop.f32.mrb[0].mxu0
  %1615 = vdwg.mxu0
  %1616 = vmatprep.subr.bf16.mxu0 %v875
  %1617 = vmatpush1.bf16.msra.mxu0 %v874
  %1618 = vmatprep.subr.bf16.mxu0 %v896
  %1619 = vmatpush1.bf16.msra.mxu0 %v895
  %1620 = vmatprep.subr.bf16.mxu0 %v917
  %1621 = vmatpush1.bf16.msra.mxu0 %v916
  %1622 = vmatprep.subr.bf16.mxu0 %v938
  %1623 = vmatpush1.bf16.msra.mxu0 %v937
  %1624 = vmatprep.subr.bf16.mxu0 %v959
  %1625 = vmatpush1.bf16.msra.mxu0 %v958
  %1626 = vmatprep.subr.bf16.mxu0 %v980
  %1627 = vmatpush1.bf16.msra.mxu0 %v979
  %1628 = vmatprep.subr.bf16.mxu0 %v1001
  %1629 = vmatpush1.bf16.msra.mxu0 %v1000
  %1630 = vmatprep.subr.bf16.mxu0 %v1022
  %1631 = vmatpush1.bf16.msra.mxu0 %v1021
  %1632 = vmatprep.subr.bf16.mxu0 %v1043
  %1633 = vmatpush1.bf16.msra.mxu0 %v1042
  %1634 = vmatprep.subr.bf16.mxu0 %v1312
  %1635 = vmatpush1.bf16.msra.mxu0 %v1309
  %1636 = vmatprep.subr.bf16.mxu0 0
  %1637 = vmatpush1.bf16.msra.mxu0 0
  %1638 = vmatprep.subr.bf16.mxu0 0
  %1639 = vmatpush1.bf16.msra.mxu0 0
  %1640 = vmatprep.subr.bf16.mxu0 0
  %1641 = vmatpush1.bf16.msra.mxu0 0
  %1642 = vmatprep.subr.bf16.mxu0 0
  %1643 = vmatpush1.bf16.msra.mxu0 0
  %1644 = vmatprep.subr.bf16.mxu0 0
  %1645 = vmatpush1.bf16.msra.mxu0 0
  %1646 = vmatprep.subr.bf16.mxu0 0
  %1647 = vmatpush1.bf16.msra.mxu0 0
  %1648 = vmatprep.mubr.bf16.mxu0 %v1261
  %1649 = vmatmul.mubr.bf16.gmra.mrb[0].mxu0 %v243
  %v1650 = vpop.f32.mrb[0].mxu0
  %v1651 = vadd.f32 0.0, %v1650
  %v1652 = vpop.f32.mrb[0].mxu0
  %v1653 = vadd.f32 0.0, %v1652
  %v1654 = vpop.f32.mrb[0].mxu0
  %v1655 = vpop.f32.mrb[0].mxu0
  %1656 = vdwg.mxu0
  %1657 = vmatprep.subr.bf16.mxu0 %v877
  %1658 = vmatpush1.bf16.msra.mxu0 %v876
  %1659 = vmatprep.subr.bf16.mxu0 %v898
  %1660 = vmatpush1.bf16.msra.mxu0 %v897
  %1661 = vmatprep.subr.bf16.mxu0 %v919
  %1662 = vmatpush1.bf16.msra.mxu0 %v918
  %1663 = vmatprep.subr.bf16.mxu0 %v940
  %1664 = vmatpush1.bf16.msra.mxu0 %v939
  %1665 = vmatprep.subr.bf16.mxu0 %v961
  %1666 = vmatpush1.bf16.msra.mxu0 %v960
  %1667 = vmatprep.subr.bf16.mxu0 %v982
  %1668 = vmatpush1.bf16.msra.mxu0 %v981
  %1669 = vmatprep.subr.bf16.mxu0 %v1003
  %1670 = vmatpush1.bf16.msra.mxu0 %v1002
  %1671 = vmatprep.subr.bf16.mxu0 %v1024
  %1672 = vmatpush1.bf16.msra.mxu0 %v1023
  %1673 = vmatprep.subr.bf16.mxu0 %v1045
  %1674 = vmatpush1.bf16.msra.mxu0 %v1044
  %1675 = vmatprep.subr.bf16.mxu0 %v1318
  %1676 = vmatpush1.bf16.msra.mxu0 %v1315
  %1677 = vmatprep.subr.bf16.mxu0 0
  %1678 = vmatpush1.bf16.msra.mxu0 0
  %1679 = vmatprep.subr.bf16.mxu0 0
  %1680 = vmatpush1.bf16.msra.mxu0 0
  %1681 = vmatprep.subr.bf16.mxu0 0
  %1682 = vmatpush1.bf16.msra.mxu0 0
  %1683 = vmatprep.subr.bf16.mxu0 0
  %1684 = vmatpush1.bf16.msra.mxu0 0
  %1685 = vmatprep.subr.bf16.mxu0 0
  %1686 = vmatpush1.bf16.msra.mxu0 0
  %1687 = vmatprep.subr.bf16.mxu0 0
  %1688 = vmatpush1.bf16.msra.mxu0 0
  %1689 = vmatprep.mubr.bf16.mxu0 %v1261
  %1690 = vmatmul.mubr.bf16.gmra.mrb[0].mxu0 %v243
  %v1691 = vpop.f32.mrb[0].mxu0
  %v1692 = vadd.f32 0.0, %v1691
  %v1693 = vpop.f32.mrb[0].mxu0
  %v1694 = vadd.f32 0.0, %v1693
  %v1695 = vpop.f32.mrb[0].mxu0
  %v1696 = vpop.f32.mrb[0].mxu0
  %1697 = vdwg.mxu0
  %1698 = vmatprep.subr.bf16.mxu0 %v879
  %1699 = vmatpush1.bf16.msra.mxu0 %v878
  %1700 = vmatprep.subr.bf16.mxu0 %v900
  %1701 = vmatpush1.bf16.msra.mxu0 %v899
  %1702 = vmatprep.subr.bf16.mxu0 %v921
  %1703 = vmatpush1.bf16.msra.mxu0 %v920
  %1704 = vmatprep.subr.bf16.mxu0 %v942
  %1705 = vmatpush1.bf16.msra.mxu0 %v941
  %1706 = vmatprep.subr.bf16.mxu0 %v963
  %1707 = vmatpush1.bf16.msra.mxu0 %v962
  %1708 = vmatprep.subr.bf16.mxu0 %v984
  %1709 = vmatpush1.bf16.msra.mxu0 %v983
  %1710 = vmatprep.subr.bf16.mxu0 %v1005
  %1711 = vmatpush1.bf16.msra.mxu0 %v1004
  %1712 = vmatprep.subr.bf16.mxu0 %v1026
  %1713 = vmatpush1.bf16.msra.mxu0 %v1025
  %1714 = vmatprep.subr.bf16.mxu0 %v1047
  %1715 = vmatpush1.bf16.msra.mxu0 %v1046
  %1716 = vmatprep.subr.bf16.mxu0 %v1324
  %1717 = vmatpush1.bf16.msra.mxu0 %v1321
  %1718 = vmatprep.subr.bf16.mxu0 0
  %1719 = vmatpush1.bf16.msra.mxu0 0
  %1720 = vmatprep.subr.bf16.mxu0 0
  %1721 = vmatpush1.bf16.msra.mxu0 0
  %1722 = vmatprep.subr.bf16.mxu0 0
  %1723 = vmatpush1.bf16.msra.mxu0 0
  %1724 = vmatprep.subr.bf16.mxu0 0
  %1725 = vmatpush1.bf16.msra.mxu0 0
  %1726 = vmatprep.subr.bf16.mxu0 0
  %1727 = vmatpush1.bf16.msra.mxu0 0
  %1728 = vmatprep.subr.bf16.mxu0 0
  %1729 = vmatpush1.bf16.msra.mxu0 0
  %1730 = vmatprep.mubr.bf16.mxu0 %v1261
  %1731 = vmatmul.mubr.bf16.gmra.mrb[0].mxu0 %v243
  %v1732 = vpop.f32.mrb[0].mxu0
  %v1733 = vadd.f32 0.0, %v1732
  %v1734 = vpop.f32.mrb[0].mxu0
  %v1735 = vadd.f32 0.0, %v1734
  %v1736 = vpop.f32.mrb[0].mxu0
  %v1737 = vpop.f32.mrb[0].mxu0
  %1738 = vdwg.mxu0
  %1739 = vmatprep.subr.bf16.mxu0 0
  %1740 = vmatpush1.bf16.msra.mxu0 %v880
  %1741 = vmatprep.subr.bf16.mxu0 0
  %1742 = vmatpush1.bf16.msra.mxu0 %v901
  %1743 = vmatprep.subr.bf16.mxu0 0
  %1744 = vmatpush1.bf16.msra.mxu0 %v922
  %1745 = vmatprep.subr.bf16.mxu0 0
  %1746 = vmatpush1.bf16.msra.mxu0 %v943
  %1747 = vmatprep.subr.bf16.mxu0 0
  %1748 = vmatpush1.bf16.msra.mxu0 %v964
  %1749 = vmatprep.subr.bf16.mxu0 0
  %1750 = vmatpush1.bf16.msra.mxu0 %v985
  %1751 = vmatprep.subr.bf16.mxu0 0
  %1752 = vmatpush1.bf16.msra.mxu0 %v1006
  %1753 = vmatprep.subr.bf16.mxu0 0
  %1754 = vmatpush1.bf16.msra.mxu0 %v1027
  %1755 = vmatprep.subr.bf16.mxu0 0
  %1756 = vmatpush1.bf16.msra.mxu0 %v1048
  %1757 = vmatprep.subr.bf16.mxu0 0
  %1758 = vmatpush1.bf16.msra.mxu0 %v1327
  %1759 = vmatprep.subr.bf16.mxu0 0
  %1760 = vmatpush1.bf16.msra.mxu0 0
  %1761 = vmatprep.subr.bf16.mxu0 0
  %1762 = vmatpush1.bf16.msra.mxu0 0
  %1763 = vmatprep.subr.bf16.mxu0 0
  %1764 = vmatpush1.bf16.msra.mxu0 0
  %1765 = vmatprep.subr.bf16.mxu0 0
  %1766 = vmatpush1.bf16.msra.mxu0 0
  %1767 = vmatprep.subr.bf16.mxu0 0
  %1768 = vmatpush1.bf16.msra.mxu0 0
  %1769 = vmatprep.subr.bf16.mxu0 0
  %1770 = vmatpush1.bf16.msra.mxu0 0
  %1771 = vmatprep.mubr.bf16.mxu0 %v1261
  %1772 = vmatmul.mubr.bf16.gmra.mrb[0].mxu0 %v243
  %v1773 = vpop.f32.mrb[0].mxu0
  %v1774 = vadd.f32 0.0, %v1773
  %v1775 = vpop.f32.mrb[0].mxu0
  %v1776 = vpop.f32.mrb[0].mxu0
  %v1777 = vpop.f32.mrb[0].mxu0
  %1778 = vdwg.mxu0
  %v1782 = vlaneseq
  %v1783 = vshrl.u32 %v1782, 7
  %v1784 = vsub.s32 0, %v1783
  %v1785 = vrot.slane %v15, %v1784
  %v1786 = vlaneseq
  %v1787 = vshrl.u32 %v1786, 7
  %v1788 = vsub.s32 1, %v1787
  %v1789 = vrot.slane %v15, %v1788
  %v1790 = vlaneseq
  %v1791 = vshrl.u32 %v1790, 7
  %v1792 = vsub.s32 2, %v1791
  %v1793 = vrot.slane %v15, %v1792
  %v1794 = vlaneseq
  %v1795 = vshrl.u32 %v1794, 7
  %v1796 = vsub.s32 3, %v1795
  %v1797 = vrot.slane %v15, %v1796
  %v1798 = vlaneseq
  %v1799 = vshrl.u32 %v1798, 7
  %v1800 = vsub.s32 4, %v1799
  %v1801 = vrot.slane %v15, %v1800
  %v1802 = vlaneseq
  %v1803 = vshrl.u32 %v1802, 7
  %v1804 = vsub.s32 5, %v1803
  %v1805 = vrot.slane %v15, %v1804
  %v1806 = vlaneseq
  %v1807 = vshrl.u32 %v1806, 7
  %v1808 = vsub.s32 6, %v1807
  %v1809 = vrot.slane %v15, %v1808
  %v1810 = vlaneseq
  %v1811 = vshrl.u32 %v1810, 7
  %v1812 = vsub.s32 7, %v1811
  %v1813 = vrot.slane %v15, %v1812
  %v1814 = vlaneseq
  %v1815 = vshrl.u32 %v1814, 7
  %v1816 = vsub.s32 0, %v1815
  %v1817 = vrot.slane %v16, %v1816
  %v1818 = vlaneseq
  %v1819 = vshrl.u32 %v1818, 7
  %v1820 = vsub.s32 1, %v1819
  %v1821 = vrot.slane %v16, %v1820
  %v1822 = vlaneseq
  %v1823 = vshrl.u32 %v1822, 7
  %v1824 = vsub.s32 2, %v1823
  %v1825 = vrot.slane %v16, %v1824
  %v1826 = vlaneseq
  %v1827 = vshrl.u32 %v1826, 7
  %v1828 = vsub.s32 3, %v1827
  %v1829 = vrot.slane %v16, %v1828
  %v1830 = vlaneseq
  %v1831 = vshrl.u32 %v1830, 7
  %v1832 = vsub.s32 4, %v1831
  %v1833 = vrot.slane %v16, %v1832
  %v1834 = vlaneseq
  %v1835 = vshrl.u32 %v1834, 7
  %v1836 = vsub.s32 5, %v1835
  %v1837 = vrot.slane %v16, %v1836
  %v1838 = vlaneseq
  %v1839 = vshrl.u32 %v1838, 7
  %v1840 = vsub.s32 6, %v1839
  %v1841 = vrot.slane %v16, %v1840
  %v1842 = vlaneseq
  %v1843 = vshrl.u32 %v1842, 7
  %v1844 = vsub.s32 7, %v1843
  %v1845 = vrot.slane %v16, %v1844
  %v1846 = vlaneseq
  %v1847 = vshrl.u32 %v1846, 7
  %v1848 = vsub.s32 0, %v1847
  %v1849 = vrot.slane %v17, %v1848
  %v1850 = vlaneseq
  %v1851 = vshrl.u32 %v1850, 7
  %v1852 = vsub.s32 1, %v1851
  %v1853 = vrot.slane %v17, %v1852
  %v1854 = vlaneseq
  %v1855 = vshrl.u32 %v1854, 7
  %v1856 = vsub.s32 2, %v1855
  %v1857 = vrot.slane %v17, %v1856
  %v1858 = vlaneseq
  %v1859 = vshrl.u32 %v1858, 7
  %v1860 = vsub.s32 3, %v1859
  %v1861 = vrot.slane %v17, %v1860
  %v1862 = vlaneseq
  %v1863 = vshrl.u32 %v1862, 7
  %v1864 = vsub.s32 4, %v1863
  %v1865 = vrot.slane %v17, %v1864
  %v1887 = vadd.f32 %v1785, %v1364
  %v1888 = vadd.f32 %v1789, %v1366
  %v1889 = vadd.f32 %v1793, %v1405
  %v1890 = vadd.f32 %v1797, %v1407
  %v1891 = vadd.f32 %v1801, %v1446
  %v1892 = vadd.f32 %v1805, %v1448
  %v1893 = vadd.f32 %v1809, %v1487
  %v1894 = vadd.f32 %v1813, %v1489
  %v1895 = vadd.f32 %v1817, %v1528
  %v1896 = vadd.f32 %v1821, %v1530
  %v1897 = vadd.f32 %v1825, %v1569
  %v1898 = vadd.f32 %v1829, %v1571
  %v1899 = vadd.f32 %v1833, %v1610
  %v1900 = vadd.f32 %v1837, %v1612
  %v1901 = vadd.f32 %v1841, %v1651
  %v1902 = vadd.f32 %v1845, %v1653
  %v1903 = vadd.f32 %v1849, %v1692
  %v1904 = vadd.f32 %v1853, %v1694
  %v1905 = vadd.f32 %v1857, %v1733
  %v1906 = vadd.f32 %v1861, %v1735
  %v1907 = vadd.f32 %v1865, %v1774
  %v1929 = vcombine.low %v1887, %v1888
  %v1930 = vcombine.low %v1889, %v1890
  %v1932 = vunpack.c.l.s4 1983009808
  %v1933 = vunpack.c.0.s8 %v1932
  %v1934 = vlaneseq
  %v1935 = vshrl.u32 %v1934, 7
  %v1936 = vsub.s32 %v1933, %v1935
  %v1937 = vrot.slane %v1929, %v1936
  %v1939 = vunpack.c.l.s4 1983009808
  %v1940 = vunpack.c.0.s8 %v1939
  %v1941 = vlaneseq
  %v1942 = vshrl.u32 %v1941, 7
  %v1943 = vsub.s32 %v1940, %v1942
  %v1944 = vrot.slane %v1930, %v1943
  %v1945 = vcombine.low %v1937, %v1944
  %v1946 = vcombine.low %v1891, %v1892
  %v1947 = vcombine.low %v1893, %v1894
  %v1949 = vunpack.c.l.s4 1983009808
  %v1950 = vunpack.c.0.s8 %v1949
  %v1951 = vlaneseq
  %v1952 = vshrl.u32 %v1951, 7
  %v1953 = vsub.s32 %v1950, %v1952
  %v1954 = vrot.slane %v1946, %v1953
  %v1956 = vunpack.c.l.s4 1983009808
  %v1957 = vunpack.c.0.s8 %v1956
  %v1958 = vlaneseq
  %v1959 = vshrl.u32 %v1958, 7
  %v1960 = vsub.s32 %v1957, %v1959
  %v1961 = vrot.slane %v1947, %v1960
  %v1962 = vcombine.low %v1954, %v1961
  %v1963 = vcombine.low %v1895, %v1896
  %v1964 = vcombine.low %v1897, %v1898
  %v1966 = vunpack.c.l.s4 1983009808
  %v1967 = vunpack.c.0.s8 %v1966
  %v1968 = vlaneseq
  %v1969 = vshrl.u32 %v1968, 7
  %v1970 = vsub.s32 %v1967, %v1969
  %v1971 = vrot.slane %v1963, %v1970
  %v1973 = vunpack.c.l.s4 1983009808
  %v1974 = vunpack.c.0.s8 %v1973
  %v1975 = vlaneseq
  %v1976 = vshrl.u32 %v1975, 7
  %v1977 = vsub.s32 %v1974, %v1976
  %v1978 = vrot.slane %v1964, %v1977
  %v1979 = vcombine.low %v1971, %v1978
  %v1980 = vcombine.low %v1899, %v1900
  %v1981 = vcombine.low %v1901, %v1902
  %v1983 = vunpack.c.l.s4 1983009808
  %v1984 = vunpack.c.0.s8 %v1983
  %v1985 = vlaneseq
  %v1986 = vshrl.u32 %v1985, 7
  %v1987 = vsub.s32 %v1984, %v1986
  %v1988 = vrot.slane %v1980, %v1987
  %v1990 = vunpack.c.l.s4 1983009808
  %v1991 = vunpack.c.0.s8 %v1990
  %v1992 = vlaneseq
  %v1993 = vshrl.u32 %v1992, 7
  %v1994 = vsub.s32 %v1991, %v1993
  %v1995 = vrot.slane %v1981, %v1994
  %v1996 = vcombine.low %v1988, %v1995
  %v1997 = vcombine.low %v1903, %v1904
  %v1998 = vcombine.low %v1905, %v1906
  %v2000 = vunpack.c.l.s4 1983009808
  %v2001 = vunpack.c.0.s8 %v2000
  %v2002 = vlaneseq
  %v2003 = vshrl.u32 %v2002, 7
  %v2004 = vsub.s32 %v2001, %v2003
  %v2005 = vrot.slane %v1997, %v2004
  %v2007 = vunpack.c.l.s4 1983009808
  %v2008 = vunpack.c.0.s8 %v2007
  %v2009 = vlaneseq
  %v2010 = vshrl.u32 %v2009, 7
  %v2011 = vsub.s32 %v2008, %v2010
  %v2012 = vrot.slane %v1998, %v2011
  %v2013 = vcombine.low %v2005, %v2012
  %v2015 = vunpack.c.l.s4 1983009808
  %v2016 = vunpack.c.0.s8 %v2015
  %v2017 = vlaneseq
  %v2018 = vshrl.u32 %v2017, 7
  %v2019 = vsub.s32 %v2016, %v2018
  %v2020 = vrot.slane %v1907, %v2019
  %2027 = vst [vmem:[%s3] sm:$0xff] %v1945
  %2028 = vst [vmem:[%s3 + $0x8] sm:$0xff] %v1962
  %2029 = vst [vmem:[%s3 + $0x10] sm:$0xff] %v1979
  %2030 = vst [vmem:[%s3 + $0x18] sm:$0xff] %v1996
  %2031 = vst [vmem:[%s3 + $0x20] sm:$0xff] %v2013
  %2032 = vst [vmem:[%s3 + $0x28] sm:$0x3] %v2020
  // Predicated region
  $region14: #{mano_head_forward.2} parent=0 // pred_check
    _
  $region15: #{mano_head_forward.2} parent=0 // pred_check_branch
    %2034 = sbr.rel (0) target = $region17
  $region16: #{mano_head_forward.2} parent=0 // pred_region
    _
  $region17: #{mano_head_forward.2} parent=0 // pred_fallthru
    _
  // Predicated region
  $region18: #{mano_head_forward.2} parent=0 // pred_check
    _
  $region19: #{mano_head_forward.2} parent=0 // pred_check_branch
    %2036 = sbr.rel (0) target = $region21
  $region20: #{mano_head_forward.2} parent=0 // pred_region
    _
  $region21: #{mano_head_forward.2} parent=0 // pred_fallthru
    _

</llo_original>
